<compile_context>
chip_gen: v5e
topology: v5e:2x2
jax: 0.10.0
libtpu: 0.0.40
codegen_flags: <defaults>
</compile_context>

<pallas_src>
import jax
import jax.numpy as jnp
from jax import lax
from jax.experimental import pallas as pl
from jax.experimental.pallas import tpu as pltpu


# ----------------------------------------------------------------------------
# Pallas kernel: weighted reduction over the view axis for BOTH feature slabs
# (Conv3d(16,1,1,bias=False) applied twice, fused into one call).
# ----------------------------------------------------------------------------
def _view_fuse2_kernel(w_ref, a_ref, b_ref, oa_ref, ob_ref):
    # w_ref: (1, V)        -- same block every grid step (resident in VMEM)
    # a_ref: (B, V, Ta)    -- f_40 slab tile
    # b_ref: (B, V, Tb)    -- f_down_40 slab tile
    # Keep the VPU + cross-sublane reduce formulation: K=16 / M=B contraction
    # would be <1% MXU utilization; this kernel is HBM/overhead-bound.
    w = w_ref[0].astype(jnp.float32)[None, :, None]                  # (1, V, 1)
    oa_ref[...] = jnp.sum(a_ref[...].astype(jnp.float32) * w, axis=1).astype(oa_ref.dtype)
    ob_ref[...] = jnp.sum(b_ref[...].astype(jnp.float32) * w, axis=1).astype(ob_ref.dtype)


def conv3d_1x1_view_fuse_pair(fea_a, fea_b, w_1v, *, out_dtype=jnp.float32):
    """fea_a: (B, V, Na), fea_b: (B, V, Nb), w_1v: (1, V).

    Returns ((B, Na), (B, Nb)) — the two view-fused feature maps, flattened.
    """
    B, V, Na = fea_a.shape
    Bb, Vb, Nb = fea_b.shape
    assert (B, V) == (Bb, Vb)
    LANE = 128
    itemsize = jnp.dtype(fea_a.dtype).itemsize

    # --- grid-step selection (perf feedback) --------------------------------
    # One step unless per-step HBM traffic is >= ~1 MiB (so single-TC v5e/v6e
    # never pays split overhead for nothing).  When splitting, keep the step
    # count even (clean 2-TensorCore split on v7x) and keep each step's input
    # tile under a generation-safe budget: v7x has only 64 MiB physical VMEM
    # (32 MiB scoped default) vs 128 MiB on v5e/v6e, and BlockSpec
    # double-buffers every tile.
    in_bytes = B * V * (Na + Nb) * itemsize
    max_step_in_bytes = 8 << 20
    if in_bytes < (1 << 20):
        steps = 1
    else:
        steps = max(2, -(-in_bytes // max_step_in_bytes))
        steps += steps % 2

    # Pad each slab's lane axis UP to a multiple of steps*128 (never shrink
    # the tile / explode the grid on awkward N).
    def _pad(x, n):
        p = (-n) % (steps * LANE)
        if p:
            x = jnp.pad(x, ((0, 0), (0, 0), (0, p)))
        return x, n + p

    fea_a, Npa = _pad(fea_a, Na)
    fea_b, Npb = _pad(fea_b, Nb)
    ta, tb = Npa // steps, Npb // steps

    # VMEM limit sized to 2x (double-buffered) input+output tiles plus slack.
    tile_in = B * V * (ta + tb) * itemsize
    tile_out = B * (ta + tb) * jnp.dtype(out_dtype).itemsize
    vmem_limit = int(min(96 << 20, max(16 << 20, 2 * (tile_in + tile_out) + (2 << 20))))

    oa, ob = pl.pallas_call(
        _view_fuse2_kernel,
        out_shape=(jax.ShapeDtypeStruct((B, Npa), out_dtype),
                   jax.ShapeDtypeStruct((B, Npb), out_dtype)),
        grid_spec=pltpu.PrefetchScalarGridSpec(
            num_scalar_prefetch=0,
            grid=(steps,),
            in_specs=[
                pl.BlockSpec((1, V), lambda n: (0, 0)),              # conv3d weight
                pl.BlockSpec((B, V, ta), lambda n: (0, 0, n)),       # f_40 slab
                pl.BlockSpec((B, V, tb), lambda n: (0, 0, n)),       # f_down_40 slab
            ],
            out_specs=[
                pl.BlockSpec((B, ta), lambda n: (0, n)),
                pl.BlockSpec((B, tb), lambda n: (0, n)),
            ],
        ),
        compiler_params=pltpu.CompilerParams(
            dimension_semantics=("parallel",),
            vmem_limit_bytes=vmem_limit),
    )(w_1v, fea_a, fea_b)
    return oa[:, :Na], ob[:, :Nb]


# ----------------------------------------------------------------------------
# ResNet34 backbone up to (and including) `layer3`, plain JAX (NCHW).
# ----------------------------------------------------------------------------
def _conv2d(x, w, stride=1, padding=0):
    return lax.conv_general_dilated(
        x, w,
        window_strides=(stride, stride),
        padding=[(padding, padding), (padding, padding)],
        dimension_numbers=("NCHW", "OIHW", "NCHW"))


def _batchnorm(x, gamma, beta, mean, var, eps=1e-5):
    inv = gamma / jnp.sqrt(var + eps)
    return x * inv[None, :, None, None] + (beta - mean * inv)[None, :, None, None]


def _maxpool_3x3_s2_p1(x):
    init = jnp.array(-jnp.inf, dtype=x.dtype)
    return lax.reduce_window(
        x, init, lax.max,
        window_dimensions=(1, 1, 3, 3),
        window_strides=(1, 1, 2, 2),
        padding=[(0, 0), (0, 0), (1, 1), (1, 1)])


def _basic_block(x, p, stride):
    out = _conv2d(x, p["conv1"], stride=stride, padding=1)
    out = _batchnorm(out, *p["bn1"])
    out = jax.nn.relu(out)
    out = _conv2d(out, p["conv2"], stride=1, padding=1)
    out = _batchnorm(out, *p["bn2"])
    if "downsample_conv" in p:
        identity = _conv2d(x, p["downsample_conv"], stride=stride, padding=0)
        identity = _batchnorm(identity, *p["downsample_bn"])
    else:
        identity = x
    return jax.nn.relu(out + identity)


def resnet34_to_layer3(x, params):
    x = _conv2d(x, params["conv1"], stride=2, padding=3)
    x = _batchnorm(x, *params["bn1"])
    x = jax.nn.relu(x)
    x = _maxpool_3x3_s2_p1(x)
    for p in params["layer1"]:                       # 3 blocks, 64 -> 64
        x = _basic_block(x, p, stride=1)
    for i, p in enumerate(params["layer2"]):         # 4 blocks, 64 -> 128
        x = _basic_block(x, p, stride=2 if i == 0 else 1)
    for i, p in enumerate(params["layer3"]):         # 6 blocks, 128 -> 256
        x = _basic_block(x, p, stride=2 if i == 0 else 1)
    return x                                         # (N, 256, H/16, W/16)


# ----------------------------------------------------------------------------
# Deterministic parameter init (synthetic stand-in for pretrained weights).
# ----------------------------------------------------------------------------
def _conv_init(key, o, i, kh, kw):
    std = (2.0 / (i * kh * kw)) ** 0.5
    return jax.random.normal(key, (o, i, kh, kw), jnp.float32) * std


def _bn_init(c):
    # (gamma, beta, running_mean, running_var)
    return (jnp.ones((c,), jnp.float32), jnp.zeros((c,), jnp.float32),
            jnp.zeros((c,), jnp.float32), jnp.ones((c,), jnp.float32))


def init_resnet34_to_layer3(key):
    keys = iter(jax.random.split(key, 48))
    params = {
        "conv1": _conv_init(next(keys), 64, 3, 7, 7),
        "bn1": _bn_init(64),
        "layer1": [],
        "layer2": [],
        "layer3": [],
    }
    for _ in range(3):
        params["layer1"].append({
            "conv1": _conv_init(next(keys), 64, 64, 3, 3), "bn1": _bn_init(64),
            "conv2": _conv_init(next(keys), 64, 64, 3, 3), "bn2": _bn_init(64),
        })
    for b in range(4):
        cin = 64 if b == 0 else 128
        blk = {
            "conv1": _conv_init(next(keys), 128, cin, 3, 3), "bn1": _bn_init(128),
            "conv2": _conv_init(next(keys), 128, 128, 3, 3), "bn2": _bn_init(128),
        }
        if b == 0:
            blk["downsample_conv"] = _conv_init(next(keys), 128, 64, 1, 1)
            blk["downsample_bn"] = _bn_init(128)
        params["layer2"].append(blk)
    for b in range(6):
        cin = 128 if b == 0 else 256
        blk = {
            "conv1": _conv_init(next(keys), 256, cin, 3, 3), "bn1": _bn_init(256),
            "conv2": _conv_init(next(keys), 256, 256, 3, 3), "bn2": _bn_init(256),
        }
        if b == 0:
            blk["downsample_conv"] = _conv_init(next(keys), 256, 128, 1, 1)
            blk["downsample_bn"] = _bn_init(256)
        params["layer3"].append(blk)
    return params


# ----------------------------------------------------------------------------
# Fea_Layer3.forward
# ----------------------------------------------------------------------------
def fea_layer3_forward(params, conv3d_w, x_40, x_down_40, x_10):
    B, V = x_40.shape[0], x_40.shape[1]

    # FeatureExtractor (layer_name='layer3')
    x_40_view = x_40.reshape(B * V, 3, x_40.shape[3], x_40.shape[4])
    x_down_40_view = x_down_40.reshape(B * V, 3, x_down_40.shape[3], x_down_40.shape[4])
    x_10_view = x_10[:, 0]                                  # squeeze(dim=1) -> (B,3,H,W)

    # Batch the two same-resolution backbone passes into ONE call (the plain-JAX
    # ResNet34 dominates end-to-end time; this avoids re-streaming the weights
    # and fixes MXU occupancy for the tiny x_10 batch).
    if x_40_view.shape[2:] == x_10_view.shape[2:]:
        fea = resnet34_to_layer3(
            jnp.concatenate([x_40_view, x_10_view], axis=0), params)
        fea_40, fea_10 = fea[:B * V], fea[B * V:]
    else:
        fea_40 = resnet34_to_layer3(x_40_view, params)      # (B*V, 256, h40, w40)
        fea_10 = resnet34_to_layer3(x_10_view, params)      # (B,   256, h10, w10)
    fea_d40 = resnet34_to_layer3(x_down_40_view, params)    # (B*V, 256, hd, wd)

    C3, h40, w40 = fea_40.shape[1], fea_40.shape[2], fea_40.shape[3]
    hd, wd = fea_d40.shape[2], fea_d40.shape[3]
    n40 = C3 * h40 * w40
    nd40 = C3 * hd * wd

    # One fused pallas_call over both slabs, f32 in / f32 accumulate / f32 out
    # (no bf16 cast, no concat materialization, no post-slice copies).
    w_1v = conv3d_w.reshape(1, V)
    f_40_flat, f_d40_flat = conv3d_1x1_view_fuse_pair(
        fea_40.reshape(B, V, n40), fea_d40.reshape(B, V, nd40), w_1v,
        out_dtype=jnp.float32)

    f_40 = f_40_flat.reshape(B, C3, h40, w40)
    f_d40 = f_d40_flat.reshape(B, C3, hd, wd)

    # squeeze(dim=1) already accounted for by the (B, C3, h, w) reshape.
    return f_40, f_d40, fea_10


if __name__ == "__main__":
    key = jax.random.PRNGKey(0)
    k_params, k_conv, k1, k2, k3 = jax.random.split(key, 5)

    B, V = 2, 16                    # Conv3d in_channels=16 => 16 views
    H40 = W40 = 32                  # layer3 output spatial = 32/16 = 2
    Hd = Wd = 16                    # layer3 output spatial = 16/16 = 1
    H10 = W10 = 32

    x_40 = jax.random.normal(k1, (B, V, 3, H40, W40), jnp.float32)
    x_down_40 = jax.random.normal(k2, (B, V, 3, Hd, Wd), jnp.float32)
    x_10 = jax.random.normal(k3, (B, 1, 3, H10, W10), jnp.float32)

    params = init_resnet34_to_layer3(k_params)
    # nn.Conv3d(16, 1, 1, bias=False).weight has shape (1, 16, 1, 1, 1)
    conv3d_w = jax.random.normal(k_conv, (1, V, 1, 1, 1), jnp.float32) * (1.0 / V) ** 0.5

    fwd = jax.jit(fea_layer3_forward)
    f_40, f_d40, fea_10 = fwd(params, conv3d_w, x_40, x_down_40, x_10)
    jax.block_until_ready((f_40, f_d40, fea_10))

    assert f_40.shape == (B, 256, H40 // 16, W40 // 16), f_40.shape
    assert f_d40.shape == (B, 256, Hd // 16, Wd // 16), f_d40.shape
    assert fea_10.shape == (B, 256, H10 // 16, W10 // 16), fea_10.shape

    # Numerical sanity check against a plain-JAX (f32) reference of the fusion.
    fea_40_ref = resnet34_to_layer3(x_40.reshape(B * V, 3, H40, W40), params)
    ref_40 = jnp.einsum("bvn,v->bn",
                        fea_40_ref.reshape(B, V, -1),
                        conv3d_w.reshape(V)).reshape(f_40.shape)
    assert jnp.allclose(f_40, ref_40, atol=1e-2, rtol=1e-2)

    fea_d40_ref = resnet34_to_layer3(x_down_40.reshape(B * V, 3, Hd, Wd), params)
    ref_d40 = jnp.einsum("bvn,v->bn",
                         fea_d40_ref.reshape(B, V, -1),
                         conv3d_w.reshape(V)).reshape(f_d40.shape)
    assert jnp.allclose(f_d40, ref_d40, atol=1e-2, rtol=1e-2)

    print("KERNEL_OK")
</pallas_src>

<mosaic_0001>
module attributes {stable_mosaic.version = 11 : i64} {
  func.func @_view_fuse2_kernel(%arg0: i32, %arg1: memref<1x16xf32, #tpu.memory_space<vmem>>, %arg2: memref<2x16x1024xf32, #tpu.memory_space<vmem>>, %arg3: memref<2x16x256xf32, #tpu.memory_space<vmem>>, %arg4: memref<2x1024xf32, #tpu.memory_space<vmem>>, %arg5: memref<2x256xf32, #tpu.memory_space<vmem>>) attributes {dimension_semantics = [#tpu.dimension_semantics<parallel>], iteration_bounds = array<i64: 1>, scalar_prefetch = 0 : i64, scratch_operands = 0 : i64, tpu.core_type = #tpu.core_type<tc>, window_params = [{pipeline_mode = #tpu.pipeline_mode<synchronous>, transform_indices = @transform_0, window_bounds = array<i64: 1, 16>}, {transform_indices = @transform_1, window_bounds = array<i64: 2, 16, 1024>}, {transform_indices = @transform_2, window_bounds = array<i64: 2, 16, 256>}, {transform_indices = @transform_3, window_bounds = array<i64: 2, 1024>}, {transform_indices = @transform_4, window_bounds = array<i64: 2, 256>}]} {
    %c0 = arith.constant 0 : index
    %c0_0 = arith.constant 0 : index
    %0 = vector.load %arg1[%c0, %c0_0] : memref<1x16xf32, #tpu.memory_space<vmem>>, vector<1x16xf32>
    %1 = vector.shape_cast %0 : vector<1x16xf32> to vector<16xf32>
    %2 = vector.shape_cast %1 : vector<16xf32> to vector<1x16x1xf32>
    %c0_1 = arith.constant 0 : index
    %c0_2 = arith.constant 0 : index
    %c0_3 = arith.constant 0 : index
    %3 = vector.load %arg2[%c0_1, %c0_2, %c0_3] : memref<2x16x1024xf32, #tpu.memory_space<vmem>>, vector<2x16x1024xf32>
    %4 = vector.broadcast %2 : vector<1x16x1xf32> to vector<2x16x1024xf32>
    %5 = arith.mulf %3, %4 : vector<2x16x1024xf32>
    %cst = arith.constant dense<0.000000e+00> : vector<2x1024xf32>
    %6 = vector.multi_reduction <add>, %5, %cst [1] : vector<2x16x1024xf32> to vector<2x1024xf32>
    %c0_4 = arith.constant 0 : index
    %c0_5 = arith.constant 0 : index
    %7 = vector.load %arg4[%c0_4, %c0_5] : memref<2x1024xf32, #tpu.memory_space<vmem>>, vector<2x1024xf32>
    tpu.vector_store %arg4[%c0_4, %c0_5], %6 {strides = array<i32>} : memref<2x1024xf32, #tpu.memory_space<vmem>>, vector<2x1024xf32>,
    %c0_6 = arith.constant 0 : index
    %c0_7 = arith.constant 0 : index
    %c0_8 = arith.constant 0 : index
    %8 = vector.load %arg3[%c0_6, %c0_7, %c0_8] : memref<2x16x256xf32, #tpu.memory_space<vmem>>, vector<2x16x256xf32>
    %9 = vector.broadcast %2 : vector<1x16x1xf32> to vector<2x16x256xf32>
    %10 = arith.mulf %8, %9 : vector<2x16x256xf32>
    %cst_9 = arith.constant dense<0.000000e+00> : vector<2x256xf32>
    %11 = vector.multi_reduction <add>, %10, %cst_9 [1] : vector<2x16x256xf32> to vector<2x256xf32>
    %c0_10 = arith.constant 0 : index
    %c0_11 = arith.constant 0 : index
    %12 = vector.load %arg5[%c0_10, %c0_11] : memref<2x256xf32, #tpu.memory_space<vmem>>, vector<2x256xf32>
    tpu.vector_store %arg5[%c0_10, %c0_11], %11 {strides = array<i32>} : memref<2x256xf32, #tpu.memory_space<vmem>>, vector<2x256xf32>,
    return
  }
  func.func @transform_0(%arg0: i32) -> (i32, i32) {
    %c0_i32 = arith.constant 0 : i32
    %c0_i32_0 = arith.constant 0 : i32
    %c0_i32_1 = arith.constant 0 : i32
    return %c0_i32, %c0_i32_0 : i32, i32
  }
  func.func @transform_1(%arg0: i32) -> (i32, i32, i32) {
    %c0_i32 = arith.constant 0 : i32
    %c0_i32_0 = arith.constant 0 : i32
    %c0_i32_1 = arith.constant 0 : i32
    return %c0_i32, %c0_i32_0, %arg0 : i32, i32, i32
  }
  func.func @transform_2(%arg0: i32) -> (i32, i32, i32) {
    %c0_i32 = arith.constant 0 : i32
    %c0_i32_0 = arith.constant 0 : i32
    %c0_i32_1 = arith.constant 0 : i32
    return %c0_i32, %c0_i32_0, %arg0 : i32, i32, i32
  }
  func.func @transform_3(%arg0: i32) -> (i32, i32) {
    %c0_i32 = arith.constant 0 : i32
    %c0_i32_0 = arith.constant 0 : i32
    return %c0_i32, %arg0 : i32, i32
  }
  func.func @transform_4(%arg0: i32) -> (i32, i32) {
    %c0_i32 = arith.constant 0 : i32
    %c0_i32_0 = arith.constant 0 : i32
    return %c0_i32, %arg0 : i32, i32
  }
}

</mosaic_0001>

<llo_original>
// kernel: reverse
$region0: #{reverse}
  #allocation0 [shape = 's32[1]{0}', space=sflag, size = 0x4, scoped, tag = 'scoped memory for reverse']
  %s0 = inlined_call_operand.vmem [shape: f32[256,256,3,3], index: 0, kind: input, shape index: {}]
  %s1 = inlined_call_operand.vmem [shape: bf16[256,256,3,3], index: 1, kind: output, shape index: {}]
  %s2 = scalar_lea.vmem %s0, 4096
  %v3 = vld [vmem:[%s2] sm:$0xff]
  %s4 = scalar_lea.vmem %s0, 2560
  %v5 = vld [vmem:[%s4] sm:$0xff]
  %s6 = scalar_lea.vmem %s1, 768
  %s7 = scalar_lea.vmem %s0, 1024
  %v8 = vld [vmem:[%s7] sm:$0xff]
  %s9 = scalar_lea.vmem %s1, 1536
  %s10 = scalar_lea.vmem %s0, 3584
  %v11 = vld [vmem:[%s10] sm:$0xff]
  %s12 = scalar_lea.vmem %s1, 256
  %s13 = scalar_lea.vmem %s0, 2048
  %v14 = vld [vmem:[%s13] sm:$0xff]
  %s15 = scalar_lea.vmem %s1, 1024
  %s16 = scalar_lea.vmem %s0, 512
  %v17 = vld [vmem:[%s16] sm:$0xff]
  %s18 = scalar_lea.vmem %s1, 1792
  %s19 = scalar_lea.vmem %s0, 3072
  %v20 = vld [vmem:[%s19] sm:$0xff]
  %s21 = scalar_lea.vmem %s1, 512
  %s22 = scalar_lea.vmem %s0, 1536
  %v23 = vld [vmem:[%s22] sm:$0xff]
  %s24 = scalar_lea.vmem %s1, 1280
  %v25 = vld [vmem:[%s0] sm:$0xff]
  %s26 = scalar_lea.vmem %s1, 2048
  %s27 = scalar_lea.vmem %s0, 4112
  %v28 = vld [vmem:[%s27] sm:$0xff]
  %s29 = scalar_lea.vmem %s1, 8
  %s30 = scalar_lea.vmem %s0, 2576
  %v31 = vld [vmem:[%s30] sm:$0xff]
  %s32 = scalar_lea.vmem %s1, 776
  %s33 = scalar_lea.vmem %s0, 1040
  %v34 = vld [vmem:[%s33] sm:$0xff]
  %s35 = scalar_lea.vmem %s1, 1544
  %s36 = scalar_lea.vmem %s0, 3600
  %v37 = vld [vmem:[%s36] sm:$0xff]
  %s38 = scalar_lea.vmem %s1, 264
  %s39 = scalar_lea.vmem %s0, 2064
  %v40 = vld [vmem:[%s39] sm:$0xff]
  %s41 = scalar_lea.vmem %s1, 1032
  %s42 = scalar_lea.vmem %s0, 528
  %v43 = vld [vmem:[%s42] sm:$0xff]
  %s44 = scalar_lea.vmem %s1, 1800
  %s45 = scalar_lea.vmem %s0, 3088
  %v46 = vld [vmem:[%s45] sm:$0xff]
  %s47 = scalar_lea.vmem %s1, 520
  %s48 = scalar_lea.vmem %s0, 1552
  %v49 = vld [vmem:[%s48] sm:$0xff]
  %s50 = scalar_lea.vmem %s1, 1288
  %s51 = scalar_lea.vmem %s0, 16
  %v52 = vld [vmem:[%s51] sm:$0xff]
  %s53 = scalar_lea.vmem %s1, 2056
  %s54 = scalar_lea.vmem %s0, 4128
  %v55 = vld [vmem:[%s54] sm:$0xff]
  %s56 = scalar_lea.vmem %s1, 16
  %s57 = scalar_lea.vmem %s0, 2592
  %v58 = vld [vmem:[%s57] sm:$0xff]
  %s59 = scalar_lea.vmem %s1, 784
  %s60 = scalar_lea.vmem %s0, 1056
  %v61 = vld [vmem:[%s60] sm:$0xff]
  %s62 = scalar_lea.vmem %s1, 1552
  %s63 = scalar_lea.vmem %s0, 3616
  %v64 = vld [vmem:[%s63] sm:$0xff]
  %s65 = scalar_lea.vmem %s1, 272
  %s66 = scalar_lea.vmem %s0, 2080
  %v67 = vld [vmem:[%s66] sm:$0xff]
  %s68 = scalar_lea.vmem %s1, 1040
  %s69 = scalar_lea.vmem %s0, 544
  %v70 = vld [vmem:[%s69] sm:$0xff]
  %s71 = scalar_lea.vmem %s1, 1808
  %s72 = scalar_lea.vmem %s0, 3104
  %v73 = vld [vmem:[%s72] sm:$0xff]
  %s74 = scalar_lea.vmem %s1, 528
  %s75 = scalar_lea.vmem %s0, 1568
  %v76 = vld [vmem:[%s75] sm:$0xff]
  %s77 = scalar_lea.vmem %s1, 1296
  %s78 = scalar_lea.vmem %s0, 32
  %v79 = vld [vmem:[%s78] sm:$0xff]
  %s80 = scalar_lea.vmem %s1, 2064
  %s81 = scalar_lea.vmem %s0, 4144
  %v82 = vld [vmem:[%s81] sm:$0xff]
  %s83 = scalar_lea.vmem %s1, 24
  %s84 = scalar_lea.vmem %s0, 2608
  %v85 = vld [vmem:[%s84] sm:$0xff]
  %s86 = scalar_lea.vmem %s1, 792
  %s87 = scalar_lea.vmem %s0, 1072
  %v88 = vld [vmem:[%s87] sm:$0xff]
  %s89 = scalar_lea.vmem %s1, 1560
  %s90 = scalar_lea.vmem %s0, 3632
  %v91 = vld [vmem:[%s90] sm:$0xff]
  %s92 = scalar_lea.vmem %s1, 280
  %s93 = scalar_lea.vmem %s0, 2096
  %v94 = vld [vmem:[%s93] sm:$0xff]
  %s95 = scalar_lea.vmem %s1, 1048
  %s96 = scalar_lea.vmem %s0, 560
  %v97 = vld [vmem:[%s96] sm:$0xff]
  %s98 = scalar_lea.vmem %s1, 1816
  %s99 = scalar_lea.vmem %s0, 3120
  %v100 = vld [vmem:[%s99] sm:$0xff]
  %s101 = scalar_lea.vmem %s1, 536
  %s102 = scalar_lea.vmem %s0, 1584
  %v103 = vld [vmem:[%s102] sm:$0xff]
  %s104 = scalar_lea.vmem %s1, 1304
  %s105 = scalar_lea.vmem %s0, 48
  %v106 = vld [vmem:[%s105] sm:$0xff]
  %s107 = scalar_lea.vmem %s1, 2072
  %s108 = scalar_lea.vmem %s0, 4160
  %v109 = vld [vmem:[%s108] sm:$0xff]
  %s110 = scalar_lea.vmem %s1, 32
  %s111 = scalar_lea.vmem %s0, 2624
  %v112 = vld [vmem:[%s111] sm:$0xff]
  %s113 = scalar_lea.vmem %s1, 800
  %s114 = scalar_lea.vmem %s0, 1088
  %v115 = vld [vmem:[%s114] sm:$0xff]
  %s116 = scalar_lea.vmem %s1, 1568
  %s117 = scalar_lea.vmem %s0, 3648
  %v118 = vld [vmem:[%s117] sm:$0xff]
  %s119 = scalar_lea.vmem %s1, 288
  %s120 = scalar_lea.vmem %s0, 2112
  %v121 = vld [vmem:[%s120] sm:$0xff]
  %s122 = scalar_lea.vmem %s1, 1056
  %s123 = scalar_lea.vmem %s0, 576
  %v124 = vld [vmem:[%s123] sm:$0xff]
  %s125 = scalar_lea.vmem %s1, 1824
  %s126 = scalar_lea.vmem %s0, 3136
  %v127 = vld [vmem:[%s126] sm:$0xff]
  %s128 = scalar_lea.vmem %s1, 544
  %s129 = scalar_lea.vmem %s0, 1600
  %v130 = vld [vmem:[%s129] sm:$0xff]
  %s131 = scalar_lea.vmem %s1, 1312
  %s132 = scalar_lea.vmem %s0, 64
  %v133 = vld [vmem:[%s132] sm:$0xff]
  %s134 = scalar_lea.vmem %s1, 2080
  %s135 = scalar_lea.vmem %s0, 4176
  %v136 = vld [vmem:[%s135] sm:$0xff]
  %s137 = scalar_lea.vmem %s1, 40
  %s138 = scalar_lea.vmem %s0, 2640
  %v139 = vld [vmem:[%s138] sm:$0xff]
  %s140 = scalar_lea.vmem %s1, 808
  %s141 = scalar_lea.vmem %s0, 1104
  %v142 = vld [vmem:[%s141] sm:$0xff]
  %s143 = scalar_lea.vmem %s1, 1576
  %s144 = scalar_lea.vmem %s0, 3664
  %v145 = vld [vmem:[%s144] sm:$0xff]
  %s146 = scalar_lea.vmem %s1, 296
  %s147 = scalar_lea.vmem %s0, 2128
  %v148 = vld [vmem:[%s147] sm:$0xff]
  %s149 = scalar_lea.vmem %s1, 1064
  %s150 = scalar_lea.vmem %s0, 592
  %v151 = vld [vmem:[%s150] sm:$0xff]
  %s152 = scalar_lea.vmem %s1, 1832
  %s153 = scalar_lea.vmem %s0, 3152
  %v154 = vld [vmem:[%s153] sm:$0xff]
  %s155 = scalar_lea.vmem %s1, 552
  %s156 = scalar_lea.vmem %s0, 1616
  %v157 = vld [vmem:[%s156] sm:$0xff]
  %s158 = scalar_lea.vmem %s1, 1320
  %s159 = scalar_lea.vmem %s0, 80
  %v160 = vld [vmem:[%s159] sm:$0xff]
  %s161 = scalar_lea.vmem %s1, 2088
  %s162 = scalar_lea.vmem %s0, 4192
  %v163 = vld [vmem:[%s162] sm:$0xff]
  %s164 = scalar_lea.vmem %s1, 48
  %s165 = scalar_lea.vmem %s0, 2656
  %v166 = vld [vmem:[%s165] sm:$0xff]
  %s167 = scalar_lea.vmem %s1, 816
  %s168 = scalar_lea.vmem %s0, 1120
  %v169 = vld [vmem:[%s168] sm:$0xff]
  %s170 = scalar_lea.vmem %s1, 1584
  %s171 = scalar_lea.vmem %s0, 3680
  %v172 = vld [vmem:[%s171] sm:$0xff]
  %s173 = scalar_lea.vmem %s1, 304
  %s174 = scalar_lea.vmem %s0, 2144
  %v175 = vld [vmem:[%s174] sm:$0xff]
  %s176 = scalar_lea.vmem %s1, 1072
  %s177 = scalar_lea.vmem %s0, 608
  %v178 = vld [vmem:[%s177] sm:$0xff]
  %s179 = scalar_lea.vmem %s1, 1840
  %s180 = scalar_lea.vmem %s0, 3168
  %v181 = vld [vmem:[%s180] sm:$0xff]
  %s182 = scalar_lea.vmem %s1, 560
  %s183 = scalar_lea.vmem %s0, 1632
  %v184 = vld [vmem:[%s183] sm:$0xff]
  %s185 = scalar_lea.vmem %s1, 1328
  %s186 = scalar_lea.vmem %s0, 96
  %v187 = vld [vmem:[%s186] sm:$0xff]
  %s188 = scalar_lea.vmem %s1, 2096
  %s189 = scalar_lea.vmem %s0, 4208
  %v190 = vld [vmem:[%s189] sm:$0xff]
  %s191 = scalar_lea.vmem %s1, 56
  %s192 = scalar_lea.vmem %s0, 2672
  %v193 = vld [vmem:[%s192] sm:$0xff]
  %s194 = scalar_lea.vmem %s1, 824
  %s195 = scalar_lea.vmem %s0, 1136
  %v196 = vld [vmem:[%s195] sm:$0xff]
  %s197 = scalar_lea.vmem %s1, 1592
  %s198 = scalar_lea.vmem %s0, 3696
  %v199 = vld [vmem:[%s198] sm:$0xff]
  %s200 = scalar_lea.vmem %s1, 312
  %s201 = scalar_lea.vmem %s0, 2160
  %v202 = vld [vmem:[%s201] sm:$0xff]
  %s203 = scalar_lea.vmem %s1, 1080
  %s204 = scalar_lea.vmem %s0, 624
  %v205 = vld [vmem:[%s204] sm:$0xff]
  %s206 = scalar_lea.vmem %s1, 1848
  %s207 = scalar_lea.vmem %s0, 3184
  %v208 = vld [vmem:[%s207] sm:$0xff]
  %s209 = scalar_lea.vmem %s1, 568
  %s210 = scalar_lea.vmem %s0, 1648
  %v211 = vld [vmem:[%s210] sm:$0xff]
  %s212 = scalar_lea.vmem %s1, 1336
  %s213 = scalar_lea.vmem %s0, 112
  %v214 = vld [vmem:[%s213] sm:$0xff]
  %s215 = scalar_lea.vmem %s1, 2104
  %s216 = scalar_lea.vmem %s0, 4224
  %v217 = vld [vmem:[%s216] sm:$0xff]
  %s218 = scalar_lea.vmem %s1, 64
  %s219 = scalar_lea.vmem %s0, 2688
  %v220 = vld [vmem:[%s219] sm:$0xff]
  %s221 = scalar_lea.vmem %s1, 832
  %s222 = scalar_lea.vmem %s0, 1152
  %v223 = vld [vmem:[%s222] sm:$0xff]
  %s224 = scalar_lea.vmem %s1, 1600
  %s225 = scalar_lea.vmem %s0, 3712
  %v226 = vld [vmem:[%s225] sm:$0xff]
  %s227 = scalar_lea.vmem %s1, 320
  %s228 = scalar_lea.vmem %s0, 2176
  %v229 = vld [vmem:[%s228] sm:$0xff]
  %s230 = scalar_lea.vmem %s1, 1088
  %s231 = scalar_lea.vmem %s0, 640
  %v232 = vld [vmem:[%s231] sm:$0xff]
  %s233 = scalar_lea.vmem %s1, 1856
  %s234 = scalar_lea.vmem %s0, 3200
  %v235 = vld [vmem:[%s234] sm:$0xff]
  %s236 = scalar_lea.vmem %s1, 576
  %s237 = scalar_lea.vmem %s0, 1664
  %v238 = vld [vmem:[%s237] sm:$0xff]
  %s239 = scalar_lea.vmem %s1, 1344
  %s240 = scalar_lea.vmem %s0, 128
  %v241 = vld [vmem:[%s240] sm:$0xff]
  %s242 = scalar_lea.vmem %s1, 2112
  %s243 = scalar_lea.vmem %s0, 4240
  %v244 = vld [vmem:[%s243] sm:$0xff]
  %s245 = scalar_lea.vmem %s1, 72
  %s246 = scalar_lea.vmem %s0, 2704
  %v247 = vld [vmem:[%s246] sm:$0xff]
  %s248 = scalar_lea.vmem %s1, 840
  %s249 = scalar_lea.vmem %s0, 1168
  %v250 = vld [vmem:[%s249] sm:$0xff]
  %s251 = scalar_lea.vmem %s1, 1608
  %s252 = scalar_lea.vmem %s0, 3728
  %v253 = vld [vmem:[%s252] sm:$0xff]
  %s254 = scalar_lea.vmem %s1, 328
  %s255 = scalar_lea.vmem %s0, 2192
  %v256 = vld [vmem:[%s255] sm:$0xff]
  %s257 = scalar_lea.vmem %s1, 1096
  %s258 = scalar_lea.vmem %s0, 656
  %v259 = vld [vmem:[%s258] sm:$0xff]
  %s260 = scalar_lea.vmem %s1, 1864
  %s261 = scalar_lea.vmem %s0, 3216
  %v262 = vld [vmem:[%s261] sm:$0xff]
  %s263 = scalar_lea.vmem %s1, 584
  %s264 = scalar_lea.vmem %s0, 1680
  %v265 = vld [vmem:[%s264] sm:$0xff]
  %s266 = scalar_lea.vmem %s1, 1352
  %s267 = scalar_lea.vmem %s0, 144
  %v268 = vld [vmem:[%s267] sm:$0xff]
  %s269 = scalar_lea.vmem %s1, 2120
  %s270 = scalar_lea.vmem %s0, 4256
  %v271 = vld [vmem:[%s270] sm:$0xff]
  %s272 = scalar_lea.vmem %s1, 80
  %s273 = scalar_lea.vmem %s0, 2720
  %v274 = vld [vmem:[%s273] sm:$0xff]
  %s275 = scalar_lea.vmem %s1, 848
  %s276 = scalar_lea.vmem %s0, 1184
  %v277 = vld [vmem:[%s276] sm:$0xff]
  %s278 = scalar_lea.vmem %s1, 1616
  %s279 = scalar_lea.vmem %s0, 3744
  %v280 = vld [vmem:[%s279] sm:$0xff]
  %s281 = scalar_lea.vmem %s1, 336
  %s282 = scalar_lea.vmem %s0, 2208
  %v283 = vld [vmem:[%s282] sm:$0xff]
  %s284 = scalar_lea.vmem %s1, 1104
  %s285 = scalar_lea.vmem %s0, 672
  %v286 = vld [vmem:[%s285] sm:$0xff]
  %s287 = scalar_lea.vmem %s1, 1872
  %s288 = scalar_lea.vmem %s0, 3232
  %v289 = vld [vmem:[%s288] sm:$0xff]
  %s290 = scalar_lea.vmem %s1, 592
  %s291 = scalar_lea.vmem %s0, 1696
  %v292 = vld [vmem:[%s291] sm:$0xff]
  %s293 = scalar_lea.vmem %s1, 1360
  %s294 = scalar_lea.vmem %s0, 160
  %v295 = vld [vmem:[%s294] sm:$0xff]
  %s296 = scalar_lea.vmem %s1, 2128
  %s297 = scalar_lea.vmem %s0, 4272
  %v298 = vld [vmem:[%s297] sm:$0xff]
  %s299 = scalar_lea.vmem %s1, 88
  %s300 = scalar_lea.vmem %s0, 2736
  %v301 = vld [vmem:[%s300] sm:$0xff]
  %s302 = scalar_lea.vmem %s1, 856
  %s303 = scalar_lea.vmem %s0, 1200
  %v304 = vld [vmem:[%s303] sm:$0xff]
  %s305 = scalar_lea.vmem %s1, 1624
  %s306 = scalar_lea.vmem %s0, 3760
  %v307 = vld [vmem:[%s306] sm:$0xff]
  %s308 = scalar_lea.vmem %s1, 344
  %s309 = scalar_lea.vmem %s0, 2224
  %v310 = vld [vmem:[%s309] sm:$0xff]
  %s311 = scalar_lea.vmem %s1, 1112
  %s312 = scalar_lea.vmem %s0, 688
  %v313 = vld [vmem:[%s312] sm:$0xff]
  %s314 = scalar_lea.vmem %s1, 1880
  %s315 = scalar_lea.vmem %s0, 3248
  %v316 = vld [vmem:[%s315] sm:$0xff]
  %s317 = scalar_lea.vmem %s1, 600
  %s318 = scalar_lea.vmem %s0, 1712
  %v319 = vld [vmem:[%s318] sm:$0xff]
  %s320 = scalar_lea.vmem %s1, 1368
  %s321 = scalar_lea.vmem %s0, 176
  %v322 = vld [vmem:[%s321] sm:$0xff]
  %s323 = scalar_lea.vmem %s1, 2136
  %s324 = scalar_lea.vmem %s0, 4288
  %v325 = vld [vmem:[%s324] sm:$0xff]
  %s326 = scalar_lea.vmem %s1, 96
  %s327 = scalar_lea.vmem %s0, 2752
  %v328 = vld [vmem:[%s327] sm:$0xff]
  %s329 = scalar_lea.vmem %s1, 864
  %s330 = scalar_lea.vmem %s0, 1216
  %v331 = vld [vmem:[%s330] sm:$0xff]
  %s332 = scalar_lea.vmem %s1, 1632
  %s333 = scalar_lea.vmem %s0, 3776
  %v334 = vld [vmem:[%s333] sm:$0xff]
  %s335 = scalar_lea.vmem %s1, 352
  %s336 = scalar_lea.vmem %s0, 2240
  %v337 = vld [vmem:[%s336] sm:$0xff]
  %s338 = scalar_lea.vmem %s1, 1120
  %s339 = scalar_lea.vmem %s0, 704
  %v340 = vld [vmem:[%s339] sm:$0xff]
  %s341 = scalar_lea.vmem %s1, 1888
  %s342 = scalar_lea.vmem %s0, 3264
  %v343 = vld [vmem:[%s342] sm:$0xff]
  %s344 = scalar_lea.vmem %s1, 608
  %s345 = scalar_lea.vmem %s0, 1728
  %v346 = vld [vmem:[%s345] sm:$0xff]
  %s347 = scalar_lea.vmem %s1, 1376
  %s348 = scalar_lea.vmem %s0, 192
  %v349 = vld [vmem:[%s348] sm:$0xff]
  %s350 = scalar_lea.vmem %s1, 2144
  %s351 = scalar_lea.vmem %s0, 4304
  %v352 = vld [vmem:[%s351] sm:$0xff]
  %s353 = scalar_lea.vmem %s1, 104
  %s354 = scalar_lea.vmem %s0, 2768
  %v355 = vld [vmem:[%s354] sm:$0xff]
  %s356 = scalar_lea.vmem %s1, 872
  %s357 = scalar_lea.vmem %s0, 1232
  %v358 = vld [vmem:[%s357] sm:$0xff]
  %s359 = scalar_lea.vmem %s1, 1640
  %s360 = scalar_lea.vmem %s0, 3792
  %v361 = vld [vmem:[%s360] sm:$0xff]
  %s362 = scalar_lea.vmem %s1, 360
  %s363 = scalar_lea.vmem %s0, 2256
  %v364 = vld [vmem:[%s363] sm:$0xff]
  %s365 = scalar_lea.vmem %s1, 1128
  %s366 = scalar_lea.vmem %s0, 720
  %v367 = vld [vmem:[%s366] sm:$0xff]
  %s368 = scalar_lea.vmem %s1, 1896
  %s369 = scalar_lea.vmem %s0, 3280
  %v370 = vld [vmem:[%s369] sm:$0xff]
  %s371 = scalar_lea.vmem %s1, 616
  %s372 = scalar_lea.vmem %s0, 1744
  %v373 = vld [vmem:[%s372] sm:$0xff]
  %s374 = scalar_lea.vmem %s1, 1384
  %s375 = scalar_lea.vmem %s0, 208
  %v376 = vld [vmem:[%s375] sm:$0xff]
  %s377 = scalar_lea.vmem %s1, 2152
  %s378 = scalar_lea.vmem %s0, 4320
  %v379 = vld [vmem:[%s378] sm:$0xff]
  %s380 = scalar_lea.vmem %s1, 112
  %s381 = scalar_lea.vmem %s0, 2784
  %v382 = vld [vmem:[%s381] sm:$0xff]
  %s383 = scalar_lea.vmem %s1, 880
  %s384 = scalar_lea.vmem %s0, 1248
  %v385 = vld [vmem:[%s384] sm:$0xff]
  %s386 = scalar_lea.vmem %s1, 1648
  %s387 = scalar_lea.vmem %s0, 3808
  %v388 = vld [vmem:[%s387] sm:$0xff]
  %s389 = scalar_lea.vmem %s1, 368
  %s390 = scalar_lea.vmem %s0, 2272
  %v391 = vld [vmem:[%s390] sm:$0xff]
  %s392 = scalar_lea.vmem %s1, 1136
  %s393 = scalar_lea.vmem %s0, 736
  %v394 = vld [vmem:[%s393] sm:$0xff]
  %s395 = scalar_lea.vmem %s1, 1904
  %s396 = scalar_lea.vmem %s0, 3296
  %v397 = vld [vmem:[%s396] sm:$0xff]
  %s398 = scalar_lea.vmem %s1, 624
  %s399 = scalar_lea.vmem %s0, 1760
  %v400 = vld [vmem:[%s399] sm:$0xff]
  %s401 = scalar_lea.vmem %s1, 1392
  %s402 = scalar_lea.vmem %s0, 224
  %v403 = vld [vmem:[%s402] sm:$0xff]
  %s404 = scalar_lea.vmem %s1, 2160
  %s405 = scalar_lea.vmem %s0, 4336
  %v406 = vld [vmem:[%s405] sm:$0xff]
  %s407 = scalar_lea.vmem %s1, 120
  %s408 = scalar_lea.vmem %s0, 2800
  %v409 = vld [vmem:[%s408] sm:$0xff]
  %s410 = scalar_lea.vmem %s1, 888
  %s411 = scalar_lea.vmem %s0, 1264
  %v412 = vld [vmem:[%s411] sm:$0xff]
  %s413 = scalar_lea.vmem %s1, 1656
  %s414 = scalar_lea.vmem %s0, 3824
  %v415 = vld [vmem:[%s414] sm:$0xff]
  %s416 = scalar_lea.vmem %s1, 376
  %s417 = scalar_lea.vmem %s0, 2288
  %v418 = vld [vmem:[%s417] sm:$0xff]
  %s419 = scalar_lea.vmem %s1, 1144
  %s420 = scalar_lea.vmem %s0, 752
  %v421 = vld [vmem:[%s420] sm:$0xff]
  %s422 = scalar_lea.vmem %s1, 1912
  %s423 = scalar_lea.vmem %s0, 3312
  %v424 = vld [vmem:[%s423] sm:$0xff]
  %s425 = scalar_lea.vmem %s1, 632
  %s426 = scalar_lea.vmem %s0, 1776
  %v427 = vld [vmem:[%s426] sm:$0xff]
  %s428 = scalar_lea.vmem %s1, 1400
  %s429 = scalar_lea.vmem %s0, 240
  %v430 = vld [vmem:[%s429] sm:$0xff]
  %s431 = scalar_lea.vmem %s1, 2168
  %s432 = scalar_lea.vmem %s0, 4352
  %v433 = vld [vmem:[%s432] sm:$0xff]
  %s434 = scalar_lea.vmem %s1, 128
  %s435 = scalar_lea.vmem %s0, 2816
  %v436 = vld [vmem:[%s435] sm:$0xff]
  %s437 = scalar_lea.vmem %s1, 896
  %s438 = scalar_lea.vmem %s0, 1280
  %v439 = vld [vmem:[%s438] sm:$0xff]
  %s440 = scalar_lea.vmem %s1, 1664
  %s441 = scalar_lea.vmem %s0, 3840
  %v442 = vld [vmem:[%s441] sm:$0xff]
  %s443 = scalar_lea.vmem %s1, 384
  %s444 = scalar_lea.vmem %s0, 2304
  %v445 = vld [vmem:[%s444] sm:$0xff]
  %s446 = scalar_lea.vmem %s1, 1152
  %s447 = scalar_lea.vmem %s0, 768
  %v448 = vld [vmem:[%s447] sm:$0xff]
  %s449 = scalar_lea.vmem %s1, 1920
  %s450 = scalar_lea.vmem %s0, 3328
  %v451 = vld [vmem:[%s450] sm:$0xff]
  %s452 = scalar_lea.vmem %s1, 640
  %s453 = scalar_lea.vmem %s0, 1792
  %v454 = vld [vmem:[%s453] sm:$0xff]
  %s455 = scalar_lea.vmem %s1, 1408
  %s456 = scalar_lea.vmem %s0, 256
  %v457 = vld [vmem:[%s456] sm:$0xff]
  %s458 = scalar_lea.vmem %s1, 2176
  %s459 = scalar_lea.vmem %s0, 4368
  %v460 = vld [vmem:[%s459] sm:$0xff]
  %s461 = scalar_lea.vmem %s1, 136
  %s462 = scalar_lea.vmem %s0, 2832
  %v463 = vld [vmem:[%s462] sm:$0xff]
  %s464 = scalar_lea.vmem %s1, 904
  %s465 = scalar_lea.vmem %s0, 1296
  %v466 = vld [vmem:[%s465] sm:$0xff]
  %s467 = scalar_lea.vmem %s1, 1672
  %s468 = scalar_lea.vmem %s0, 3856
  %v469 = vld [vmem:[%s468] sm:$0xff]
  %s470 = scalar_lea.vmem %s1, 392
  %s471 = scalar_lea.vmem %s0, 2320
  %v472 = vld [vmem:[%s471] sm:$0xff]
  %s473 = scalar_lea.vmem %s1, 1160
  %s474 = scalar_lea.vmem %s0, 784
  %v475 = vld [vmem:[%s474] sm:$0xff]
  %s476 = scalar_lea.vmem %s1, 1928
  %s477 = scalar_lea.vmem %s0, 3344
  %v478 = vld [vmem:[%s477] sm:$0xff]
  %s479 = scalar_lea.vmem %s1, 648
  %s480 = scalar_lea.vmem %s0, 1808
  %v481 = vld [vmem:[%s480] sm:$0xff]
  %s482 = scalar_lea.vmem %s1, 1416
  %s483 = scalar_lea.vmem %s0, 272
  %v484 = vld [vmem:[%s483] sm:$0xff]
  %s485 = scalar_lea.vmem %s1, 2184
  %s486 = scalar_lea.vmem %s0, 4384
  %v487 = vld [vmem:[%s486] sm:$0xff]
  %s488 = scalar_lea.vmem %s1, 144
  %s489 = scalar_lea.vmem %s0, 2848
  %v490 = vld [vmem:[%s489] sm:$0xff]
  %s491 = scalar_lea.vmem %s1, 912
  %s492 = scalar_lea.vmem %s0, 1312
  %v493 = vld [vmem:[%s492] sm:$0xff]
  %s494 = scalar_lea.vmem %s1, 1680
  %s495 = scalar_lea.vmem %s0, 3872
  %v496 = vld [vmem:[%s495] sm:$0xff]
  %s497 = scalar_lea.vmem %s1, 400
  %s498 = scalar_lea.vmem %s0, 2336
  %v499 = vld [vmem:[%s498] sm:$0xff]
  %s500 = scalar_lea.vmem %s1, 1168
  %s501 = scalar_lea.vmem %s0, 800
  %v502 = vld [vmem:[%s501] sm:$0xff]
  %s503 = scalar_lea.vmem %s1, 1936
  %s504 = scalar_lea.vmem %s0, 3360
  %v505 = vld [vmem:[%s504] sm:$0xff]
  %s506 = scalar_lea.vmem %s1, 656
  %s507 = scalar_lea.vmem %s0, 1824
  %v508 = vld [vmem:[%s507] sm:$0xff]
  %s509 = scalar_lea.vmem %s1, 1424
  %s510 = scalar_lea.vmem %s0, 288
  %v511 = vld [vmem:[%s510] sm:$0xff]
  %s512 = scalar_lea.vmem %s1, 2192
  %s513 = scalar_lea.vmem %s0, 4400
  %v514 = vld [vmem:[%s513] sm:$0xff]
  %s515 = scalar_lea.vmem %s1, 152
  %s516 = scalar_lea.vmem %s0, 2864
  %v517 = vld [vmem:[%s516] sm:$0xff]
  %s518 = scalar_lea.vmem %s1, 920
  %s519 = scalar_lea.vmem %s0, 1328
  %v520 = vld [vmem:[%s519] sm:$0xff]
  %s521 = scalar_lea.vmem %s1, 1688
  %s522 = scalar_lea.vmem %s0, 3888
  %v523 = vld [vmem:[%s522] sm:$0xff]
  %s524 = scalar_lea.vmem %s1, 408
  %s525 = scalar_lea.vmem %s0, 2352
  %v526 = vld [vmem:[%s525] sm:$0xff]
  %s527 = scalar_lea.vmem %s1, 1176
  %s528 = scalar_lea.vmem %s0, 816
  %v529 = vld [vmem:[%s528] sm:$0xff]
  %s530 = scalar_lea.vmem %s1, 1944
  %s531 = scalar_lea.vmem %s0, 3376
  %v532 = vld [vmem:[%s531] sm:$0xff]
  %s533 = scalar_lea.vmem %s1, 664
  %s534 = scalar_lea.vmem %s0, 1840
  %v535 = vld [vmem:[%s534] sm:$0xff]
  %s536 = scalar_lea.vmem %s1, 1432
  %s537 = scalar_lea.vmem %s0, 304
  %v538 = vld [vmem:[%s537] sm:$0xff]
  %s539 = scalar_lea.vmem %s1, 2200
  %s540 = scalar_lea.vmem %s0, 4416
  %v541 = vld [vmem:[%s540] sm:$0xff]
  %s542 = scalar_lea.vmem %s1, 160
  %s543 = scalar_lea.vmem %s0, 2880
  %v544 = vld [vmem:[%s543] sm:$0xff]
  %s545 = scalar_lea.vmem %s1, 928
  %s546 = scalar_lea.vmem %s0, 1344
  %v547 = vld [vmem:[%s546] sm:$0xff]
  %s548 = scalar_lea.vmem %s1, 1696
  %s549 = scalar_lea.vmem %s0, 3904
  %v550 = vld [vmem:[%s549] sm:$0xff]
  %s551 = scalar_lea.vmem %s1, 416
  %s552 = scalar_lea.vmem %s0, 2368
  %v553 = vld [vmem:[%s552] sm:$0xff]
  %s554 = scalar_lea.vmem %s1, 1184
  %s555 = scalar_lea.vmem %s0, 832
  %v556 = vld [vmem:[%s555] sm:$0xff]
  %s557 = scalar_lea.vmem %s1, 1952
  %s558 = scalar_lea.vmem %s0, 3392
  %v559 = vld [vmem:[%s558] sm:$0xff]
  %s560 = scalar_lea.vmem %s1, 672
  %s561 = scalar_lea.vmem %s0, 1856
  %v562 = vld [vmem:[%s561] sm:$0xff]
  %s563 = scalar_lea.vmem %s1, 1440
  %s564 = scalar_lea.vmem %s0, 320
  %v565 = vld [vmem:[%s564] sm:$0xff]
  %s566 = scalar_lea.vmem %s1, 2208
  %s567 = scalar_lea.vmem %s0, 4432
  %v568 = vld [vmem:[%s567] sm:$0xff]
  %s569 = scalar_lea.vmem %s1, 168
  %s570 = scalar_lea.vmem %s0, 2896
  %v571 = vld [vmem:[%s570] sm:$0xff]
  %s572 = scalar_lea.vmem %s1, 936
  %s573 = scalar_lea.vmem %s0, 1360
  %v574 = vld [vmem:[%s573] sm:$0xff]
  %s575 = scalar_lea.vmem %s1, 1704
  %s576 = scalar_lea.vmem %s0, 3920
  %v577 = vld [vmem:[%s576] sm:$0xff]
  %s578 = scalar_lea.vmem %s1, 424
  %s579 = scalar_lea.vmem %s0, 2384
  %v580 = vld [vmem:[%s579] sm:$0xff]
  %s581 = scalar_lea.vmem %s1, 1192
  %s582 = scalar_lea.vmem %s0, 848
  %v583 = vld [vmem:[%s582] sm:$0xff]
  %s584 = scalar_lea.vmem %s1, 1960
  %s585 = scalar_lea.vmem %s0, 3408
  %v586 = vld [vmem:[%s585] sm:$0xff]
  %s587 = scalar_lea.vmem %s1, 680
  %s588 = scalar_lea.vmem %s0, 1872
  %v589 = vld [vmem:[%s588] sm:$0xff]
  %s590 = scalar_lea.vmem %s1, 1448
  %s591 = scalar_lea.vmem %s0, 336
  %v592 = vld [vmem:[%s591] sm:$0xff]
  %s593 = scalar_lea.vmem %s1, 2216
  %s594 = scalar_lea.vmem %s0, 4448
  %v595 = vld [vmem:[%s594] sm:$0xff]
  %s596 = scalar_lea.vmem %s1, 176
  %s597 = scalar_lea.vmem %s0, 2912
  %v598 = vld [vmem:[%s597] sm:$0xff]
  %s599 = scalar_lea.vmem %s1, 944
  %s600 = scalar_lea.vmem %s0, 1376
  %v601 = vld [vmem:[%s600] sm:$0xff]
  %s602 = scalar_lea.vmem %s1, 1712
  %s603 = scalar_lea.vmem %s0, 3936
  %v604 = vld [vmem:[%s603] sm:$0xff]
  %s605 = scalar_lea.vmem %s1, 432
  %s606 = scalar_lea.vmem %s0, 2400
  %v607 = vld [vmem:[%s606] sm:$0xff]
  %s608 = scalar_lea.vmem %s1, 1200
  %s609 = scalar_lea.vmem %s0, 864
  %v610 = vld [vmem:[%s609] sm:$0xff]
  %s611 = scalar_lea.vmem %s1, 1968
  %s612 = scalar_lea.vmem %s0, 3424
  %v613 = vld [vmem:[%s612] sm:$0xff]
  %s614 = scalar_lea.vmem %s1, 688
  %s615 = scalar_lea.vmem %s0, 1888
  %v616 = vld [vmem:[%s615] sm:$0xff]
  %s617 = scalar_lea.vmem %s1, 1456
  %s618 = scalar_lea.vmem %s0, 352
  %v619 = vld [vmem:[%s618] sm:$0xff]
  %s620 = scalar_lea.vmem %s1, 2224
  %s621 = scalar_lea.vmem %s0, 4464
  %v622 = vld [vmem:[%s621] sm:$0xff]
  %s623 = scalar_lea.vmem %s1, 184
  %s624 = scalar_lea.vmem %s0, 2928
  %v625 = vld [vmem:[%s624] sm:$0xff]
  %s626 = scalar_lea.vmem %s1, 952
  %s627 = scalar_lea.vmem %s0, 1392
  %v628 = vld [vmem:[%s627] sm:$0xff]
  %s629 = scalar_lea.vmem %s1, 1720
  %s630 = scalar_lea.vmem %s0, 3952
  %v631 = vld [vmem:[%s630] sm:$0xff]
  %s632 = scalar_lea.vmem %s1, 440
  %s633 = scalar_lea.vmem %s0, 2416
  %v634 = vld [vmem:[%s633] sm:$0xff]
  %s635 = scalar_lea.vmem %s1, 1208
  %s636 = scalar_lea.vmem %s0, 880
  %v637 = vld [vmem:[%s636] sm:$0xff]
  %s638 = scalar_lea.vmem %s1, 1976
  %s639 = scalar_lea.vmem %s0, 3440
  %v640 = vld [vmem:[%s639] sm:$0xff]
  %s641 = scalar_lea.vmem %s1, 696
  %s642 = scalar_lea.vmem %s0, 1904
  %v643 = vld [vmem:[%s642] sm:$0xff]
  %s644 = scalar_lea.vmem %s1, 1464
  %s645 = scalar_lea.vmem %s0, 368
  %v646 = vld [vmem:[%s645] sm:$0xff]
  %s647 = scalar_lea.vmem %s1, 2232
  %s648 = scalar_lea.vmem %s0, 4480
  %v649 = vld [vmem:[%s648] sm:$0xff]
  %s650 = scalar_lea.vmem %s1, 192
  %s651 = scalar_lea.vmem %s0, 2944
  %v652 = vld [vmem:[%s651] sm:$0xff]
  %s653 = scalar_lea.vmem %s1, 960
  %s654 = scalar_lea.vmem %s0, 1408
  %v655 = vld [vmem:[%s654] sm:$0xff]
  %s656 = scalar_lea.vmem %s1, 1728
  %s657 = scalar_lea.vmem %s0, 3968
  %v658 = vld [vmem:[%s657] sm:$0xff]
  %s659 = scalar_lea.vmem %s1, 448
  %s660 = scalar_lea.vmem %s0, 2432
  %v661 = vld [vmem:[%s660] sm:$0xff]
  %s662 = scalar_lea.vmem %s1, 1216
  %s663 = scalar_lea.vmem %s0, 896
  %v664 = vld [vmem:[%s663] sm:$0xff]
  %s665 = scalar_lea.vmem %s1, 1984
  %s666 = scalar_lea.vmem %s0, 3456
  %v667 = vld [vmem:[%s666] sm:$0xff]
  %s668 = scalar_lea.vmem %s1, 704
  %s669 = scalar_lea.vmem %s0, 1920
  %v670 = vld [vmem:[%s669] sm:$0xff]
  %s671 = scalar_lea.vmem %s1, 1472
  %s672 = scalar_lea.vmem %s0, 384
  %v673 = vld [vmem:[%s672] sm:$0xff]
  %s674 = scalar_lea.vmem %s1, 2240
  %s675 = scalar_lea.vmem %s0, 4496
  %v676 = vld [vmem:[%s675] sm:$0xff]
  %s677 = scalar_lea.vmem %s1, 200
  %s678 = scalar_lea.vmem %s0, 2960
  %v679 = vld [vmem:[%s678] sm:$0xff]
  %s680 = scalar_lea.vmem %s1, 968
  %s681 = scalar_lea.vmem %s0, 1424
  %v682 = vld [vmem:[%s681] sm:$0xff]
  %s683 = scalar_lea.vmem %s1, 1736
  %s684 = scalar_lea.vmem %s0, 3984
  %v685 = vld [vmem:[%s684] sm:$0xff]
  %s686 = scalar_lea.vmem %s1, 456
  %s687 = scalar_lea.vmem %s0, 2448
  %v688 = vld [vmem:[%s687] sm:$0xff]
  %s689 = scalar_lea.vmem %s1, 1224
  %s690 = scalar_lea.vmem %s0, 912
  %v691 = vld [vmem:[%s690] sm:$0xff]
  %s692 = scalar_lea.vmem %s1, 1992
  %s693 = scalar_lea.vmem %s0, 3472
  %v694 = vld [vmem:[%s693] sm:$0xff]
  %s695 = scalar_lea.vmem %s1, 712
  %s696 = scalar_lea.vmem %s0, 1936
  %v697 = vld [vmem:[%s696] sm:$0xff]
  %s698 = scalar_lea.vmem %s1, 1480
  %s699 = scalar_lea.vmem %s0, 400
  %v700 = vld [vmem:[%s699] sm:$0xff]
  %s701 = scalar_lea.vmem %s1, 2248
  %s702 = scalar_lea.vmem %s0, 4512
  %v703 = vld [vmem:[%s702] sm:$0xff]
  %s704 = scalar_lea.vmem %s1, 208
  %s705 = scalar_lea.vmem %s0, 2976
  %v706 = vld [vmem:[%s705] sm:$0xff]
  %s707 = scalar_lea.vmem %s1, 976
  %s708 = scalar_lea.vmem %s0, 1440
  %v709 = vld [vmem:[%s708] sm:$0xff]
  %s710 = scalar_lea.vmem %s1, 1744
  %s711 = scalar_lea.vmem %s0, 4000
  %v712 = vld [vmem:[%s711] sm:$0xff]
  %s713 = scalar_lea.vmem %s1, 464
  %s714 = scalar_lea.vmem %s0, 2464
  %v715 = vld [vmem:[%s714] sm:$0xff]
  %s716 = scalar_lea.vmem %s1, 1232
  %s717 = scalar_lea.vmem %s0, 928
  %v718 = vld [vmem:[%s717] sm:$0xff]
  %s719 = scalar_lea.vmem %s1, 2000
  %s720 = scalar_lea.vmem %s0, 3488
  %v721 = vld [vmem:[%s720] sm:$0xff]
  %s722 = scalar_lea.vmem %s1, 720
  %s723 = scalar_lea.vmem %s0, 1952
  %v724 = vld [vmem:[%s723] sm:$0xff]
  %s725 = scalar_lea.vmem %s1, 1488
  %s726 = scalar_lea.vmem %s0, 416
  %v727 = vld [vmem:[%s726] sm:$0xff]
  %s728 = scalar_lea.vmem %s1, 2256
  %s729 = scalar_lea.vmem %s0, 4528
  %v730 = vld [vmem:[%s729] sm:$0xff]
  %s731 = scalar_lea.vmem %s1, 216
  %s732 = scalar_lea.vmem %s0, 2992
  %v733 = vld [vmem:[%s732] sm:$0xff]
  %s734 = scalar_lea.vmem %s1, 984
  %s735 = scalar_lea.vmem %s0, 1456
  %v736 = vld [vmem:[%s735] sm:$0xff]
  %s737 = scalar_lea.vmem %s1, 1752
  %s738 = scalar_lea.vmem %s0, 4016
  %v739 = vld [vmem:[%s738] sm:$0xff]
  %s740 = scalar_lea.vmem %s1, 472
  %s741 = scalar_lea.vmem %s0, 2480
  %v742 = vld [vmem:[%s741] sm:$0xff]
  %s743 = scalar_lea.vmem %s1, 1240
  %s744 = scalar_lea.vmem %s0, 944
  %v745 = vld [vmem:[%s744] sm:$0xff]
  %s746 = scalar_lea.vmem %s1, 2008
  %s747 = scalar_lea.vmem %s0, 3504
  %v748 = vld [vmem:[%s747] sm:$0xff]
  %s749 = scalar_lea.vmem %s1, 728
  %s750 = scalar_lea.vmem %s0, 1968
  %v751 = vld [vmem:[%s750] sm:$0xff]
  %s752 = scalar_lea.vmem %s1, 1496
  %s753 = scalar_lea.vmem %s0, 432
  %v754 = vld [vmem:[%s753] sm:$0xff]
  %s755 = scalar_lea.vmem %s1, 2264
  %s756 = scalar_lea.vmem %s0, 4544
  %v757 = vld [vmem:[%s756] sm:$0xff]
  %s758 = scalar_lea.vmem %s1, 224
  %s759 = scalar_lea.vmem %s0, 3008
  %v760 = vld [vmem:[%s759] sm:$0xff]
  %s761 = scalar_lea.vmem %s1, 992
  %s762 = scalar_lea.vmem %s0, 1472
  %v763 = vld [vmem:[%s762] sm:$0xff]
  %s764 = scalar_lea.vmem %s1, 1760
  %s765 = scalar_lea.vmem %s0, 4032
  %v766 = vld [vmem:[%s765] sm:$0xff]
  %s767 = scalar_lea.vmem %s1, 480
  %s768 = scalar_lea.vmem %s0, 2496
  %v769 = vld [vmem:[%s768] sm:$0xff]
  %s770 = scalar_lea.vmem %s1, 1248
  %s771 = scalar_lea.vmem %s0, 960
  %v772 = vld [vmem:[%s771] sm:$0xff]
  %s773 = scalar_lea.vmem %s1, 2016
  %s774 = scalar_lea.vmem %s0, 3520
  %v775 = vld [vmem:[%s774] sm:$0xff]
  %s776 = scalar_lea.vmem %s1, 736
  %s777 = scalar_lea.vmem %s0, 1984
  %v778 = vld [vmem:[%s777] sm:$0xff]
  %s779 = scalar_lea.vmem %s1, 1504
  %s780 = scalar_lea.vmem %s0, 448
  %v781 = vld [vmem:[%s780] sm:$0xff]
  %s782 = scalar_lea.vmem %s1, 2272
  %s783 = scalar_lea.vmem %s0, 4560
  %v784 = vld [vmem:[%s783] sm:$0xff]
  %s785 = scalar_lea.vmem %s1, 232
  %s786 = scalar_lea.vmem %s0, 3024
  %v787 = vld [vmem:[%s786] sm:$0xff]
  %s788 = scalar_lea.vmem %s1, 1000
  %s789 = scalar_lea.vmem %s0, 1488
  %v790 = vld [vmem:[%s789] sm:$0xff]
  %s791 = scalar_lea.vmem %s1, 1768
  %s792 = scalar_lea.vmem %s0, 4048
  %v793 = vld [vmem:[%s792] sm:$0xff]
  %s794 = scalar_lea.vmem %s1, 488
  %s795 = scalar_lea.vmem %s0, 2512
  %v796 = vld [vmem:[%s795] sm:$0xff]
  %s797 = scalar_lea.vmem %s1, 1256
  %s798 = scalar_lea.vmem %s0, 976
  %v799 = vld [vmem:[%s798] sm:$0xff]
  %s800 = scalar_lea.vmem %s1, 2024
  %s801 = scalar_lea.vmem %s0, 3536
  %v802 = vld [vmem:[%s801] sm:$0xff]
  %s803 = scalar_lea.vmem %s1, 744
  %s804 = scalar_lea.vmem %s0, 2000
  %v805 = vld [vmem:[%s804] sm:$0xff]
  %s806 = scalar_lea.vmem %s1, 1512
  %s807 = scalar_lea.vmem %s0, 464
  %v808 = vld [vmem:[%s807] sm:$0xff]
  %s809 = scalar_lea.vmem %s1, 2280
  %s810 = scalar_lea.vmem %s0, 4576
  %v811 = vld [vmem:[%s810] sm:$0xff]
  %s812 = scalar_lea.vmem %s1, 240
  %s813 = scalar_lea.vmem %s0, 3040
  %v814 = vld [vmem:[%s813] sm:$0xff]
  %s815 = scalar_lea.vmem %s1, 1008
  %s816 = scalar_lea.vmem %s0, 1504
  %v817 = vld [vmem:[%s816] sm:$0xff]
  %s818 = scalar_lea.vmem %s1, 1776
  %s819 = scalar_lea.vmem %s0, 4064
  %v820 = vld [vmem:[%s819] sm:$0xff]
  %s821 = scalar_lea.vmem %s1, 496
  %s822 = scalar_lea.vmem %s0, 2528
  %v823 = vld [vmem:[%s822] sm:$0xff]
  %s824 = scalar_lea.vmem %s1, 1264
  %s825 = scalar_lea.vmem %s0, 992
  %v826 = vld [vmem:[%s825] sm:$0xff]
  %s827 = scalar_lea.vmem %s1, 2032
  %s828 = scalar_lea.vmem %s0, 3552
  %v829 = vld [vmem:[%s828] sm:$0xff]
  %s830 = scalar_lea.vmem %s1, 752
  %s831 = scalar_lea.vmem %s0, 2016
  %v832 = vld [vmem:[%s831] sm:$0xff]
  %s833 = scalar_lea.vmem %s1, 1520
  %s834 = scalar_lea.vmem %s0, 480
  %v835 = vld [vmem:[%s834] sm:$0xff]
  %s836 = scalar_lea.vmem %s1, 2288
  %s837 = scalar_lea.vmem %s0, 4592
  %v838 = vld [vmem:[%s837] sm:$0xff]
  %s839 = scalar_lea.vmem %s1, 248
  %s840 = scalar_lea.vmem %s0, 3056
  %v841 = vld [vmem:[%s840] sm:$0xff]
  %s842 = scalar_lea.vmem %s1, 1016
  %s843 = scalar_lea.vmem %s0, 1520
  %v844 = vld [vmem:[%s843] sm:$0xff]
  %s845 = scalar_lea.vmem %s1, 1784
  %s846 = scalar_lea.vmem %s0, 4080
  %v847 = vld [vmem:[%s846] sm:$0xff]
  %s848 = scalar_lea.vmem %s1, 504
  %s849 = scalar_lea.vmem %s0, 2544
  %v850 = vld [vmem:[%s849] sm:$0xff]
  %s851 = scalar_lea.vmem %s1, 1272
  %s852 = scalar_lea.vmem %s0, 1008
  %v853 = vld [vmem:[%s852] sm:$0xff]
  %s854 = scalar_lea.vmem %s1, 2040
  %s855 = scalar_lea.vmem %s0, 3568
  %v856 = vld [vmem:[%s855] sm:$0xff]
  %s857 = scalar_lea.vmem %s1, 760
  %s858 = scalar_lea.vmem %s0, 2032
  %v859 = vld [vmem:[%s858] sm:$0xff]
  %s860 = scalar_lea.vmem %s1, 1528
  %s861 = scalar_lea.vmem %s0, 496
  %v862 = vld [vmem:[%s861] sm:$0xff]
  %s863 = scalar_lea.vmem %s1, 2296
  %s864 = scalar_lea.vmem %s0, 4104
  %v865 = vld [vmem:[%s864] sm:$0xff]
  %s866 = scalar_lea.vmem %s1, 4
  %s867 = scalar_lea.vmem %s866, 4294967292
  %v868 = vpack.c.bf16 %v865, %v3
  %869 = vst [vmem:[%s867] sm:$0xff] %v868
  %s870 = scalar_lea.vmem %s0, 2568
  %v871 = vld [vmem:[%s870] sm:$0xff]
  %s872 = scalar_lea.vmem %s1, 772
  %s873 = scalar_lea.vmem %s872, 4294967292
  %v874 = vpack.c.bf16 %v871, %v5
  %875 = vst [vmem:[%s873] sm:$0xff] %v874
  %s876 = scalar_lea.vmem %s0, 1032
  %v877 = vld [vmem:[%s876] sm:$0xff]
  %s878 = scalar_lea.vmem %s1, 1540
  %s879 = scalar_lea.vmem %s878, 4294967292
  %v880 = vpack.c.bf16 %v877, %v8
  %881 = vst [vmem:[%s879] sm:$0xff] %v880
  %s882 = scalar_lea.vmem %s0, 3592
  %v883 = vld [vmem:[%s882] sm:$0xff]
  %s884 = scalar_lea.vmem %s1, 260
  %s885 = scalar_lea.vmem %s884, 4294967292
  %v886 = vpack.c.bf16 %v883, %v11
  %887 = vst [vmem:[%s885] sm:$0xff] %v886
  %s888 = scalar_lea.vmem %s0, 2056
  %v889 = vld [vmem:[%s888] sm:$0xff]
  %s890 = scalar_lea.vmem %s1, 1028
  %s891 = scalar_lea.vmem %s890, 4294967292
  %v892 = vpack.c.bf16 %v889, %v14
  %893 = vst [vmem:[%s891] sm:$0xff] %v892
  %s894 = scalar_lea.vmem %s0, 520
  %v895 = vld [vmem:[%s894] sm:$0xff]
  %s896 = scalar_lea.vmem %s1, 1796
  %s897 = scalar_lea.vmem %s896, 4294967292
  %v898 = vpack.c.bf16 %v895, %v17
  %899 = vst [vmem:[%s897] sm:$0xff] %v898
  %s900 = scalar_lea.vmem %s0, 3080
  %v901 = vld [vmem:[%s900] sm:$0xff]
  %s902 = scalar_lea.vmem %s1, 516
  %s903 = scalar_lea.vmem %s902, 4294967292
  %v904 = vpack.c.bf16 %v901, %v20
  %905 = vst [vmem:[%s903] sm:$0xff] %v904
  %s906 = scalar_lea.vmem %s0, 1544
  %v907 = vld [vmem:[%s906] sm:$0xff]
  %s908 = scalar_lea.vmem %s1, 1284
  %s909 = scalar_lea.vmem %s908, 4294967292
  %v910 = vpack.c.bf16 %v907, %v23
  %911 = vst [vmem:[%s909] sm:$0xff] %v910
  %s912 = scalar_lea.vmem %s0, 8
  %v913 = vld [vmem:[%s912] sm:$0xff]
  %s914 = scalar_lea.vmem %s1, 2052
  %s915 = scalar_lea.vmem %s914, 4294967292
  %v916 = vpack.c.bf16 %v913, %v25
  %917 = vst [vmem:[%s915] sm:$0xff] %v916
  %s918 = scalar_lea.vmem %s0, 4120
  %v919 = vld [vmem:[%s918] sm:$0xff]
  %s920 = scalar_lea.vmem %s1, 12
  %s921 = scalar_lea.vmem %s920, 4294967292
  %v922 = vpack.c.bf16 %v919, %v28
  %923 = vst [vmem:[%s921] sm:$0xff] %v922
  %s924 = scalar_lea.vmem %s0, 2584
  %v925 = vld [vmem:[%s924] sm:$0xff]
  %s926 = scalar_lea.vmem %s1, 780
  %s927 = scalar_lea.vmem %s926, 4294967292
  %v928 = vpack.c.bf16 %v925, %v31
  %929 = vst [vmem:[%s927] sm:$0xff] %v928
  %s930 = scalar_lea.vmem %s0, 1048
  %v931 = vld [vmem:[%s930] sm:$0xff]
  %s932 = scalar_lea.vmem %s1, 1548
  %s933 = scalar_lea.vmem %s932, 4294967292
  %v934 = vpack.c.bf16 %v931, %v34
  %935 = vst [vmem:[%s933] sm:$0xff] %v934
  %s936 = scalar_lea.vmem %s0, 3608
  %v937 = vld [vmem:[%s936] sm:$0xff]
  %s938 = scalar_lea.vmem %s1, 268
  %s939 = scalar_lea.vmem %s938, 4294967292
  %v940 = vpack.c.bf16 %v937, %v37
  %941 = vst [vmem:[%s939] sm:$0xff] %v940
  %s942 = scalar_lea.vmem %s0, 2072
  %v943 = vld [vmem:[%s942] sm:$0xff]
  %s944 = scalar_lea.vmem %s1, 1036
  %s945 = scalar_lea.vmem %s944, 4294967292
  %v946 = vpack.c.bf16 %v943, %v40
  %947 = vst [vmem:[%s945] sm:$0xff] %v946
  %s948 = scalar_lea.vmem %s0, 536
  %v949 = vld [vmem:[%s948] sm:$0xff]
  %s950 = scalar_lea.vmem %s1, 1804
  %s951 = scalar_lea.vmem %s950, 4294967292
  %v952 = vpack.c.bf16 %v949, %v43
  %953 = vst [vmem:[%s951] sm:$0xff] %v952
  %s954 = scalar_lea.vmem %s0, 3096
  %v955 = vld [vmem:[%s954] sm:$0xff]
  %s956 = scalar_lea.vmem %s1, 524
  %s957 = scalar_lea.vmem %s956, 4294967292
  %v958 = vpack.c.bf16 %v955, %v46
  %959 = vst [vmem:[%s957] sm:$0xff] %v958
  %s960 = scalar_lea.vmem %s0, 1560
  %v961 = vld [vmem:[%s960] sm:$0xff]
  %s962 = scalar_lea.vmem %s1, 1292
  %s963 = scalar_lea.vmem %s962, 4294967292
  %v964 = vpack.c.bf16 %v961, %v49
  %965 = vst [vmem:[%s963] sm:$0xff] %v964
  %s966 = scalar_lea.vmem %s0, 24
  %v967 = vld [vmem:[%s966] sm:$0xff]
  %s968 = scalar_lea.vmem %s1, 2060
  %s969 = scalar_lea.vmem %s968, 4294967292
  %v970 = vpack.c.bf16 %v967, %v52
  %971 = vst [vmem:[%s969] sm:$0xff] %v970
  %s972 = scalar_lea.vmem %s0, 4136
  %v973 = vld [vmem:[%s972] sm:$0xff]
  %s974 = scalar_lea.vmem %s1, 20
  %s975 = scalar_lea.vmem %s974, 4294967292
  %v976 = vpack.c.bf16 %v973, %v55
  %977 = vst [vmem:[%s975] sm:$0xff] %v976
  %s978 = scalar_lea.vmem %s0, 2600
  %v979 = vld [vmem:[%s978] sm:$0xff]
  %s980 = scalar_lea.vmem %s1, 788
  %s981 = scalar_lea.vmem %s980, 4294967292
  %v982 = vpack.c.bf16 %v979, %v58
  %983 = vst [vmem:[%s981] sm:$0xff] %v982
  %s984 = scalar_lea.vmem %s0, 1064
  %v985 = vld [vmem:[%s984] sm:$0xff]
  %s986 = scalar_lea.vmem %s1, 1556
  %s987 = scalar_lea.vmem %s986, 4294967292
  %v988 = vpack.c.bf16 %v985, %v61
  %989 = vst [vmem:[%s987] sm:$0xff] %v988
  %s990 = scalar_lea.vmem %s0, 3624
  %v991 = vld [vmem:[%s990] sm:$0xff]
  %s992 = scalar_lea.vmem %s1, 276
  %s993 = scalar_lea.vmem %s992, 4294967292
  %v994 = vpack.c.bf16 %v991, %v64
  %995 = vst [vmem:[%s993] sm:$0xff] %v994
  %s996 = scalar_lea.vmem %s0, 2088
  %v997 = vld [vmem:[%s996] sm:$0xff]
  %s998 = scalar_lea.vmem %s1, 1044
  %s999 = scalar_lea.vmem %s998, 4294967292
  %v1000 = vpack.c.bf16 %v997, %v67
  %1001 = vst [vmem:[%s999] sm:$0xff] %v1000
  %s1002 = scalar_lea.vmem %s0, 552
  %v1003 = vld [vmem:[%s1002] sm:$0xff]
  %s1004 = scalar_lea.vmem %s1, 1812
  %s1005 = scalar_lea.vmem %s1004, 4294967292
  %v1006 = vpack.c.bf16 %v1003, %v70
  %1007 = vst [vmem:[%s1005] sm:$0xff] %v1006
  %s1008 = scalar_lea.vmem %s0, 3112
  %v1009 = vld [vmem:[%s1008] sm:$0xff]
  %s1010 = scalar_lea.vmem %s1, 532
  %s1011 = scalar_lea.vmem %s1010, 4294967292
  %v1012 = vpack.c.bf16 %v1009, %v73
  %1013 = vst [vmem:[%s1011] sm:$0xff] %v1012
  %s1014 = scalar_lea.vmem %s0, 1576
  %v1015 = vld [vmem:[%s1014] sm:$0xff]
  %s1016 = scalar_lea.vmem %s1, 1300
  %s1017 = scalar_lea.vmem %s1016, 4294967292
  %v1018 = vpack.c.bf16 %v1015, %v76
  %1019 = vst [vmem:[%s1017] sm:$0xff] %v1018
  %s1020 = scalar_lea.vmem %s0, 40
  %v1021 = vld [vmem:[%s1020] sm:$0xff]
  %s1022 = scalar_lea.vmem %s1, 2068
  %s1023 = scalar_lea.vmem %s1022, 4294967292
  %v1024 = vpack.c.bf16 %v1021, %v79
  %1025 = vst [vmem:[%s1023] sm:$0xff] %v1024
  %s1026 = scalar_lea.vmem %s0, 4152
  %v1027 = vld [vmem:[%s1026] sm:$0xff]
  %s1028 = scalar_lea.vmem %s1, 28
  %s1029 = scalar_lea.vmem %s1028, 4294967292
  %v1030 = vpack.c.bf16 %v1027, %v82
  %1031 = vst [vmem:[%s1029] sm:$0xff] %v1030
  %s1032 = scalar_lea.vmem %s0, 2616
  %v1033 = vld [vmem:[%s1032] sm:$0xff]
  %s1034 = scalar_lea.vmem %s1, 796
  %s1035 = scalar_lea.vmem %s1034, 4294967292
  %v1036 = vpack.c.bf16 %v1033, %v85
  %1037 = vst [vmem:[%s1035] sm:$0xff] %v1036
  %s1038 = scalar_lea.vmem %s0, 1080
  %v1039 = vld [vmem:[%s1038] sm:$0xff]
  %s1040 = scalar_lea.vmem %s1, 1564
  %s1041 = scalar_lea.vmem %s1040, 4294967292
  %v1042 = vpack.c.bf16 %v1039, %v88
  %1043 = vst [vmem:[%s1041] sm:$0xff] %v1042
  %s1044 = scalar_lea.vmem %s0, 3640
  %v1045 = vld [vmem:[%s1044] sm:$0xff]
  %s1046 = scalar_lea.vmem %s1, 284
  %s1047 = scalar_lea.vmem %s1046, 4294967292
  %v1048 = vpack.c.bf16 %v1045, %v91
  %1049 = vst [vmem:[%s1047] sm:$0xff] %v1048
  %s1050 = scalar_lea.vmem %s0, 2104
  %v1051 = vld [vmem:[%s1050] sm:$0xff]
  %s1052 = scalar_lea.vmem %s1, 1052
  %s1053 = scalar_lea.vmem %s1052, 4294967292
  %v1054 = vpack.c.bf16 %v1051, %v94
  %1055 = vst [vmem:[%s1053] sm:$0xff] %v1054
  %s1056 = scalar_lea.vmem %s0, 568
  %v1057 = vld [vmem:[%s1056] sm:$0xff]
  %s1058 = scalar_lea.vmem %s1, 1820
  %s1059 = scalar_lea.vmem %s1058, 4294967292
  %v1060 = vpack.c.bf16 %v1057, %v97
  %1061 = vst [vmem:[%s1059] sm:$0xff] %v1060
  %s1062 = scalar_lea.vmem %s0, 3128
  %v1063 = vld [vmem:[%s1062] sm:$0xff]
  %s1064 = scalar_lea.vmem %s1, 540
  %s1065 = scalar_lea.vmem %s1064, 4294967292
  %v1066 = vpack.c.bf16 %v1063, %v100
  %1067 = vst [vmem:[%s1065] sm:$0xff] %v1066
  %s1068 = scalar_lea.vmem %s0, 1592
  %v1069 = vld [vmem:[%s1068] sm:$0xff]
  %s1070 = scalar_lea.vmem %s1, 1308
  %s1071 = scalar_lea.vmem %s1070, 4294967292
  %v1072 = vpack.c.bf16 %v1069, %v103
  %1073 = vst [vmem:[%s1071] sm:$0xff] %v1072
  %s1074 = scalar_lea.vmem %s0, 56
  %v1075 = vld [vmem:[%s1074] sm:$0xff]
  %s1076 = scalar_lea.vmem %s1, 2076
  %s1077 = scalar_lea.vmem %s1076, 4294967292
  %v1078 = vpack.c.bf16 %v1075, %v106
  %1079 = vst [vmem:[%s1077] sm:$0xff] %v1078
  %s1080 = scalar_lea.vmem %s0, 4168
  %v1081 = vld [vmem:[%s1080] sm:$0xff]
  %s1082 = scalar_lea.vmem %s1, 36
  %s1083 = scalar_lea.vmem %s1082, 4294967292
  %v1084 = vpack.c.bf16 %v1081, %v109
  %1085 = vst [vmem:[%s1083] sm:$0xff] %v1084
  %s1086 = scalar_lea.vmem %s0, 2632
  %v1087 = vld [vmem:[%s1086] sm:$0xff]
  %s1088 = scalar_lea.vmem %s1, 804
  %s1089 = scalar_lea.vmem %s1088, 4294967292
  %v1090 = vpack.c.bf16 %v1087, %v112
  %1091 = vst [vmem:[%s1089] sm:$0xff] %v1090
  %s1092 = scalar_lea.vmem %s0, 1096
  %v1093 = vld [vmem:[%s1092] sm:$0xff]
  %s1094 = scalar_lea.vmem %s1, 1572
  %s1095 = scalar_lea.vmem %s1094, 4294967292
  %v1096 = vpack.c.bf16 %v1093, %v115
  %1097 = vst [vmem:[%s1095] sm:$0xff] %v1096
  %s1098 = scalar_lea.vmem %s0, 3656
  %v1099 = vld [vmem:[%s1098] sm:$0xff]
  %s1100 = scalar_lea.vmem %s1, 292
  %s1101 = scalar_lea.vmem %s1100, 4294967292
  %v1102 = vpack.c.bf16 %v1099, %v118
  %1103 = vst [vmem:[%s1101] sm:$0xff] %v1102
  %s1104 = scalar_lea.vmem %s0, 2120
  %v1105 = vld [vmem:[%s1104] sm:$0xff]
  %s1106 = scalar_lea.vmem %s1, 1060
  %s1107 = scalar_lea.vmem %s1106, 4294967292
  %v1108 = vpack.c.bf16 %v1105, %v121
  %1109 = vst [vmem:[%s1107] sm:$0xff] %v1108
  %s1110 = scalar_lea.vmem %s0, 584
  %v1111 = vld [vmem:[%s1110] sm:$0xff]
  %s1112 = scalar_lea.vmem %s1, 1828
  %s1113 = scalar_lea.vmem %s1112, 4294967292
  %v1114 = vpack.c.bf16 %v1111, %v124
  %1115 = vst [vmem:[%s1113] sm:$0xff] %v1114
  %s1116 = scalar_lea.vmem %s0, 3144
  %v1117 = vld [vmem:[%s1116] sm:$0xff]
  %s1118 = scalar_lea.vmem %s1, 548
  %s1119 = scalar_lea.vmem %s1118, 4294967292
  %v1120 = vpack.c.bf16 %v1117, %v127
  %1121 = vst [vmem:[%s1119] sm:$0xff] %v1120
  %s1122 = scalar_lea.vmem %s0, 1608
  %v1123 = vld [vmem:[%s1122] sm:$0xff]
  %s1124 = scalar_lea.vmem %s1, 1316
  %s1125 = scalar_lea.vmem %s1124, 4294967292
  %v1126 = vpack.c.bf16 %v1123, %v130
  %1127 = vst [vmem:[%s1125] sm:$0xff] %v1126
  %s1128 = scalar_lea.vmem %s0, 72
  %v1129 = vld [vmem:[%s1128] sm:$0xff]
  %s1130 = scalar_lea.vmem %s1, 2084
  %s1131 = scalar_lea.vmem %s1130, 4294967292
  %v1132 = vpack.c.bf16 %v1129, %v133
  %1133 = vst [vmem:[%s1131] sm:$0xff] %v1132
  %s1134 = scalar_lea.vmem %s0, 4184
  %v1135 = vld [vmem:[%s1134] sm:$0xff]
  %s1136 = scalar_lea.vmem %s1, 44
  %s1137 = scalar_lea.vmem %s1136, 4294967292
  %v1138 = vpack.c.bf16 %v1135, %v136
  %1139 = vst [vmem:[%s1137] sm:$0xff] %v1138
  %s1140 = scalar_lea.vmem %s0, 2648
  %v1141 = vld [vmem:[%s1140] sm:$0xff]
  %s1142 = scalar_lea.vmem %s1, 812
  %s1143 = scalar_lea.vmem %s1142, 4294967292
  %v1144 = vpack.c.bf16 %v1141, %v139
  %1145 = vst [vmem:[%s1143] sm:$0xff] %v1144
  %s1146 = scalar_lea.vmem %s0, 1112
  %v1147 = vld [vmem:[%s1146] sm:$0xff]
  %s1148 = scalar_lea.vmem %s1, 1580
  %s1149 = scalar_lea.vmem %s1148, 4294967292
  %v1150 = vpack.c.bf16 %v1147, %v142
  %1151 = vst [vmem:[%s1149] sm:$0xff] %v1150
  %s1152 = scalar_lea.vmem %s0, 3672
  %v1153 = vld [vmem:[%s1152] sm:$0xff]
  %s1154 = scalar_lea.vmem %s1, 300
  %s1155 = scalar_lea.vmem %s1154, 4294967292
  %v1156 = vpack.c.bf16 %v1153, %v145
  %1157 = vst [vmem:[%s1155] sm:$0xff] %v1156
  %s1158 = scalar_lea.vmem %s0, 2136
  %v1159 = vld [vmem:[%s1158] sm:$0xff]
  %s1160 = scalar_lea.vmem %s1, 1068
  %s1161 = scalar_lea.vmem %s1160, 4294967292
  %v1162 = vpack.c.bf16 %v1159, %v148
  %1163 = vst [vmem:[%s1161] sm:$0xff] %v1162
  %s1164 = scalar_lea.vmem %s0, 600
  %v1165 = vld [vmem:[%s1164] sm:$0xff]
  %s1166 = scalar_lea.vmem %s1, 1836
  %s1167 = scalar_lea.vmem %s1166, 4294967292
  %v1168 = vpack.c.bf16 %v1165, %v151
  %1169 = vst [vmem:[%s1167] sm:$0xff] %v1168
  %s1170 = scalar_lea.vmem %s0, 3160
  %v1171 = vld [vmem:[%s1170] sm:$0xff]
  %s1172 = scalar_lea.vmem %s1, 556
  %s1173 = scalar_lea.vmem %s1172, 4294967292
  %v1174 = vpack.c.bf16 %v1171, %v154
  %1175 = vst [vmem:[%s1173] sm:$0xff] %v1174
  %s1176 = scalar_lea.vmem %s0, 1624
  %v1177 = vld [vmem:[%s1176] sm:$0xff]
  %s1178 = scalar_lea.vmem %s1, 1324
  %s1179 = scalar_lea.vmem %s1178, 4294967292
  %v1180 = vpack.c.bf16 %v1177, %v157
  %1181 = vst [vmem:[%s1179] sm:$0xff] %v1180
  %s1182 = scalar_lea.vmem %s0, 88
  %v1183 = vld [vmem:[%s1182] sm:$0xff]
  %s1184 = scalar_lea.vmem %s1, 2092
  %s1185 = scalar_lea.vmem %s1184, 4294967292
  %v1186 = vpack.c.bf16 %v1183, %v160
  %1187 = vst [vmem:[%s1185] sm:$0xff] %v1186
  %s1188 = scalar_lea.vmem %s0, 4200
  %v1189 = vld [vmem:[%s1188] sm:$0xff]
  %s1190 = scalar_lea.vmem %s1, 52
  %s1191 = scalar_lea.vmem %s1190, 4294967292
  %v1192 = vpack.c.bf16 %v1189, %v163
  %1193 = vst [vmem:[%s1191] sm:$0xff] %v1192
  %s1194 = scalar_lea.vmem %s0, 2664
  %v1195 = vld [vmem:[%s1194] sm:$0xff]
  %s1196 = scalar_lea.vmem %s1, 820
  %s1197 = scalar_lea.vmem %s1196, 4294967292
  %v1198 = vpack.c.bf16 %v1195, %v166
  %1199 = vst [vmem:[%s1197] sm:$0xff] %v1198
  %s1200 = scalar_lea.vmem %s0, 1128
  %v1201 = vld [vmem:[%s1200] sm:$0xff]
  %s1202 = scalar_lea.vmem %s1, 1588
  %s1203 = scalar_lea.vmem %s1202, 4294967292
  %v1204 = vpack.c.bf16 %v1201, %v169
  %1205 = vst [vmem:[%s1203] sm:$0xff] %v1204
  %s1206 = scalar_lea.vmem %s0, 3688
  %v1207 = vld [vmem:[%s1206] sm:$0xff]
  %s1208 = scalar_lea.vmem %s1, 308
  %s1209 = scalar_lea.vmem %s1208, 4294967292
  %v1210 = vpack.c.bf16 %v1207, %v172
  %1211 = vst [vmem:[%s1209] sm:$0xff] %v1210
  %s1212 = scalar_lea.vmem %s0, 2152
  %v1213 = vld [vmem:[%s1212] sm:$0xff]
  %s1214 = scalar_lea.vmem %s1, 1076
  %s1215 = scalar_lea.vmem %s1214, 4294967292
  %v1216 = vpack.c.bf16 %v1213, %v175
  %1217 = vst [vmem:[%s1215] sm:$0xff] %v1216
  %s1218 = scalar_lea.vmem %s0, 616
  %v1219 = vld [vmem:[%s1218] sm:$0xff]
  %s1220 = scalar_lea.vmem %s1, 1844
  %s1221 = scalar_lea.vmem %s1220, 4294967292
  %v1222 = vpack.c.bf16 %v1219, %v178
  %1223 = vst [vmem:[%s1221] sm:$0xff] %v1222
  %s1224 = scalar_lea.vmem %s0, 3176
  %v1225 = vld [vmem:[%s1224] sm:$0xff]
  %s1226 = scalar_lea.vmem %s1, 564
  %s1227 = scalar_lea.vmem %s1226, 4294967292
  %v1228 = vpack.c.bf16 %v1225, %v181
  %1229 = vst [vmem:[%s1227] sm:$0xff] %v1228
  %s1230 = scalar_lea.vmem %s0, 1640
  %v1231 = vld [vmem:[%s1230] sm:$0xff]
  %s1232 = scalar_lea.vmem %s1, 1332
  %s1233 = scalar_lea.vmem %s1232, 4294967292
  %v1234 = vpack.c.bf16 %v1231, %v184
  %1235 = vst [vmem:[%s1233] sm:$0xff] %v1234
  %s1236 = scalar_lea.vmem %s0, 104
  %v1237 = vld [vmem:[%s1236] sm:$0xff]
  %s1238 = scalar_lea.vmem %s1, 2100
  %s1239 = scalar_lea.vmem %s1238, 4294967292
  %v1240 = vpack.c.bf16 %v1237, %v187
  %1241 = vst [vmem:[%s1239] sm:$0xff] %v1240
  %s1242 = scalar_lea.vmem %s0, 4216
  %v1243 = vld [vmem:[%s1242] sm:$0xff]
  %s1244 = scalar_lea.vmem %s1, 60
  %s1245 = scalar_lea.vmem %s1244, 4294967292
  %v1246 = vpack.c.bf16 %v1243, %v190
  %1247 = vst [vmem:[%s1245] sm:$0xff] %v1246
  %s1248 = scalar_lea.vmem %s0, 2680
  %v1249 = vld [vmem:[%s1248] sm:$0xff]
  %s1250 = scalar_lea.vmem %s1, 828
  %s1251 = scalar_lea.vmem %s1250, 4294967292
  %v1252 = vpack.c.bf16 %v1249, %v193
  %1253 = vst [vmem:[%s1251] sm:$0xff] %v1252
  %s1254 = scalar_lea.vmem %s0, 1144
  %v1255 = vld [vmem:[%s1254] sm:$0xff]
  %s1256 = scalar_lea.vmem %s1, 1596
  %s1257 = scalar_lea.vmem %s1256, 4294967292
  %v1258 = vpack.c.bf16 %v1255, %v196
  %1259 = vst [vmem:[%s1257] sm:$0xff] %v1258
  %s1260 = scalar_lea.vmem %s0, 3704
  %v1261 = vld [vmem:[%s1260] sm:$0xff]
  %s1262 = scalar_lea.vmem %s1, 316
  %s1263 = scalar_lea.vmem %s1262, 4294967292
  %v1264 = vpack.c.bf16 %v1261, %v199
  %1265 = vst [vmem:[%s1263] sm:$0xff] %v1264
  %s1266 = scalar_lea.vmem %s0, 2168
  %v1267 = vld [vmem:[%s1266] sm:$0xff]
  %s1268 = scalar_lea.vmem %s1, 1084
  %s1269 = scalar_lea.vmem %s1268, 4294967292
  %v1270 = vpack.c.bf16 %v1267, %v202
  %1271 = vst [vmem:[%s1269] sm:$0xff] %v1270
  %s1272 = scalar_lea.vmem %s0, 632
  %v1273 = vld [vmem:[%s1272] sm:$0xff]
  %s1274 = scalar_lea.vmem %s1, 1852
  %s1275 = scalar_lea.vmem %s1274, 4294967292
  %v1276 = vpack.c.bf16 %v1273, %v205
  %1277 = vst [vmem:[%s1275] sm:$0xff] %v1276
  %s1278 = scalar_lea.vmem %s0, 3192
  %v1279 = vld [vmem:[%s1278] sm:$0xff]
  %s1280 = scalar_lea.vmem %s1, 572
  %s1281 = scalar_lea.vmem %s1280, 4294967292
  %v1282 = vpack.c.bf16 %v1279, %v208
  %1283 = vst [vmem:[%s1281] sm:$0xff] %v1282
  %s1284 = scalar_lea.vmem %s0, 1656
  %v1285 = vld [vmem:[%s1284] sm:$0xff]
  %s1286 = scalar_lea.vmem %s1, 1340
  %s1287 = scalar_lea.vmem %s1286, 4294967292
  %v1288 = vpack.c.bf16 %v1285, %v211
  %1289 = vst [vmem:[%s1287] sm:$0xff] %v1288
  %s1290 = scalar_lea.vmem %s0, 120
  %v1291 = vld [vmem:[%s1290] sm:$0xff]
  %s1292 = scalar_lea.vmem %s1, 2108
  %s1293 = scalar_lea.vmem %s1292, 4294967292
  %v1294 = vpack.c.bf16 %v1291, %v214
  %1295 = vst [vmem:[%s1293] sm:$0xff] %v1294
  %s1296 = scalar_lea.vmem %s0, 4232
  %v1297 = vld [vmem:[%s1296] sm:$0xff]
  %s1298 = scalar_lea.vmem %s1, 68
  %s1299 = scalar_lea.vmem %s1298, 4294967292
  %v1300 = vpack.c.bf16 %v1297, %v217
  %1301 = vst [vmem:[%s1299] sm:$0xff] %v1300
  %s1302 = scalar_lea.vmem %s0, 2696
  %v1303 = vld [vmem:[%s1302] sm:$0xff]
  %s1304 = scalar_lea.vmem %s1, 836
  %s1305 = scalar_lea.vmem %s1304, 4294967292
  %v1306 = vpack.c.bf16 %v1303, %v220
  %1307 = vst [vmem:[%s1305] sm:$0xff] %v1306
  %s1308 = scalar_lea.vmem %s0, 1160
  %v1309 = vld [vmem:[%s1308] sm:$0xff]
  %s1310 = scalar_lea.vmem %s1, 1604
  %s1311 = scalar_lea.vmem %s1310, 4294967292
  %v1312 = vpack.c.bf16 %v1309, %v223
  %1313 = vst [vmem:[%s1311] sm:$0xff] %v1312
  %s1314 = scalar_lea.vmem %s0, 3720
  %v1315 = vld [vmem:[%s1314] sm:$0xff]
  %s1316 = scalar_lea.vmem %s1, 324
  %s1317 = scalar_lea.vmem %s1316, 4294967292
  %v1318 = vpack.c.bf16 %v1315, %v226
  %1319 = vst [vmem:[%s1317] sm:$0xff] %v1318
  %s1320 = scalar_lea.vmem %s0, 2184
  %v1321 = vld [vmem:[%s1320] sm:$0xff]
  %s1322 = scalar_lea.vmem %s1, 1092
  %s1323 = scalar_lea.vmem %s1322, 4294967292
  %v1324 = vpack.c.bf16 %v1321, %v229
  %1325 = vst [vmem:[%s1323] sm:$0xff] %v1324
  %s1326 = scalar_lea.vmem %s0, 648
  %v1327 = vld [vmem:[%s1326] sm:$0xff]
  %s1328 = scalar_lea.vmem %s1, 1860
  %s1329 = scalar_lea.vmem %s1328, 4294967292
  %v1330 = vpack.c.bf16 %v1327, %v232
  %1331 = vst [vmem:[%s1329] sm:$0xff] %v1330
  %s1332 = scalar_lea.vmem %s0, 3208
  %v1333 = vld [vmem:[%s1332] sm:$0xff]
  %s1334 = scalar_lea.vmem %s1, 580
  %s1335 = scalar_lea.vmem %s1334, 4294967292
  %v1336 = vpack.c.bf16 %v1333, %v235
  %1337 = vst [vmem:[%s1335] sm:$0xff] %v1336
  %s1338 = scalar_lea.vmem %s0, 1672
  %v1339 = vld [vmem:[%s1338] sm:$0xff]
  %s1340 = scalar_lea.vmem %s1, 1348
  %s1341 = scalar_lea.vmem %s1340, 4294967292
  %v1342 = vpack.c.bf16 %v1339, %v238
  %1343 = vst [vmem:[%s1341] sm:$0xff] %v1342
  %s1344 = scalar_lea.vmem %s0, 136
  %v1345 = vld [vmem:[%s1344] sm:$0xff]
  %s1346 = scalar_lea.vmem %s1, 2116
  %s1347 = scalar_lea.vmem %s1346, 4294967292
  %v1348 = vpack.c.bf16 %v1345, %v241
  %1349 = vst [vmem:[%s1347] sm:$0xff] %v1348
  %s1350 = scalar_lea.vmem %s0, 4248
  %v1351 = vld [vmem:[%s1350] sm:$0xff]
  %s1352 = scalar_lea.vmem %s1, 76
  %s1353 = scalar_lea.vmem %s1352, 4294967292
  %v1354 = vpack.c.bf16 %v1351, %v244
  %1355 = vst [vmem:[%s1353] sm:$0xff] %v1354
  %s1356 = scalar_lea.vmem %s0, 2712
  %v1357 = vld [vmem:[%s1356] sm:$0xff]
  %s1358 = scalar_lea.vmem %s1, 844
  %s1359 = scalar_lea.vmem %s1358, 4294967292
  %v1360 = vpack.c.bf16 %v1357, %v247
  %1361 = vst [vmem:[%s1359] sm:$0xff] %v1360
  %s1362 = scalar_lea.vmem %s0, 1176
  %v1363 = vld [vmem:[%s1362] sm:$0xff]
  %s1364 = scalar_lea.vmem %s1, 1612
  %s1365 = scalar_lea.vmem %s1364, 4294967292
  %v1366 = vpack.c.bf16 %v1363, %v250
  %1367 = vst [vmem:[%s1365] sm:$0xff] %v1366
  %s1368 = scalar_lea.vmem %s0, 3736
  %v1369 = vld [vmem:[%s1368] sm:$0xff]
  %s1370 = scalar_lea.vmem %s1, 332
  %s1371 = scalar_lea.vmem %s1370, 4294967292
  %v1372 = vpack.c.bf16 %v1369, %v253
  %1373 = vst [vmem:[%s1371] sm:$0xff] %v1372
  %s1374 = scalar_lea.vmem %s0, 2200
  %v1375 = vld [vmem:[%s1374] sm:$0xff]
  %s1376 = scalar_lea.vmem %s1, 1100
  %s1377 = scalar_lea.vmem %s1376, 4294967292
  %v1378 = vpack.c.bf16 %v1375, %v256
  %1379 = vst [vmem:[%s1377] sm:$0xff] %v1378
  %s1380 = scalar_lea.vmem %s0, 664
  %v1381 = vld [vmem:[%s1380] sm:$0xff]
  %s1382 = scalar_lea.vmem %s1, 1868
  %s1383 = scalar_lea.vmem %s1382, 4294967292
  %v1384 = vpack.c.bf16 %v1381, %v259
  %1385 = vst [vmem:[%s1383] sm:$0xff] %v1384
  %s1386 = scalar_lea.vmem %s0, 3224
  %v1387 = vld [vmem:[%s1386] sm:$0xff]
  %s1388 = scalar_lea.vmem %s1, 588
  %s1389 = scalar_lea.vmem %s1388, 4294967292
  %v1390 = vpack.c.bf16 %v1387, %v262
  %1391 = vst [vmem:[%s1389] sm:$0xff] %v1390
  %s1392 = scalar_lea.vmem %s0, 1688
  %v1393 = vld [vmem:[%s1392] sm:$0xff]
  %s1394 = scalar_lea.vmem %s1, 1356
  %s1395 = scalar_lea.vmem %s1394, 4294967292
  %v1396 = vpack.c.bf16 %v1393, %v265
  %1397 = vst [vmem:[%s1395] sm:$0xff] %v1396
  %s1398 = scalar_lea.vmem %s0, 152
  %v1399 = vld [vmem:[%s1398] sm:$0xff]
  %s1400 = scalar_lea.vmem %s1, 2124
  %s1401 = scalar_lea.vmem %s1400, 4294967292
  %v1402 = vpack.c.bf16 %v1399, %v268
  %1403 = vst [vmem:[%s1401] sm:$0xff] %v1402
  %s1404 = scalar_lea.vmem %s0, 4264
  %v1405 = vld [vmem:[%s1404] sm:$0xff]
  %s1406 = scalar_lea.vmem %s1, 84
  %s1407 = scalar_lea.vmem %s1406, 4294967292
  %v1408 = vpack.c.bf16 %v1405, %v271
  %1409 = vst [vmem:[%s1407] sm:$0xff] %v1408
  %s1410 = scalar_lea.vmem %s0, 2728
  %v1411 = vld [vmem:[%s1410] sm:$0xff]
  %s1412 = scalar_lea.vmem %s1, 852
  %s1413 = scalar_lea.vmem %s1412, 4294967292
  %v1414 = vpack.c.bf16 %v1411, %v274
  %1415 = vst [vmem:[%s1413] sm:$0xff] %v1414
  %s1416 = scalar_lea.vmem %s0, 1192
  %v1417 = vld [vmem:[%s1416] sm:$0xff]
  %s1418 = scalar_lea.vmem %s1, 1620
  %s1419 = scalar_lea.vmem %s1418, 4294967292
  %v1420 = vpack.c.bf16 %v1417, %v277
  %1421 = vst [vmem:[%s1419] sm:$0xff] %v1420
  %s1422 = scalar_lea.vmem %s0, 3752
  %v1423 = vld [vmem:[%s1422] sm:$0xff]
  %s1424 = scalar_lea.vmem %s1, 340
  %s1425 = scalar_lea.vmem %s1424, 4294967292
  %v1426 = vpack.c.bf16 %v1423, %v280
  %1427 = vst [vmem:[%s1425] sm:$0xff] %v1426
  %s1428 = scalar_lea.vmem %s0, 2216
  %v1429 = vld [vmem:[%s1428] sm:$0xff]
  %s1430 = scalar_lea.vmem %s1, 1108
  %s1431 = scalar_lea.vmem %s1430, 4294967292
  %v1432 = vpack.c.bf16 %v1429, %v283
  %1433 = vst [vmem:[%s1431] sm:$0xff] %v1432
  %s1434 = scalar_lea.vmem %s0, 680
  %v1435 = vld [vmem:[%s1434] sm:$0xff]
  %s1436 = scalar_lea.vmem %s1, 1876
  %s1437 = scalar_lea.vmem %s1436, 4294967292
  %v1438 = vpack.c.bf16 %v1435, %v286
  %1439 = vst [vmem:[%s1437] sm:$0xff] %v1438
  %s1440 = scalar_lea.vmem %s0, 3240
  %v1441 = vld [vmem:[%s1440] sm:$0xff]
  %s1442 = scalar_lea.vmem %s1, 596
  %s1443 = scalar_lea.vmem %s1442, 4294967292
  %v1444 = vpack.c.bf16 %v1441, %v289
  %1445 = vst [vmem:[%s1443] sm:$0xff] %v1444
  %s1446 = scalar_lea.vmem %s0, 1704
  %v1447 = vld [vmem:[%s1446] sm:$0xff]
  %s1448 = scalar_lea.vmem %s1, 1364
  %s1449 = scalar_lea.vmem %s1448, 4294967292
  %v1450 = vpack.c.bf16 %v1447, %v292
  %1451 = vst [vmem:[%s1449] sm:$0xff] %v1450
  %s1452 = scalar_lea.vmem %s0, 168
  %v1453 = vld [vmem:[%s1452] sm:$0xff]
  %s1454 = scalar_lea.vmem %s1, 2132
  %s1455 = scalar_lea.vmem %s1454, 4294967292
  %v1456 = vpack.c.bf16 %v1453, %v295
  %1457 = vst [vmem:[%s1455] sm:$0xff] %v1456
  %s1458 = scalar_lea.vmem %s0, 4280
  %v1459 = vld [vmem:[%s1458] sm:$0xff]
  %s1460 = scalar_lea.vmem %s1, 92
  %s1461 = scalar_lea.vmem %s1460, 4294967292
  %v1462 = vpack.c.bf16 %v1459, %v298
  %1463 = vst [vmem:[%s1461] sm:$0xff] %v1462
  %s1464 = scalar_lea.vmem %s0, 2744
  %v1465 = vld [vmem:[%s1464] sm:$0xff]
  %s1466 = scalar_lea.vmem %s1, 860
  %s1467 = scalar_lea.vmem %s1466, 4294967292
  %v1468 = vpack.c.bf16 %v1465, %v301
  %1469 = vst [vmem:[%s1467] sm:$0xff] %v1468
  %s1470 = scalar_lea.vmem %s0, 1208
  %v1471 = vld [vmem:[%s1470] sm:$0xff]
  %s1472 = scalar_lea.vmem %s1, 1628
  %s1473 = scalar_lea.vmem %s1472, 4294967292
  %v1474 = vpack.c.bf16 %v1471, %v304
  %1475 = vst [vmem:[%s1473] sm:$0xff] %v1474
  %s1476 = scalar_lea.vmem %s0, 3768
  %v1477 = vld [vmem:[%s1476] sm:$0xff]
  %s1478 = scalar_lea.vmem %s1, 348
  %s1479 = scalar_lea.vmem %s1478, 4294967292
  %v1480 = vpack.c.bf16 %v1477, %v307
  %1481 = vst [vmem:[%s1479] sm:$0xff] %v1480
  %s1482 = scalar_lea.vmem %s0, 2232
  %v1483 = vld [vmem:[%s1482] sm:$0xff]
  %s1484 = scalar_lea.vmem %s1, 1116
  %s1485 = scalar_lea.vmem %s1484, 4294967292
  %v1486 = vpack.c.bf16 %v1483, %v310
  %1487 = vst [vmem:[%s1485] sm:$0xff] %v1486
  %s1488 = scalar_lea.vmem %s0, 696
  %v1489 = vld [vmem:[%s1488] sm:$0xff]
  %s1490 = scalar_lea.vmem %s1, 1884
  %s1491 = scalar_lea.vmem %s1490, 4294967292
  %v1492 = vpack.c.bf16 %v1489, %v313
  %1493 = vst [vmem:[%s1491] sm:$0xff] %v1492
  %s1494 = scalar_lea.vmem %s0, 3256
  %v1495 = vld [vmem:[%s1494] sm:$0xff]
  %s1496 = scalar_lea.vmem %s1, 604
  %s1497 = scalar_lea.vmem %s1496, 4294967292
  %v1498 = vpack.c.bf16 %v1495, %v316
  %1499 = vst [vmem:[%s1497] sm:$0xff] %v1498
  %s1500 = scalar_lea.vmem %s0, 1720
  %v1501 = vld [vmem:[%s1500] sm:$0xff]
  %s1502 = scalar_lea.vmem %s1, 1372
  %s1503 = scalar_lea.vmem %s1502, 4294967292
  %v1504 = vpack.c.bf16 %v1501, %v319
  %1505 = vst [vmem:[%s1503] sm:$0xff] %v1504
  %s1506 = scalar_lea.vmem %s0, 184
  %v1507 = vld [vmem:[%s1506] sm:$0xff]
  %s1508 = scalar_lea.vmem %s1, 2140
  %s1509 = scalar_lea.vmem %s1508, 4294967292
  %v1510 = vpack.c.bf16 %v1507, %v322
  %1511 = vst [vmem:[%s1509] sm:$0xff] %v1510
  %s1512 = scalar_lea.vmem %s0, 4296
  %v1513 = vld [vmem:[%s1512] sm:$0xff]
  %s1514 = scalar_lea.vmem %s1, 100
  %s1515 = scalar_lea.vmem %s1514, 4294967292
  %v1516 = vpack.c.bf16 %v1513, %v325
  %1517 = vst [vmem:[%s1515] sm:$0xff] %v1516
  %s1518 = scalar_lea.vmem %s0, 2760
  %v1519 = vld [vmem:[%s1518] sm:$0xff]
  %s1520 = scalar_lea.vmem %s1, 868
  %s1521 = scalar_lea.vmem %s1520, 4294967292
  %v1522 = vpack.c.bf16 %v1519, %v328
  %1523 = vst [vmem:[%s1521] sm:$0xff] %v1522
  %s1524 = scalar_lea.vmem %s0, 1224
  %v1525 = vld [vmem:[%s1524] sm:$0xff]
  %s1526 = scalar_lea.vmem %s1, 1636
  %s1527 = scalar_lea.vmem %s1526, 4294967292
  %v1528 = vpack.c.bf16 %v1525, %v331
  %1529 = vst [vmem:[%s1527] sm:$0xff] %v1528
  %s1530 = scalar_lea.vmem %s0, 3784
  %v1531 = vld [vmem:[%s1530] sm:$0xff]
  %s1532 = scalar_lea.vmem %s1, 356
  %s1533 = scalar_lea.vmem %s1532, 4294967292
  %v1534 = vpack.c.bf16 %v1531, %v334
  %1535 = vst [vmem:[%s1533] sm:$0xff] %v1534
  %s1536 = scalar_lea.vmem %s0, 2248
  %v1537 = vld [vmem:[%s1536] sm:$0xff]
  %s1538 = scalar_lea.vmem %s1, 1124
  %s1539 = scalar_lea.vmem %s1538, 4294967292
  %v1540 = vpack.c.bf16 %v1537, %v337
  %1541 = vst [vmem:[%s1539] sm:$0xff] %v1540
  %s1542 = scalar_lea.vmem %s0, 712
  %v1543 = vld [vmem:[%s1542] sm:$0xff]
  %s1544 = scalar_lea.vmem %s1, 1892
  %s1545 = scalar_lea.vmem %s1544, 4294967292
  %v1546 = vpack.c.bf16 %v1543, %v340
  %1547 = vst [vmem:[%s1545] sm:$0xff] %v1546
  %s1548 = scalar_lea.vmem %s0, 3272
  %v1549 = vld [vmem:[%s1548] sm:$0xff]
  %s1550 = scalar_lea.vmem %s1, 612
  %s1551 = scalar_lea.vmem %s1550, 4294967292
  %v1552 = vpack.c.bf16 %v1549, %v343
  %1553 = vst [vmem:[%s1551] sm:$0xff] %v1552
  %s1554 = scalar_lea.vmem %s0, 1736
  %v1555 = vld [vmem:[%s1554] sm:$0xff]
  %s1556 = scalar_lea.vmem %s1, 1380
  %s1557 = scalar_lea.vmem %s1556, 4294967292
  %v1558 = vpack.c.bf16 %v1555, %v346
  %1559 = vst [vmem:[%s1557] sm:$0xff] %v1558
  %s1560 = scalar_lea.vmem %s0, 200
  %v1561 = vld [vmem:[%s1560] sm:$0xff]
  %s1562 = scalar_lea.vmem %s1, 2148
  %s1563 = scalar_lea.vmem %s1562, 4294967292
  %v1564 = vpack.c.bf16 %v1561, %v349
  %1565 = vst [vmem:[%s1563] sm:$0xff] %v1564
  %s1566 = scalar_lea.vmem %s0, 4312
  %v1567 = vld [vmem:[%s1566] sm:$0xff]
  %s1568 = scalar_lea.vmem %s1, 108
  %s1569 = scalar_lea.vmem %s1568, 4294967292
  %v1570 = vpack.c.bf16 %v1567, %v352
  %1571 = vst [vmem:[%s1569] sm:$0xff] %v1570
  %s1572 = scalar_lea.vmem %s0, 2776
  %v1573 = vld [vmem:[%s1572] sm:$0xff]
  %s1574 = scalar_lea.vmem %s1, 876
  %s1575 = scalar_lea.vmem %s1574, 4294967292
  %v1576 = vpack.c.bf16 %v1573, %v355
  %1577 = vst [vmem:[%s1575] sm:$0xff] %v1576
  %s1578 = scalar_lea.vmem %s0, 1240
  %v1579 = vld [vmem:[%s1578] sm:$0xff]
  %s1580 = scalar_lea.vmem %s1, 1644
  %s1581 = scalar_lea.vmem %s1580, 4294967292
  %v1582 = vpack.c.bf16 %v1579, %v358
  %1583 = vst [vmem:[%s1581] sm:$0xff] %v1582
  %s1584 = scalar_lea.vmem %s0, 3800
  %v1585 = vld [vmem:[%s1584] sm:$0xff]
  %s1586 = scalar_lea.vmem %s1, 364
  %s1587 = scalar_lea.vmem %s1586, 4294967292
  %v1588 = vpack.c.bf16 %v1585, %v361
  %1589 = vst [vmem:[%s1587] sm:$0xff] %v1588
  %s1590 = scalar_lea.vmem %s0, 2264
  %v1591 = vld [vmem:[%s1590] sm:$0xff]
  %s1592 = scalar_lea.vmem %s1, 1132
  %s1593 = scalar_lea.vmem %s1592, 4294967292
  %v1594 = vpack.c.bf16 %v1591, %v364
  %1595 = vst [vmem:[%s1593] sm:$0xff] %v1594
  %s1596 = scalar_lea.vmem %s0, 728
  %v1597 = vld [vmem:[%s1596] sm:$0xff]
  %s1598 = scalar_lea.vmem %s1, 1900
  %s1599 = scalar_lea.vmem %s1598, 4294967292
  %v1600 = vpack.c.bf16 %v1597, %v367
  %1601 = vst [vmem:[%s1599] sm:$0xff] %v1600
  %s1602 = scalar_lea.vmem %s0, 3288
  %v1603 = vld [vmem:[%s1602] sm:$0xff]
  %s1604 = scalar_lea.vmem %s1, 620
  %s1605 = scalar_lea.vmem %s1604, 4294967292
  %v1606 = vpack.c.bf16 %v1603, %v370
  %1607 = vst [vmem:[%s1605] sm:$0xff] %v1606
  %s1608 = scalar_lea.vmem %s0, 1752
  %v1609 = vld [vmem:[%s1608] sm:$0xff]
  %s1610 = scalar_lea.vmem %s1, 1388
  %s1611 = scalar_lea.vmem %s1610, 4294967292
  %v1612 = vpack.c.bf16 %v1609, %v373
  %1613 = vst [vmem:[%s1611] sm:$0xff] %v1612
  %s1614 = scalar_lea.vmem %s0, 216
  %v1615 = vld [vmem:[%s1614] sm:$0xff]
  %s1616 = scalar_lea.vmem %s1, 2156
  %s1617 = scalar_lea.vmem %s1616, 4294967292
  %v1618 = vpack.c.bf16 %v1615, %v376
  %1619 = vst [vmem:[%s1617] sm:$0xff] %v1618
  %s1620 = scalar_lea.vmem %s0, 4328
  %v1621 = vld [vmem:[%s1620] sm:$0xff]
  %s1622 = scalar_lea.vmem %s1, 116
  %s1623 = scalar_lea.vmem %s1622, 4294967292
  %v1624 = vpack.c.bf16 %v1621, %v379
  %1625 = vst [vmem:[%s1623] sm:$0xff] %v1624
  %s1626 = scalar_lea.vmem %s0, 2792
  %v1627 = vld [vmem:[%s1626] sm:$0xff]
  %s1628 = scalar_lea.vmem %s1, 884
  %s1629 = scalar_lea.vmem %s1628, 4294967292
  %v1630 = vpack.c.bf16 %v1627, %v382
  %1631 = vst [vmem:[%s1629] sm:$0xff] %v1630
  %s1632 = scalar_lea.vmem %s0, 1256
  %v1633 = vld [vmem:[%s1632] sm:$0xff]
  %s1634 = scalar_lea.vmem %s1, 1652
  %s1635 = scalar_lea.vmem %s1634, 4294967292
  %v1636 = vpack.c.bf16 %v1633, %v385
  %1637 = vst [vmem:[%s1635] sm:$0xff] %v1636
  %s1638 = scalar_lea.vmem %s0, 3816
  %v1639 = vld [vmem:[%s1638] sm:$0xff]
  %s1640 = scalar_lea.vmem %s1, 372
  %s1641 = scalar_lea.vmem %s1640, 4294967292
  %v1642 = vpack.c.bf16 %v1639, %v388
  %1643 = vst [vmem:[%s1641] sm:$0xff] %v1642
  %s1644 = scalar_lea.vmem %s0, 2280
  %v1645 = vld [vmem:[%s1644] sm:$0xff]
  %s1646 = scalar_lea.vmem %s1, 1140
  %s1647 = scalar_lea.vmem %s1646, 4294967292
  %v1648 = vpack.c.bf16 %v1645, %v391
  %1649 = vst [vmem:[%s1647] sm:$0xff] %v1648
  %s1650 = scalar_lea.vmem %s0, 744
  %v1651 = vld [vmem:[%s1650] sm:$0xff]
  %s1652 = scalar_lea.vmem %s1, 1908
  %s1653 = scalar_lea.vmem %s1652, 4294967292
  %v1654 = vpack.c.bf16 %v1651, %v394
  %1655 = vst [vmem:[%s1653] sm:$0xff] %v1654
  %s1656 = scalar_lea.vmem %s0, 3304
  %v1657 = vld [vmem:[%s1656] sm:$0xff]
  %s1658 = scalar_lea.vmem %s1, 628
  %s1659 = scalar_lea.vmem %s1658, 4294967292
  %v1660 = vpack.c.bf16 %v1657, %v397
  %1661 = vst [vmem:[%s1659] sm:$0xff] %v1660
  %s1662 = scalar_lea.vmem %s0, 1768
  %v1663 = vld [vmem:[%s1662] sm:$0xff]
  %s1664 = scalar_lea.vmem %s1, 1396
  %s1665 = scalar_lea.vmem %s1664, 4294967292
  %v1666 = vpack.c.bf16 %v1663, %v400
  %1667 = vst [vmem:[%s1665] sm:$0xff] %v1666
  %s1668 = scalar_lea.vmem %s0, 232
  %v1669 = vld [vmem:[%s1668] sm:$0xff]
  %s1670 = scalar_lea.vmem %s1, 2164
  %s1671 = scalar_lea.vmem %s1670, 4294967292
  %v1672 = vpack.c.bf16 %v1669, %v403
  %1673 = vst [vmem:[%s1671] sm:$0xff] %v1672
  %s1674 = scalar_lea.vmem %s0, 4344
  %v1675 = vld [vmem:[%s1674] sm:$0xff]
  %s1676 = scalar_lea.vmem %s1, 124
  %s1677 = scalar_lea.vmem %s1676, 4294967292
  %v1678 = vpack.c.bf16 %v1675, %v406
  %1679 = vst [vmem:[%s1677] sm:$0xff] %v1678
  %s1680 = scalar_lea.vmem %s0, 2808
  %v1681 = vld [vmem:[%s1680] sm:$0xff]
  %s1682 = scalar_lea.vmem %s1, 892
  %s1683 = scalar_lea.vmem %s1682, 4294967292
  %v1684 = vpack.c.bf16 %v1681, %v409
  %1685 = vst [vmem:[%s1683] sm:$0xff] %v1684
  %s1686 = scalar_lea.vmem %s0, 1272
  %v1687 = vld [vmem:[%s1686] sm:$0xff]
  %s1688 = scalar_lea.vmem %s1, 1660
  %s1689 = scalar_lea.vmem %s1688, 4294967292
  %v1690 = vpack.c.bf16 %v1687, %v412
  %1691 = vst [vmem:[%s1689] sm:$0xff] %v1690
  %s1692 = scalar_lea.vmem %s0, 3832
  %v1693 = vld [vmem:[%s1692] sm:$0xff]
  %s1694 = scalar_lea.vmem %s1, 380
  %s1695 = scalar_lea.vmem %s1694, 4294967292
  %v1696 = vpack.c.bf16 %v1693, %v415
  %1697 = vst [vmem:[%s1695] sm:$0xff] %v1696
  %s1698 = scalar_lea.vmem %s0, 2296
  %v1699 = vld [vmem:[%s1698] sm:$0xff]
  %s1700 = scalar_lea.vmem %s1, 1148
  %s1701 = scalar_lea.vmem %s1700, 4294967292
  %v1702 = vpack.c.bf16 %v1699, %v418
  %1703 = vst [vmem:[%s1701] sm:$0xff] %v1702
  %s1704 = scalar_lea.vmem %s0, 760
  %v1705 = vld [vmem:[%s1704] sm:$0xff]
  %s1706 = scalar_lea.vmem %s1, 1916
  %s1707 = scalar_lea.vmem %s1706, 4294967292
  %v1708 = vpack.c.bf16 %v1705, %v421
  %1709 = vst [vmem:[%s1707] sm:$0xff] %v1708
  %s1710 = scalar_lea.vmem %s0, 3320
  %v1711 = vld [vmem:[%s1710] sm:$0xff]
  %s1712 = scalar_lea.vmem %s1, 636
  %s1713 = scalar_lea.vmem %s1712, 4294967292
  %v1714 = vpack.c.bf16 %v1711, %v424
  %1715 = vst [vmem:[%s1713] sm:$0xff] %v1714
  %s1716 = scalar_lea.vmem %s0, 1784
  %v1717 = vld [vmem:[%s1716] sm:$0xff]
  %s1718 = scalar_lea.vmem %s1, 1404
  %s1719 = scalar_lea.vmem %s1718, 4294967292
  %v1720 = vpack.c.bf16 %v1717, %v427
  %1721 = vst [vmem:[%s1719] sm:$0xff] %v1720
  %s1722 = scalar_lea.vmem %s0, 248
  %v1723 = vld [vmem:[%s1722] sm:$0xff]
  %s1724 = scalar_lea.vmem %s1, 2172
  %s1725 = scalar_lea.vmem %s1724, 4294967292
  %v1726 = vpack.c.bf16 %v1723, %v430
  %1727 = vst [vmem:[%s1725] sm:$0xff] %v1726
  %s1728 = scalar_lea.vmem %s0, 4360
  %v1729 = vld [vmem:[%s1728] sm:$0xff]
  %s1730 = scalar_lea.vmem %s1, 132
  %s1731 = scalar_lea.vmem %s1730, 4294967292
  %v1732 = vpack.c.bf16 %v1729, %v433
  %1733 = vst [vmem:[%s1731] sm:$0xff] %v1732
  %s1734 = scalar_lea.vmem %s0, 2824
  %v1735 = vld [vmem:[%s1734] sm:$0xff]
  %s1736 = scalar_lea.vmem %s1, 900
  %s1737 = scalar_lea.vmem %s1736, 4294967292
  %v1738 = vpack.c.bf16 %v1735, %v436
  %1739 = vst [vmem:[%s1737] sm:$0xff] %v1738
  %s1740 = scalar_lea.vmem %s0, 1288
  %v1741 = vld [vmem:[%s1740] sm:$0xff]
  %s1742 = scalar_lea.vmem %s1, 1668
  %s1743 = scalar_lea.vmem %s1742, 4294967292
  %v1744 = vpack.c.bf16 %v1741, %v439
  %1745 = vst [vmem:[%s1743] sm:$0xff] %v1744
  %s1746 = scalar_lea.vmem %s0, 3848
  %v1747 = vld [vmem:[%s1746] sm:$0xff]
  %s1748 = scalar_lea.vmem %s1, 388
  %s1749 = scalar_lea.vmem %s1748, 4294967292
  %v1750 = vpack.c.bf16 %v1747, %v442
  %1751 = vst [vmem:[%s1749] sm:$0xff] %v1750
  %s1752 = scalar_lea.vmem %s0, 2312
  %v1753 = vld [vmem:[%s1752] sm:$0xff]
  %s1754 = scalar_lea.vmem %s1, 1156
  %s1755 = scalar_lea.vmem %s1754, 4294967292
  %v1756 = vpack.c.bf16 %v1753, %v445
  %1757 = vst [vmem:[%s1755] sm:$0xff] %v1756
  %s1758 = scalar_lea.vmem %s0, 776
  %v1759 = vld [vmem:[%s1758] sm:$0xff]
  %s1760 = scalar_lea.vmem %s1, 1924
  %s1761 = scalar_lea.vmem %s1760, 4294967292
  %v1762 = vpack.c.bf16 %v1759, %v448
  %1763 = vst [vmem:[%s1761] sm:$0xff] %v1762
  %s1764 = scalar_lea.vmem %s0, 3336
  %v1765 = vld [vmem:[%s1764] sm:$0xff]
  %s1766 = scalar_lea.vmem %s1, 644
  %s1767 = scalar_lea.vmem %s1766, 4294967292
  %v1768 = vpack.c.bf16 %v1765, %v451
  %1769 = vst [vmem:[%s1767] sm:$0xff] %v1768
  %s1770 = scalar_lea.vmem %s0, 1800
  %v1771 = vld [vmem:[%s1770] sm:$0xff]
  %s1772 = scalar_lea.vmem %s1, 1412
  %s1773 = scalar_lea.vmem %s1772, 4294967292
  %v1774 = vpack.c.bf16 %v1771, %v454
  %1775 = vst [vmem:[%s1773] sm:$0xff] %v1774
  %s1776 = scalar_lea.vmem %s0, 264
  %v1777 = vld [vmem:[%s1776] sm:$0xff]
  %s1778 = scalar_lea.vmem %s1, 2180
  %s1779 = scalar_lea.vmem %s1778, 4294967292
  %v1780 = vpack.c.bf16 %v1777, %v457
  %1781 = vst [vmem:[%s1779] sm:$0xff] %v1780
  %s1782 = scalar_lea.vmem %s0, 4376
  %v1783 = vld [vmem:[%s1782] sm:$0xff]
  %s1784 = scalar_lea.vmem %s1, 140
  %s1785 = scalar_lea.vmem %s1784, 4294967292
  %v1786 = vpack.c.bf16 %v1783, %v460
  %1787 = vst [vmem:[%s1785] sm:$0xff] %v1786
  %s1788 = scalar_lea.vmem %s0, 2840
  %v1789 = vld [vmem:[%s1788] sm:$0xff]
  %s1790 = scalar_lea.vmem %s1, 908
  %s1791 = scalar_lea.vmem %s1790, 4294967292
  %v1792 = vpack.c.bf16 %v1789, %v463
  %1793 = vst [vmem:[%s1791] sm:$0xff] %v1792
  %s1794 = scalar_lea.vmem %s0, 1304
  %v1795 = vld [vmem:[%s1794] sm:$0xff]
  %s1796 = scalar_lea.vmem %s1, 1676
  %s1797 = scalar_lea.vmem %s1796, 4294967292
  %v1798 = vpack.c.bf16 %v1795, %v466
  %1799 = vst [vmem:[%s1797] sm:$0xff] %v1798
  %s1800 = scalar_lea.vmem %s0, 3864
  %v1801 = vld [vmem:[%s1800] sm:$0xff]
  %s1802 = scalar_lea.vmem %s1, 396
  %s1803 = scalar_lea.vmem %s1802, 4294967292
  %v1804 = vpack.c.bf16 %v1801, %v469
  %1805 = vst [vmem:[%s1803] sm:$0xff] %v1804
  %s1806 = scalar_lea.vmem %s0, 2328
  %v1807 = vld [vmem:[%s1806] sm:$0xff]
  %s1808 = scalar_lea.vmem %s1, 1164
  %s1809 = scalar_lea.vmem %s1808, 4294967292
  %v1810 = vpack.c.bf16 %v1807, %v472
  %1811 = vst [vmem:[%s1809] sm:$0xff] %v1810
  %s1812 = scalar_lea.vmem %s0, 792
  %v1813 = vld [vmem:[%s1812] sm:$0xff]
  %s1814 = scalar_lea.vmem %s1, 1932
  %s1815 = scalar_lea.vmem %s1814, 4294967292
  %v1816 = vpack.c.bf16 %v1813, %v475
  %1817 = vst [vmem:[%s1815] sm:$0xff] %v1816
  %s1818 = scalar_lea.vmem %s0, 3352
  %v1819 = vld [vmem:[%s1818] sm:$0xff]
  %s1820 = scalar_lea.vmem %s1, 652
  %s1821 = scalar_lea.vmem %s1820, 4294967292
  %v1822 = vpack.c.bf16 %v1819, %v478
  %1823 = vst [vmem:[%s1821] sm:$0xff] %v1822
  %s1824 = scalar_lea.vmem %s0, 1816
  %v1825 = vld [vmem:[%s1824] sm:$0xff]
  %s1826 = scalar_lea.vmem %s1, 1420
  %s1827 = scalar_lea.vmem %s1826, 4294967292
  %v1828 = vpack.c.bf16 %v1825, %v481
  %1829 = vst [vmem:[%s1827] sm:$0xff] %v1828
  %s1830 = scalar_lea.vmem %s0, 280
  %v1831 = vld [vmem:[%s1830] sm:$0xff]
  %s1832 = scalar_lea.vmem %s1, 2188
  %s1833 = scalar_lea.vmem %s1832, 4294967292
  %v1834 = vpack.c.bf16 %v1831, %v484
  %1835 = vst [vmem:[%s1833] sm:$0xff] %v1834
  %s1836 = scalar_lea.vmem %s0, 4392
  %v1837 = vld [vmem:[%s1836] sm:$0xff]
  %s1838 = scalar_lea.vmem %s1, 148
  %s1839 = scalar_lea.vmem %s1838, 4294967292
  %v1840 = vpack.c.bf16 %v1837, %v487
  %1841 = vst [vmem:[%s1839] sm:$0xff] %v1840
  %s1842 = scalar_lea.vmem %s0, 2856
  %v1843 = vld [vmem:[%s1842] sm:$0xff]
  %s1844 = scalar_lea.vmem %s1, 916
  %s1845 = scalar_lea.vmem %s1844, 4294967292
  %v1846 = vpack.c.bf16 %v1843, %v490
  %1847 = vst [vmem:[%s1845] sm:$0xff] %v1846
  %s1848 = scalar_lea.vmem %s0, 1320
  %v1849 = vld [vmem:[%s1848] sm:$0xff]
  %s1850 = scalar_lea.vmem %s1, 1684
  %s1851 = scalar_lea.vmem %s1850, 4294967292
  %v1852 = vpack.c.bf16 %v1849, %v493
  %1853 = vst [vmem:[%s1851] sm:$0xff] %v1852
  %s1854 = scalar_lea.vmem %s0, 3880
  %v1855 = vld [vmem:[%s1854] sm:$0xff]
  %s1856 = scalar_lea.vmem %s1, 404
  %s1857 = scalar_lea.vmem %s1856, 4294967292
  %v1858 = vpack.c.bf16 %v1855, %v496
  %1859 = vst [vmem:[%s1857] sm:$0xff] %v1858
  %s1860 = scalar_lea.vmem %s0, 2344
  %v1861 = vld [vmem:[%s1860] sm:$0xff]
  %s1862 = scalar_lea.vmem %s1, 1172
  %s1863 = scalar_lea.vmem %s1862, 4294967292
  %v1864 = vpack.c.bf16 %v1861, %v499
  %1865 = vst [vmem:[%s1863] sm:$0xff] %v1864
  %s1866 = scalar_lea.vmem %s0, 808
  %v1867 = vld [vmem:[%s1866] sm:$0xff]
  %s1868 = scalar_lea.vmem %s1, 1940
  %s1869 = scalar_lea.vmem %s1868, 4294967292
  %v1870 = vpack.c.bf16 %v1867, %v502
  %1871 = vst [vmem:[%s1869] sm:$0xff] %v1870
  %s1872 = scalar_lea.vmem %s0, 3368
  %v1873 = vld [vmem:[%s1872] sm:$0xff]
  %s1874 = scalar_lea.vmem %s1, 660
  %s1875 = scalar_lea.vmem %s1874, 4294967292
  %v1876 = vpack.c.bf16 %v1873, %v505
  %1877 = vst [vmem:[%s1875] sm:$0xff] %v1876
  %s1878 = scalar_lea.vmem %s0, 1832
  %v1879 = vld [vmem:[%s1878] sm:$0xff]
  %s1880 = scalar_lea.vmem %s1, 1428
  %s1881 = scalar_lea.vmem %s1880, 4294967292
  %v1882 = vpack.c.bf16 %v1879, %v508
  %1883 = vst [vmem:[%s1881] sm:$0xff] %v1882
  %s1884 = scalar_lea.vmem %s0, 296
  %v1885 = vld [vmem:[%s1884] sm:$0xff]
  %s1886 = scalar_lea.vmem %s1, 2196
  %s1887 = scalar_lea.vmem %s1886, 4294967292
  %v1888 = vpack.c.bf16 %v1885, %v511
  %1889 = vst [vmem:[%s1887] sm:$0xff] %v1888
  %s1890 = scalar_lea.vmem %s0, 4408
  %v1891 = vld [vmem:[%s1890] sm:$0xff]
  %s1892 = scalar_lea.vmem %s1, 156
  %s1893 = scalar_lea.vmem %s1892, 4294967292
  %v1894 = vpack.c.bf16 %v1891, %v514
  %1895 = vst [vmem:[%s1893] sm:$0xff] %v1894
  %s1896 = scalar_lea.vmem %s0, 2872
  %v1897 = vld [vmem:[%s1896] sm:$0xff]
  %s1898 = scalar_lea.vmem %s1, 924
  %s1899 = scalar_lea.vmem %s1898, 4294967292
  %v1900 = vpack.c.bf16 %v1897, %v517
  %1901 = vst [vmem:[%s1899] sm:$0xff] %v1900
  %s1902 = scalar_lea.vmem %s0, 1336
  %v1903 = vld [vmem:[%s1902] sm:$0xff]
  %s1904 = scalar_lea.vmem %s1, 1692
  %s1905 = scalar_lea.vmem %s1904, 4294967292
  %v1906 = vpack.c.bf16 %v1903, %v520
  %1907 = vst [vmem:[%s1905] sm:$0xff] %v1906
  %s1908 = scalar_lea.vmem %s0, 3896
  %v1909 = vld [vmem:[%s1908] sm:$0xff]
  %s1910 = scalar_lea.vmem %s1, 412
  %s1911 = scalar_lea.vmem %s1910, 4294967292
  %v1912 = vpack.c.bf16 %v1909, %v523
  %1913 = vst [vmem:[%s1911] sm:$0xff] %v1912
  %s1914 = scalar_lea.vmem %s0, 2360
  %v1915 = vld [vmem:[%s1914] sm:$0xff]
  %s1916 = scalar_lea.vmem %s1, 1180
  %s1917 = scalar_lea.vmem %s1916, 4294967292
  %v1918 = vpack.c.bf16 %v1915, %v526
  %1919 = vst [vmem:[%s1917] sm:$0xff] %v1918
  %s1920 = scalar_lea.vmem %s0, 824
  %v1921 = vld [vmem:[%s1920] sm:$0xff]
  %s1922 = scalar_lea.vmem %s1, 1948
  %s1923 = scalar_lea.vmem %s1922, 4294967292
  %v1924 = vpack.c.bf16 %v1921, %v529
  %1925 = vst [vmem:[%s1923] sm:$0xff] %v1924
  %s1926 = scalar_lea.vmem %s0, 3384
  %v1927 = vld [vmem:[%s1926] sm:$0xff]
  %s1928 = scalar_lea.vmem %s1, 668
  %s1929 = scalar_lea.vmem %s1928, 4294967292
  %v1930 = vpack.c.bf16 %v1927, %v532
  %1931 = vst [vmem:[%s1929] sm:$0xff] %v1930
  %s1932 = scalar_lea.vmem %s0, 1848
  %v1933 = vld [vmem:[%s1932] sm:$0xff]
  %s1934 = scalar_lea.vmem %s1, 1436
  %s1935 = scalar_lea.vmem %s1934, 4294967292
  %v1936 = vpack.c.bf16 %v1933, %v535
  %1937 = vst [vmem:[%s1935] sm:$0xff] %v1936
  %s1938 = scalar_lea.vmem %s0, 312
  %v1939 = vld [vmem:[%s1938] sm:$0xff]
  %s1940 = scalar_lea.vmem %s1, 2204
  %s1941 = scalar_lea.vmem %s1940, 4294967292
  %v1942 = vpack.c.bf16 %v1939, %v538
  %1943 = vst [vmem:[%s1941] sm:$0xff] %v1942
  %s1944 = scalar_lea.vmem %s0, 4424
  %v1945 = vld [vmem:[%s1944] sm:$0xff]
  %s1946 = scalar_lea.vmem %s1, 164
  %s1947 = scalar_lea.vmem %s1946, 4294967292
  %v1948 = vpack.c.bf16 %v1945, %v541
  %1949 = vst [vmem:[%s1947] sm:$0xff] %v1948
  %s1950 = scalar_lea.vmem %s0, 2888
  %v1951 = vld [vmem:[%s1950] sm:$0xff]
  %s1952 = scalar_lea.vmem %s1, 932
  %s1953 = scalar_lea.vmem %s1952, 4294967292
  %v1954 = vpack.c.bf16 %v1951, %v544
  %1955 = vst [vmem:[%s1953] sm:$0xff] %v1954
  %s1956 = scalar_lea.vmem %s0, 1352
  %v1957 = vld [vmem:[%s1956] sm:$0xff]
  %s1958 = scalar_lea.vmem %s1, 1700
  %s1959 = scalar_lea.vmem %s1958, 4294967292
  %v1960 = vpack.c.bf16 %v1957, %v547
  %1961 = vst [vmem:[%s1959] sm:$0xff] %v1960
  %s1962 = scalar_lea.vmem %s0, 3912
  %v1963 = vld [vmem:[%s1962] sm:$0xff]
  %s1964 = scalar_lea.vmem %s1, 420
  %s1965 = scalar_lea.vmem %s1964, 4294967292
  %v1966 = vpack.c.bf16 %v1963, %v550
  %1967 = vst [vmem:[%s1965] sm:$0xff] %v1966
  %s1968 = scalar_lea.vmem %s0, 2376
  %v1969 = vld [vmem:[%s1968] sm:$0xff]
  %s1970 = scalar_lea.vmem %s1, 1188
  %s1971 = scalar_lea.vmem %s1970, 4294967292
  %v1972 = vpack.c.bf16 %v1969, %v553
  %1973 = vst [vmem:[%s1971] sm:$0xff] %v1972
  %s1974 = scalar_lea.vmem %s0, 840
  %v1975 = vld [vmem:[%s1974] sm:$0xff]
  %s1976 = scalar_lea.vmem %s1, 1956
  %s1977 = scalar_lea.vmem %s1976, 4294967292
  %v1978 = vpack.c.bf16 %v1975, %v556
  %1979 = vst [vmem:[%s1977] sm:$0xff] %v1978
  %s1980 = scalar_lea.vmem %s0, 3400
  %v1981 = vld [vmem:[%s1980] sm:$0xff]
  %s1982 = scalar_lea.vmem %s1, 676
  %s1983 = scalar_lea.vmem %s1982, 4294967292
  %v1984 = vpack.c.bf16 %v1981, %v559
  %1985 = vst [vmem:[%s1983] sm:$0xff] %v1984
  %s1986 = scalar_lea.vmem %s0, 1864
  %v1987 = vld [vmem:[%s1986] sm:$0xff]
  %s1988 = scalar_lea.vmem %s1, 1444
  %s1989 = scalar_lea.vmem %s1988, 4294967292
  %v1990 = vpack.c.bf16 %v1987, %v562
  %1991 = vst [vmem:[%s1989] sm:$0xff] %v1990
  %s1992 = scalar_lea.vmem %s0, 328
  %v1993 = vld [vmem:[%s1992] sm:$0xff]
  %s1994 = scalar_lea.vmem %s1, 2212
  %s1995 = scalar_lea.vmem %s1994, 4294967292
  %v1996 = vpack.c.bf16 %v1993, %v565
  %1997 = vst [vmem:[%s1995] sm:$0xff] %v1996
  %s1998 = scalar_lea.vmem %s0, 4440
  %v1999 = vld [vmem:[%s1998] sm:$0xff]
  %s2000 = scalar_lea.vmem %s1, 172
  %s2001 = scalar_lea.vmem %s2000, 4294967292
  %v2002 = vpack.c.bf16 %v1999, %v568
  %2003 = vst [vmem:[%s2001] sm:$0xff] %v2002
  %s2004 = scalar_lea.vmem %s0, 2904
  %v2005 = vld [vmem:[%s2004] sm:$0xff]
  %s2006 = scalar_lea.vmem %s1, 940
  %s2007 = scalar_lea.vmem %s2006, 4294967292
  %v2008 = vpack.c.bf16 %v2005, %v571
  %2009 = vst [vmem:[%s2007] sm:$0xff] %v2008
  %s2010 = scalar_lea.vmem %s0, 1368
  %v2011 = vld [vmem:[%s2010] sm:$0xff]
  %s2012 = scalar_lea.vmem %s1, 1708
  %s2013 = scalar_lea.vmem %s2012, 4294967292
  %v2014 = vpack.c.bf16 %v2011, %v574
  %2015 = vst [vmem:[%s2013] sm:$0xff] %v2014
  %s2016 = scalar_lea.vmem %s0, 3928
  %v2017 = vld [vmem:[%s2016] sm:$0xff]
  %s2018 = scalar_lea.vmem %s1, 428
  %s2019 = scalar_lea.vmem %s2018, 4294967292
  %v2020 = vpack.c.bf16 %v2017, %v577
  %2021 = vst [vmem:[%s2019] sm:$0xff] %v2020
  %s2022 = scalar_lea.vmem %s0, 2392
  %v2023 = vld [vmem:[%s2022] sm:$0xff]
  %s2024 = scalar_lea.vmem %s1, 1196
  %s2025 = scalar_lea.vmem %s2024, 4294967292
  %v2026 = vpack.c.bf16 %v2023, %v580
  %2027 = vst [vmem:[%s2025] sm:$0xff] %v2026
  %s2028 = scalar_lea.vmem %s0, 856
  %v2029 = vld [vmem:[%s2028] sm:$0xff]
  %s2030 = scalar_lea.vmem %s1, 1964
  %s2031 = scalar_lea.vmem %s2030, 4294967292
  %v2032 = vpack.c.bf16 %v2029, %v583
  %2033 = vst [vmem:[%s2031] sm:$0xff] %v2032
  %s2034 = scalar_lea.vmem %s0, 3416
  %v2035 = vld [vmem:[%s2034] sm:$0xff]
  %s2036 = scalar_lea.vmem %s1, 684
  %s2037 = scalar_lea.vmem %s2036, 4294967292
  %v2038 = vpack.c.bf16 %v2035, %v586
  %2039 = vst [vmem:[%s2037] sm:$0xff] %v2038
  %s2040 = scalar_lea.vmem %s0, 1880
  %v2041 = vld [vmem:[%s2040] sm:$0xff]
  %s2042 = scalar_lea.vmem %s1, 1452
  %s2043 = scalar_lea.vmem %s2042, 4294967292
  %v2044 = vpack.c.bf16 %v2041, %v589
  %2045 = vst [vmem:[%s2043] sm:$0xff] %v2044
  %s2046 = scalar_lea.vmem %s0, 344
  %v2047 = vld [vmem:[%s2046] sm:$0xff]
  %s2048 = scalar_lea.vmem %s1, 2220
  %s2049 = scalar_lea.vmem %s2048, 4294967292
  %v2050 = vpack.c.bf16 %v2047, %v592
  %2051 = vst [vmem:[%s2049] sm:$0xff] %v2050
  %s2052 = scalar_lea.vmem %s0, 4456
  %v2053 = vld [vmem:[%s2052] sm:$0xff]
  %s2054 = scalar_lea.vmem %s1, 180
  %s2055 = scalar_lea.vmem %s2054, 4294967292
  %v2056 = vpack.c.bf16 %v2053, %v595
  %2057 = vst [vmem:[%s2055] sm:$0xff] %v2056
  %s2058 = scalar_lea.vmem %s0, 2920
  %v2059 = vld [vmem:[%s2058] sm:$0xff]
  %s2060 = scalar_lea.vmem %s1, 948
  %s2061 = scalar_lea.vmem %s2060, 4294967292
  %v2062 = vpack.c.bf16 %v2059, %v598
  %2063 = vst [vmem:[%s2061] sm:$0xff] %v2062
  %s2064 = scalar_lea.vmem %s0, 1384
  %v2065 = vld [vmem:[%s2064] sm:$0xff]
  %s2066 = scalar_lea.vmem %s1, 1716
  %s2067 = scalar_lea.vmem %s2066, 4294967292
  %v2068 = vpack.c.bf16 %v2065, %v601
  %2069 = vst [vmem:[%s2067] sm:$0xff] %v2068
  %s2070 = scalar_lea.vmem %s0, 3944
  %v2071 = vld [vmem:[%s2070] sm:$0xff]
  %s2072 = scalar_lea.vmem %s1, 436
  %s2073 = scalar_lea.vmem %s2072, 4294967292
  %v2074 = vpack.c.bf16 %v2071, %v604
  %2075 = vst [vmem:[%s2073] sm:$0xff] %v2074
  %s2076 = scalar_lea.vmem %s0, 2408
  %v2077 = vld [vmem:[%s2076] sm:$0xff]
  %s2078 = scalar_lea.vmem %s1, 1204
  %s2079 = scalar_lea.vmem %s2078, 4294967292
  %v2080 = vpack.c.bf16 %v2077, %v607
  %2081 = vst [vmem:[%s2079] sm:$0xff] %v2080
  %s2082 = scalar_lea.vmem %s0, 872
  %v2083 = vld [vmem:[%s2082] sm:$0xff]
  %s2084 = scalar_lea.vmem %s1, 1972
  %s2085 = scalar_lea.vmem %s2084, 4294967292
  %v2086 = vpack.c.bf16 %v2083, %v610
  %2087 = vst [vmem:[%s2085] sm:$0xff] %v2086
  %s2088 = scalar_lea.vmem %s0, 3432
  %v2089 = vld [vmem:[%s2088] sm:$0xff]
  %s2090 = scalar_lea.vmem %s1, 692
  %s2091 = scalar_lea.vmem %s2090, 4294967292
  %v2092 = vpack.c.bf16 %v2089, %v613
  %2093 = vst [vmem:[%s2091] sm:$0xff] %v2092
  %s2094 = scalar_lea.vmem %s0, 1896
  %v2095 = vld [vmem:[%s2094] sm:$0xff]
  %s2096 = scalar_lea.vmem %s1, 1460
  %s2097 = scalar_lea.vmem %s2096, 4294967292
  %v2098 = vpack.c.bf16 %v2095, %v616
  %2099 = vst [vmem:[%s2097] sm:$0xff] %v2098
  %s2100 = scalar_lea.vmem %s0, 360
  %v2101 = vld [vmem:[%s2100] sm:$0xff]
  %s2102 = scalar_lea.vmem %s1, 2228
  %s2103 = scalar_lea.vmem %s2102, 4294967292
  %v2104 = vpack.c.bf16 %v2101, %v619
  %2105 = vst [vmem:[%s2103] sm:$0xff] %v2104
  %s2106 = scalar_lea.vmem %s0, 4472
  %v2107 = vld [vmem:[%s2106] sm:$0xff]
  %s2108 = scalar_lea.vmem %s1, 188
  %s2109 = scalar_lea.vmem %s2108, 4294967292
  %v2110 = vpack.c.bf16 %v2107, %v622
  %2111 = vst [vmem:[%s2109] sm:$0xff] %v2110
  %s2112 = scalar_lea.vmem %s0, 2936
  %v2113 = vld [vmem:[%s2112] sm:$0xff]
  %s2114 = scalar_lea.vmem %s1, 956
  %s2115 = scalar_lea.vmem %s2114, 4294967292
  %v2116 = vpack.c.bf16 %v2113, %v625
  %2117 = vst [vmem:[%s2115] sm:$0xff] %v2116
  %s2118 = scalar_lea.vmem %s0, 1400
  %v2119 = vld [vmem:[%s2118] sm:$0xff]
  %s2120 = scalar_lea.vmem %s1, 1724
  %s2121 = scalar_lea.vmem %s2120, 4294967292
  %v2122 = vpack.c.bf16 %v2119, %v628
  %2123 = vst [vmem:[%s2121] sm:$0xff] %v2122
  %s2124 = scalar_lea.vmem %s0, 3960
  %v2125 = vld [vmem:[%s2124] sm:$0xff]
  %s2126 = scalar_lea.vmem %s1, 444
  %s2127 = scalar_lea.vmem %s2126, 4294967292
  %v2128 = vpack.c.bf16 %v2125, %v631
  %2129 = vst [vmem:[%s2127] sm:$0xff] %v2128
  %s2130 = scalar_lea.vmem %s0, 2424
  %v2131 = vld [vmem:[%s2130] sm:$0xff]
  %s2132 = scalar_lea.vmem %s1, 1212
  %s2133 = scalar_lea.vmem %s2132, 4294967292
  %v2134 = vpack.c.bf16 %v2131, %v634
  %2135 = vst [vmem:[%s2133] sm:$0xff] %v2134
  %s2136 = scalar_lea.vmem %s0, 888
  %v2137 = vld [vmem:[%s2136] sm:$0xff]
  %s2138 = scalar_lea.vmem %s1, 1980
  %s2139 = scalar_lea.vmem %s2138, 4294967292
  %v2140 = vpack.c.bf16 %v2137, %v637
  %2141 = vst [vmem:[%s2139] sm:$0xff] %v2140
  %s2142 = scalar_lea.vmem %s0, 3448
  %v2143 = vld [vmem:[%s2142] sm:$0xff]
  %s2144 = scalar_lea.vmem %s1, 700
  %s2145 = scalar_lea.vmem %s2144, 4294967292
  %v2146 = vpack.c.bf16 %v2143, %v640
  %2147 = vst [vmem:[%s2145] sm:$0xff] %v2146
  %s2148 = scalar_lea.vmem %s0, 1912
  %v2149 = vld [vmem:[%s2148] sm:$0xff]
  %s2150 = scalar_lea.vmem %s1, 1468
  %s2151 = scalar_lea.vmem %s2150, 4294967292
  %v2152 = vpack.c.bf16 %v2149, %v643
  %2153 = vst [vmem:[%s2151] sm:$0xff] %v2152
  %s2154 = scalar_lea.vmem %s0, 376
  %v2155 = vld [vmem:[%s2154] sm:$0xff]
  %s2156 = scalar_lea.vmem %s1, 2236
  %s2157 = scalar_lea.vmem %s2156, 4294967292
  %v2158 = vpack.c.bf16 %v2155, %v646
  %2159 = vst [vmem:[%s2157] sm:$0xff] %v2158
  %s2160 = scalar_lea.vmem %s0, 4488
  %v2161 = vld [vmem:[%s2160] sm:$0xff]
  %s2162 = scalar_lea.vmem %s1, 196
  %s2163 = scalar_lea.vmem %s2162, 4294967292
  %v2164 = vpack.c.bf16 %v2161, %v649
  %2165 = vst [vmem:[%s2163] sm:$0xff] %v2164
  %s2166 = scalar_lea.vmem %s0, 2952
  %v2167 = vld [vmem:[%s2166] sm:$0xff]
  %s2168 = scalar_lea.vmem %s1, 964
  %s2169 = scalar_lea.vmem %s2168, 4294967292
  %v2170 = vpack.c.bf16 %v2167, %v652
  %2171 = vst [vmem:[%s2169] sm:$0xff] %v2170
  %s2172 = scalar_lea.vmem %s0, 1416
  %v2173 = vld [vmem:[%s2172] sm:$0xff]
  %s2174 = scalar_lea.vmem %s1, 1732
  %s2175 = scalar_lea.vmem %s2174, 4294967292
  %v2176 = vpack.c.bf16 %v2173, %v655
  %2177 = vst [vmem:[%s2175] sm:$0xff] %v2176
  %s2178 = scalar_lea.vmem %s0, 3976
  %v2179 = vld [vmem:[%s2178] sm:$0xff]
  %s2180 = scalar_lea.vmem %s1, 452
  %s2181 = scalar_lea.vmem %s2180, 4294967292
  %v2182 = vpack.c.bf16 %v2179, %v658
  %2183 = vst [vmem:[%s2181] sm:$0xff] %v2182
  %s2184 = scalar_lea.vmem %s0, 2440
  %v2185 = vld [vmem:[%s2184] sm:$0xff]
  %s2186 = scalar_lea.vmem %s1, 1220
  %s2187 = scalar_lea.vmem %s2186, 4294967292
  %v2188 = vpack.c.bf16 %v2185, %v661
  %2189 = vst [vmem:[%s2187] sm:$0xff] %v2188
  %s2190 = scalar_lea.vmem %s0, 904
  %v2191 = vld [vmem:[%s2190] sm:$0xff]
  %s2192 = scalar_lea.vmem %s1, 1988
  %s2193 = scalar_lea.vmem %s2192, 4294967292
  %v2194 = vpack.c.bf16 %v2191, %v664
  %2195 = vst [vmem:[%s2193] sm:$0xff] %v2194
  %s2196 = scalar_lea.vmem %s0, 3464
  %v2197 = vld [vmem:[%s2196] sm:$0xff]
  %s2198 = scalar_lea.vmem %s1, 708
  %s2199 = scalar_lea.vmem %s2198, 4294967292
  %v2200 = vpack.c.bf16 %v2197, %v667
  %2201 = vst [vmem:[%s2199] sm:$0xff] %v2200
  %s2202 = scalar_lea.vmem %s0, 1928
  %v2203 = vld [vmem:[%s2202] sm:$0xff]
  %s2204 = scalar_lea.vmem %s1, 1476
  %s2205 = scalar_lea.vmem %s2204, 4294967292
  %v2206 = vpack.c.bf16 %v2203, %v670
  %2207 = vst [vmem:[%s2205] sm:$0xff] %v2206
  %s2208 = scalar_lea.vmem %s0, 392
  %v2209 = vld [vmem:[%s2208] sm:$0xff]
  %s2210 = scalar_lea.vmem %s1, 2244
  %s2211 = scalar_lea.vmem %s2210, 4294967292
  %v2212 = vpack.c.bf16 %v2209, %v673
  %2213 = vst [vmem:[%s2211] sm:$0xff] %v2212
  %s2214 = scalar_lea.vmem %s0, 4504
  %v2215 = vld [vmem:[%s2214] sm:$0xff]
  %s2216 = scalar_lea.vmem %s1, 204
  %s2217 = scalar_lea.vmem %s2216, 4294967292
  %v2218 = vpack.c.bf16 %v2215, %v676
  %2219 = vst [vmem:[%s2217] sm:$0xff] %v2218
  %s2220 = scalar_lea.vmem %s0, 2968
  %v2221 = vld [vmem:[%s2220] sm:$0xff]
  %s2222 = scalar_lea.vmem %s1, 972
  %s2223 = scalar_lea.vmem %s2222, 4294967292
  %v2224 = vpack.c.bf16 %v2221, %v679
  %2225 = vst [vmem:[%s2223] sm:$0xff] %v2224
  %s2226 = scalar_lea.vmem %s0, 1432
  %v2227 = vld [vmem:[%s2226] sm:$0xff]
  %s2228 = scalar_lea.vmem %s1, 1740
  %s2229 = scalar_lea.vmem %s2228, 4294967292
  %v2230 = vpack.c.bf16 %v2227, %v682
  %2231 = vst [vmem:[%s2229] sm:$0xff] %v2230
  %s2232 = scalar_lea.vmem %s0, 3992
  %v2233 = vld [vmem:[%s2232] sm:$0xff]
  %s2234 = scalar_lea.vmem %s1, 460
  %s2235 = scalar_lea.vmem %s2234, 4294967292
  %v2236 = vpack.c.bf16 %v2233, %v685
  %2237 = vst [vmem:[%s2235] sm:$0xff] %v2236
  %s2238 = scalar_lea.vmem %s0, 2456
  %v2239 = vld [vmem:[%s2238] sm:$0xff]
  %s2240 = scalar_lea.vmem %s1, 1228
  %s2241 = scalar_lea.vmem %s2240, 4294967292
  %v2242 = vpack.c.bf16 %v2239, %v688
  %2243 = vst [vmem:[%s2241] sm:$0xff] %v2242
  %s2244 = scalar_lea.vmem %s0, 920
  %v2245 = vld [vmem:[%s2244] sm:$0xff]
  %s2246 = scalar_lea.vmem %s1, 1996
  %s2247 = scalar_lea.vmem %s2246, 4294967292
  %v2248 = vpack.c.bf16 %v2245, %v691
  %2249 = vst [vmem:[%s2247] sm:$0xff] %v2248
  %s2250 = scalar_lea.vmem %s0, 3480
  %v2251 = vld [vmem:[%s2250] sm:$0xff]
  %s2252 = scalar_lea.vmem %s1, 716
  %s2253 = scalar_lea.vmem %s2252, 4294967292
  %v2254 = vpack.c.bf16 %v2251, %v694
  %2255 = vst [vmem:[%s2253] sm:$0xff] %v2254
  %s2256 = scalar_lea.vmem %s0, 1944
  %v2257 = vld [vmem:[%s2256] sm:$0xff]
  %s2258 = scalar_lea.vmem %s1, 1484
  %s2259 = scalar_lea.vmem %s2258, 4294967292
  %v2260 = vpack.c.bf16 %v2257, %v697
  %2261 = vst [vmem:[%s2259] sm:$0xff] %v2260
  %s2262 = scalar_lea.vmem %s0, 408
  %v2263 = vld [vmem:[%s2262] sm:$0xff]
  %s2264 = scalar_lea.vmem %s1, 2252
  %s2265 = scalar_lea.vmem %s2264, 4294967292
  %v2266 = vpack.c.bf16 %v2263, %v700
  %2267 = vst [vmem:[%s2265] sm:$0xff] %v2266
  %s2268 = scalar_lea.vmem %s0, 4520
  %v2269 = vld [vmem:[%s2268] sm:$0xff]
  %s2270 = scalar_lea.vmem %s1, 212
  %s2271 = scalar_lea.vmem %s2270, 4294967292
  %v2272 = vpack.c.bf16 %v2269, %v703
  %2273 = vst [vmem:[%s2271] sm:$0xff] %v2272
  %s2274 = scalar_lea.vmem %s0, 2984
  %v2275 = vld [vmem:[%s2274] sm:$0xff]
  %s2276 = scalar_lea.vmem %s1, 980
  %s2277 = scalar_lea.vmem %s2276, 4294967292
  %v2278 = vpack.c.bf16 %v2275, %v706
  %2279 = vst [vmem:[%s2277] sm:$0xff] %v2278
  %s2280 = scalar_lea.vmem %s0, 1448
  %v2281 = vld [vmem:[%s2280] sm:$0xff]
  %s2282 = scalar_lea.vmem %s1, 1748
  %s2283 = scalar_lea.vmem %s2282, 4294967292
  %v2284 = vpack.c.bf16 %v2281, %v709
  %2285 = vst [vmem:[%s2283] sm:$0xff] %v2284
  %s2286 = scalar_lea.vmem %s0, 4008
  %v2287 = vld [vmem:[%s2286] sm:$0xff]
  %s2288 = scalar_lea.vmem %s1, 468
  %s2289 = scalar_lea.vmem %s2288, 4294967292
  %v2290 = vpack.c.bf16 %v2287, %v712
  %2291 = vst [vmem:[%s2289] sm:$0xff] %v2290
  %s2292 = scalar_lea.vmem %s0, 2472
  %v2293 = vld [vmem:[%s2292] sm:$0xff]
  %s2294 = scalar_lea.vmem %s1, 1236
  %s2295 = scalar_lea.vmem %s2294, 4294967292
  %v2296 = vpack.c.bf16 %v2293, %v715
  %2297 = vst [vmem:[%s2295] sm:$0xff] %v2296
  %s2298 = scalar_lea.vmem %s0, 936
  %v2299 = vld [vmem:[%s2298] sm:$0xff]
  %s2300 = scalar_lea.vmem %s1, 2004
  %s2301 = scalar_lea.vmem %s2300, 4294967292
  %v2302 = vpack.c.bf16 %v2299, %v718
  %2303 = vst [vmem:[%s2301] sm:$0xff] %v2302
  %s2304 = scalar_lea.vmem %s0, 3496
  %v2305 = vld [vmem:[%s2304] sm:$0xff]
  %s2306 = scalar_lea.vmem %s1, 724
  %s2307 = scalar_lea.vmem %s2306, 4294967292
  %v2308 = vpack.c.bf16 %v2305, %v721
  %2309 = vst [vmem:[%s2307] sm:$0xff] %v2308
  %s2310 = scalar_lea.vmem %s0, 1960
  %v2311 = vld [vmem:[%s2310] sm:$0xff]
  %s2312 = scalar_lea.vmem %s1, 1492
  %s2313 = scalar_lea.vmem %s2312, 4294967292
  %v2314 = vpack.c.bf16 %v2311, %v724
  %2315 = vst [vmem:[%s2313] sm:$0xff] %v2314
  %s2316 = scalar_lea.vmem %s0, 424
  %v2317 = vld [vmem:[%s2316] sm:$0xff]
  %s2318 = scalar_lea.vmem %s1, 2260
  %s2319 = scalar_lea.vmem %s2318, 4294967292
  %v2320 = vpack.c.bf16 %v2317, %v727
  %2321 = vst [vmem:[%s2319] sm:$0xff] %v2320
  %s2322 = scalar_lea.vmem %s0, 4536
  %v2323 = vld [vmem:[%s2322] sm:$0xff]
  %s2324 = scalar_lea.vmem %s1, 220
  %s2325 = scalar_lea.vmem %s2324, 4294967292
  %v2326 = vpack.c.bf16 %v2323, %v730
  %2327 = vst [vmem:[%s2325] sm:$0xff] %v2326
  %s2328 = scalar_lea.vmem %s0, 3000
  %v2329 = vld [vmem:[%s2328] sm:$0xff]
  %s2330 = scalar_lea.vmem %s1, 988
  %s2331 = scalar_lea.vmem %s2330, 4294967292
  %v2332 = vpack.c.bf16 %v2329, %v733
  %2333 = vst [vmem:[%s2331] sm:$0xff] %v2332
  %s2334 = scalar_lea.vmem %s0, 1464
  %v2335 = vld [vmem:[%s2334] sm:$0xff]
  %s2336 = scalar_lea.vmem %s1, 1756
  %s2337 = scalar_lea.vmem %s2336, 4294967292
  %v2338 = vpack.c.bf16 %v2335, %v736
  %2339 = vst [vmem:[%s2337] sm:$0xff] %v2338
  %s2340 = scalar_lea.vmem %s0, 4024
  %v2341 = vld [vmem:[%s2340] sm:$0xff]
  %s2342 = scalar_lea.vmem %s1, 476
  %s2343 = scalar_lea.vmem %s2342, 4294967292
  %v2344 = vpack.c.bf16 %v2341, %v739
  %2345 = vst [vmem:[%s2343] sm:$0xff] %v2344
  %s2346 = scalar_lea.vmem %s0, 2488
  %v2347 = vld [vmem:[%s2346] sm:$0xff]
  %s2348 = scalar_lea.vmem %s1, 1244
  %s2349 = scalar_lea.vmem %s2348, 4294967292
  %v2350 = vpack.c.bf16 %v2347, %v742
  %2351 = vst [vmem:[%s2349] sm:$0xff] %v2350
  %s2352 = scalar_lea.vmem %s0, 952
  %v2353 = vld [vmem:[%s2352] sm:$0xff]
  %s2354 = scalar_lea.vmem %s1, 2012
  %s2355 = scalar_lea.vmem %s2354, 4294967292
  %v2356 = vpack.c.bf16 %v2353, %v745
  %2357 = vst [vmem:[%s2355] sm:$0xff] %v2356
  %s2358 = scalar_lea.vmem %s0, 3512
  %v2359 = vld [vmem:[%s2358] sm:$0xff]
  %s2360 = scalar_lea.vmem %s1, 732
  %s2361 = scalar_lea.vmem %s2360, 4294967292
  %v2362 = vpack.c.bf16 %v2359, %v748
  %2363 = vst [vmem:[%s2361] sm:$0xff] %v2362
  %s2364 = scalar_lea.vmem %s0, 1976
  %v2365 = vld [vmem:[%s2364] sm:$0xff]
  %s2366 = scalar_lea.vmem %s1, 1500
  %s2367 = scalar_lea.vmem %s2366, 4294967292
  %v2368 = vpack.c.bf16 %v2365, %v751
  %2369 = vst [vmem:[%s2367] sm:$0xff] %v2368
  %s2370 = scalar_lea.vmem %s0, 440
  %v2371 = vld [vmem:[%s2370] sm:$0xff]
  %s2372 = scalar_lea.vmem %s1, 2268
  %s2373 = scalar_lea.vmem %s2372, 4294967292
  %v2374 = vpack.c.bf16 %v2371, %v754
  %2375 = vst [vmem:[%s2373] sm:$0xff] %v2374
  %s2376 = scalar_lea.vmem %s0, 4552
  %v2377 = vld [vmem:[%s2376] sm:$0xff]
  %s2378 = scalar_lea.vmem %s1, 228
  %s2379 = scalar_lea.vmem %s2378, 4294967292
  %v2380 = vpack.c.bf16 %v2377, %v757
  %2381 = vst [vmem:[%s2379] sm:$0xff] %v2380
  %s2382 = scalar_lea.vmem %s0, 3016
  %v2383 = vld [vmem:[%s2382] sm:$0xff]
  %s2384 = scalar_lea.vmem %s1, 996
  %s2385 = scalar_lea.vmem %s2384, 4294967292
  %v2386 = vpack.c.bf16 %v2383, %v760
  %2387 = vst [vmem:[%s2385] sm:$0xff] %v2386
  %s2388 = scalar_lea.vmem %s0, 1480
  %v2389 = vld [vmem:[%s2388] sm:$0xff]
  %s2390 = scalar_lea.vmem %s1, 1764
  %s2391 = scalar_lea.vmem %s2390, 4294967292
  %v2392 = vpack.c.bf16 %v2389, %v763
  %2393 = vst [vmem:[%s2391] sm:$0xff] %v2392
  %s2394 = scalar_lea.vmem %s0, 4040
  %v2395 = vld [vmem:[%s2394] sm:$0xff]
  %s2396 = scalar_lea.vmem %s1, 484
  %s2397 = scalar_lea.vmem %s2396, 4294967292
  %v2398 = vpack.c.bf16 %v2395, %v766
  %2399 = vst [vmem:[%s2397] sm:$0xff] %v2398
  %s2400 = scalar_lea.vmem %s0, 2504
  %v2401 = vld [vmem:[%s2400] sm:$0xff]
  %s2402 = scalar_lea.vmem %s1, 1252
  %s2403 = scalar_lea.vmem %s2402, 4294967292
  %v2404 = vpack.c.bf16 %v2401, %v769
  %2405 = vst [vmem:[%s2403] sm:$0xff] %v2404
  %s2406 = scalar_lea.vmem %s0, 968
  %v2407 = vld [vmem:[%s2406] sm:$0xff]
  %s2408 = scalar_lea.vmem %s1, 2020
  %s2409 = scalar_lea.vmem %s2408, 4294967292
  %v2410 = vpack.c.bf16 %v2407, %v772
  %2411 = vst [vmem:[%s2409] sm:$0xff] %v2410
  %s2412 = scalar_lea.vmem %s0, 3528
  %v2413 = vld [vmem:[%s2412] sm:$0xff]
  %s2414 = scalar_lea.vmem %s1, 740
  %s2415 = scalar_lea.vmem %s2414, 4294967292
  %v2416 = vpack.c.bf16 %v2413, %v775
  %2417 = vst [vmem:[%s2415] sm:$0xff] %v2416
  %s2418 = scalar_lea.vmem %s0, 1992
  %v2419 = vld [vmem:[%s2418] sm:$0xff]
  %s2420 = scalar_lea.vmem %s1, 1508
  %s2421 = scalar_lea.vmem %s2420, 4294967292
  %v2422 = vpack.c.bf16 %v2419, %v778
  %2423 = vst [vmem:[%s2421] sm:$0xff] %v2422
  %s2424 = scalar_lea.vmem %s0, 456
  %v2425 = vld [vmem:[%s2424] sm:$0xff]
  %s2426 = scalar_lea.vmem %s1, 2276
  %s2427 = scalar_lea.vmem %s2426, 4294967292
  %v2428 = vpack.c.bf16 %v2425, %v781
  %2429 = vst [vmem:[%s2427] sm:$0xff] %v2428
  %s2430 = scalar_lea.vmem %s0, 4568
  %v2431 = vld [vmem:[%s2430] sm:$0xff]
  %s2432 = scalar_lea.vmem %s1, 236
  %s2433 = scalar_lea.vmem %s2432, 4294967292
  %v2434 = vpack.c.bf16 %v2431, %v784
  %2435 = vst [vmem:[%s2433] sm:$0xff] %v2434
  %s2436 = scalar_lea.vmem %s0, 3032
  %v2437 = vld [vmem:[%s2436] sm:$0xff]
  %s2438 = scalar_lea.vmem %s1, 1004
  %s2439 = scalar_lea.vmem %s2438, 4294967292
  %v2440 = vpack.c.bf16 %v2437, %v787
  %2441 = vst [vmem:[%s2439] sm:$0xff] %v2440
  %s2442 = scalar_lea.vmem %s0, 1496
  %v2443 = vld [vmem:[%s2442] sm:$0xff]
  %s2444 = scalar_lea.vmem %s1, 1772
  %s2445 = scalar_lea.vmem %s2444, 4294967292
  %v2446 = vpack.c.bf16 %v2443, %v790
  %2447 = vst [vmem:[%s2445] sm:$0xff] %v2446
  %s2448 = scalar_lea.vmem %s0, 4056
  %v2449 = vld [vmem:[%s2448] sm:$0xff]
  %s2450 = scalar_lea.vmem %s1, 492
  %s2451 = scalar_lea.vmem %s2450, 4294967292
  %v2452 = vpack.c.bf16 %v2449, %v793
  %2453 = vst [vmem:[%s2451] sm:$0xff] %v2452
  %s2454 = scalar_lea.vmem %s0, 2520
  %v2455 = vld [vmem:[%s2454] sm:$0xff]
  %s2456 = scalar_lea.vmem %s1, 1260
  %s2457 = scalar_lea.vmem %s2456, 4294967292
  %v2458 = vpack.c.bf16 %v2455, %v796
  %2459 = vst [vmem:[%s2457] sm:$0xff] %v2458
  %s2460 = scalar_lea.vmem %s0, 984
  %v2461 = vld [vmem:[%s2460] sm:$0xff]
  %s2462 = scalar_lea.vmem %s1, 2028
  %s2463 = scalar_lea.vmem %s2462, 4294967292
  %v2464 = vpack.c.bf16 %v2461, %v799
  %2465 = vst [vmem:[%s2463] sm:$0xff] %v2464
  %s2466 = scalar_lea.vmem %s0, 3544
  %v2467 = vld [vmem:[%s2466] sm:$0xff]
  %s2468 = scalar_lea.vmem %s1, 748
  %s2469 = scalar_lea.vmem %s2468, 4294967292
  %v2470 = vpack.c.bf16 %v2467, %v802
  %2471 = vst [vmem:[%s2469] sm:$0xff] %v2470
  %s2472 = scalar_lea.vmem %s0, 2008
  %v2473 = vld [vmem:[%s2472] sm:$0xff]
  %s2474 = scalar_lea.vmem %s1, 1516
  %s2475 = scalar_lea.vmem %s2474, 4294967292
  %v2476 = vpack.c.bf16 %v2473, %v805
  %2477 = vst [vmem:[%s2475] sm:$0xff] %v2476
  %s2478 = scalar_lea.vmem %s0, 472
  %v2479 = vld [vmem:[%s2478] sm:$0xff]
  %s2480 = scalar_lea.vmem %s1, 2284
  %s2481 = scalar_lea.vmem %s2480, 4294967292
  %v2482 = vpack.c.bf16 %v2479, %v808
  %2483 = vst [vmem:[%s2481] sm:$0xff] %v2482
  %s2484 = scalar_lea.vmem %s0, 4584
  %v2485 = vld [vmem:[%s2484] sm:$0xff]
  %s2486 = scalar_lea.vmem %s1, 244
  %s2487 = scalar_lea.vmem %s2486, 4294967292
  %v2488 = vpack.c.bf16 %v2485, %v811
  %2489 = vst [vmem:[%s2487] sm:$0xff] %v2488
  %s2490 = scalar_lea.vmem %s0, 3048
  %v2491 = vld [vmem:[%s2490] sm:$0xff]
  %s2492 = scalar_lea.vmem %s1, 1012
  %s2493 = scalar_lea.vmem %s2492, 4294967292
  %v2494 = vpack.c.bf16 %v2491, %v814
  %2495 = vst [vmem:[%s2493] sm:$0xff] %v2494
  %s2496 = scalar_lea.vmem %s0, 1512
  %v2497 = vld [vmem:[%s2496] sm:$0xff]
  %s2498 = scalar_lea.vmem %s1, 1780
  %s2499 = scalar_lea.vmem %s2498, 4294967292
  %v2500 = vpack.c.bf16 %v2497, %v817
  %2501 = vst [vmem:[%s2499] sm:$0xff] %v2500
  %s2502 = scalar_lea.vmem %s0, 4072
  %v2503 = vld [vmem:[%s2502] sm:$0xff]
  %s2504 = scalar_lea.vmem %s1, 500
  %s2505 = scalar_lea.vmem %s2504, 4294967292
  %v2506 = vpack.c.bf16 %v2503, %v820
  %2507 = vst [vmem:[%s2505] sm:$0xff] %v2506
  %s2508 = scalar_lea.vmem %s0, 2536
  %v2509 = vld [vmem:[%s2508] sm:$0xff]
  %s2510 = scalar_lea.vmem %s1, 1268
  %s2511 = scalar_lea.vmem %s2510, 4294967292
  %v2512 = vpack.c.bf16 %v2509, %v823
  %2513 = vst [vmem:[%s2511] sm:$0xff] %v2512
  %s2514 = scalar_lea.vmem %s0, 1000
  %v2515 = vld [vmem:[%s2514] sm:$0xff]
  %s2516 = scalar_lea.vmem %s1, 2036
  %s2517 = scalar_lea.vmem %s2516, 4294967292
  %v2518 = vpack.c.bf16 %v2515, %v826
  %2519 = vst [vmem:[%s2517] sm:$0xff] %v2518
  %s2520 = scalar_lea.vmem %s0, 3560
  %v2521 = vld [vmem:[%s2520] sm:$0xff]
  %s2522 = scalar_lea.vmem %s1, 756
  %s2523 = scalar_lea.vmem %s2522, 4294967292
  %v2524 = vpack.c.bf16 %v2521, %v829
  %2525 = vst [vmem:[%s2523] sm:$0xff] %v2524
  %s2526 = scalar_lea.vmem %s0, 2024
  %v2527 = vld [vmem:[%s2526] sm:$0xff]
  %s2528 = scalar_lea.vmem %s1, 1524
  %s2529 = scalar_lea.vmem %s2528, 4294967292
  %v2530 = vpack.c.bf16 %v2527, %v832
  %2531 = vst [vmem:[%s2529] sm:$0xff] %v2530
  %s2532 = scalar_lea.vmem %s0, 488
  %v2533 = vld [vmem:[%s2532] sm:$0xff]
  %s2534 = scalar_lea.vmem %s1, 2292
  %s2535 = scalar_lea.vmem %s2534, 4294967292
  %v2536 = vpack.c.bf16 %v2533, %v835
  %2537 = vst [vmem:[%s2535] sm:$0xff] %v2536
  %s2538 = scalar_lea.vmem %s0, 4600
  %v2539 = vld [vmem:[%s2538] sm:$0xff]
  %s2540 = scalar_lea.vmem %s1, 252
  %s2541 = scalar_lea.vmem %s2540, 4294967292
  %v2542 = vpack.c.bf16 %v2539, %v838
  %2543 = vst [vmem:[%s2541] sm:$0xff] %v2542
  %s2544 = scalar_lea.vmem %s0, 3064
  %v2545 = vld [vmem:[%s2544] sm:$0xff]
  %s2546 = scalar_lea.vmem %s1, 1020
  %s2547 = scalar_lea.vmem %s2546, 4294967292
  %v2548 = vpack.c.bf16 %v2545, %v841
  %2549 = vst [vmem:[%s2547] sm:$0xff] %v2548
  %s2550 = scalar_lea.vmem %s0, 1528
  %v2551 = vld [vmem:[%s2550] sm:$0xff]
  %s2552 = scalar_lea.vmem %s1, 1788
  %s2553 = scalar_lea.vmem %s2552, 4294967292
  %v2554 = vpack.c.bf16 %v2551, %v844
  %2555 = vst [vmem:[%s2553] sm:$0xff] %v2554
  %s2556 = scalar_lea.vmem %s0, 4088
  %v2557 = vld [vmem:[%s2556] sm:$0xff]
  %s2558 = scalar_lea.vmem %s1, 508
  %s2559 = scalar_lea.vmem %s2558, 4294967292
  %v2560 = vpack.c.bf16 %v2557, %v847
  %2561 = vst [vmem:[%s2559] sm:$0xff] %v2560
  %s2562 = scalar_lea.vmem %s0, 2552
  %v2563 = vld [vmem:[%s2562] sm:$0xff]
  %s2564 = scalar_lea.vmem %s1, 1276
  %s2565 = scalar_lea.vmem %s2564, 4294967292
  %v2566 = vpack.c.bf16 %v2563, %v850
  %2567 = vst [vmem:[%s2565] sm:$0xff] %v2566
  %s2568 = scalar_lea.vmem %s0, 1016
  %v2569 = vld [vmem:[%s2568] sm:$0xff]
  %s2570 = scalar_lea.vmem %s1, 2044
  %s2571 = scalar_lea.vmem %s2570, 4294967292
  %v2572 = vpack.c.bf16 %v2569, %v853
  %2573 = vst [vmem:[%s2571] sm:$0xff] %v2572
  %s2574 = scalar_lea.vmem %s0, 3576
  %v2575 = vld [vmem:[%s2574] sm:$0xff]
  %s2576 = scalar_lea.vmem %s1, 764
  %s2577 = scalar_lea.vmem %s2576, 4294967292
  %v2578 = vpack.c.bf16 %v2575, %v856
  %2579 = vst [vmem:[%s2577] sm:$0xff] %v2578
  %s2580 = scalar_lea.vmem %s0, 2040
  %v2581 = vld [vmem:[%s2580] sm:$0xff]
  %s2582 = scalar_lea.vmem %s1, 1532
  %s2583 = scalar_lea.vmem %s2582, 4294967292
  %v2584 = vpack.c.bf16 %v2581, %v859
  %2585 = vst [vmem:[%s2583] sm:$0xff] %v2584
  %s2586 = scalar_lea.vmem %s0, 504
  %v2587 = vld [vmem:[%s2586] sm:$0xff]
  %s2588 = scalar_lea.vmem %s1, 2300
  %s2589 = scalar_lea.vmem %s2588, 4294967292
  %v2590 = vpack.c.bf16 %v2587, %v862
  %2591 = vst [vmem:[%s2589] sm:$0xff] %v2590

// kernel: reverse.11
$region0: #{reverse.11}
  #allocation0 [shape = 's32[1]{0}', space=sflag, size = 0x4, scoped, tag = 'scoped memory for reverse.11']
  %s0 = inlined_call_operand.vmem [shape: f32[128,128,3,3], index: 0, kind: input, shape index: {}]
  %s1 = inlined_call_operand.vmem [shape: bf16[128,128,3,3], index: 1, kind: output, shape index: {}]
  %s2 = scalar_lea.vmem %s0, 1024
  %v3 = vld [vmem:[%s2] sm:$0xff]
  %v4 = vpack.c.bf16 0.0, %v3
  %5 = vst [vmem:[%s1] sm:$0xf] %v4
  %s6 = scalar_lea.vmem %s0, 640
  %v7 = vld [vmem:[%s6] sm:$0xff]
  %s8 = scalar_lea.vmem %s1, 192
  %v9 = vpack.c.bf16 0.0, %v7
  %10 = vst [vmem:[%s8] sm:$0xf] %v9
  %s11 = scalar_lea.vmem %s0, 256
  %v12 = vld [vmem:[%s11] sm:$0xff]
  %s13 = scalar_lea.vmem %s1, 384
  %v14 = vpack.c.bf16 0.0, %v12
  %15 = vst [vmem:[%s13] sm:$0xf] %v14
  %s16 = scalar_lea.vmem %s0, 896
  %v17 = vld [vmem:[%s16] sm:$0xff]
  %s18 = scalar_lea.vmem %s1, 64
  %v19 = vpack.c.bf16 0.0, %v17
  %20 = vst [vmem:[%s18] sm:$0xf] %v19
  %s21 = scalar_lea.vmem %s0, 512
  %v22 = vld [vmem:[%s21] sm:$0xff]
  %s23 = scalar_lea.vmem %s1, 256
  %v24 = vpack.c.bf16 0.0, %v22
  %25 = vst [vmem:[%s23] sm:$0xf] %v24
  %s26 = scalar_lea.vmem %s0, 128
  %v27 = vld [vmem:[%s26] sm:$0xff]
  %s28 = scalar_lea.vmem %s1, 448
  %v29 = vpack.c.bf16 0.0, %v27
  %30 = vst [vmem:[%s28] sm:$0xf] %v29
  %s31 = scalar_lea.vmem %s0, 768
  %v32 = vld [vmem:[%s31] sm:$0xff]
  %s33 = scalar_lea.vmem %s1, 128
  %v34 = vpack.c.bf16 0.0, %v32
  %35 = vst [vmem:[%s33] sm:$0xf] %v34
  %s36 = scalar_lea.vmem %s0, 384
  %v37 = vld [vmem:[%s36] sm:$0xff]
  %s38 = scalar_lea.vmem %s1, 320
  %v39 = vpack.c.bf16 0.0, %v37
  %40 = vst [vmem:[%s38] sm:$0xf] %v39
  %v41 = vld [vmem:[%s0] sm:$0xff]
  %s42 = scalar_lea.vmem %s1, 512
  %v43 = vpack.c.bf16 0.0, %v41
  %44 = vst [vmem:[%s42] sm:$0xf] %v43
  %s45 = scalar_lea.vmem %s0, 1032
  %v46 = vld [vmem:[%s45] sm:$0xff]
  %s47 = scalar_lea.vmem %s1, 4
  %v48 = vpack.c.bf16 0.0, %v46
  %49 = vst [vmem:[%s47] sm:$0xf] %v48
  %s50 = scalar_lea.vmem %s0, 648
  %v51 = vld [vmem:[%s50] sm:$0xff]
  %s52 = scalar_lea.vmem %s1, 196
  %v53 = vpack.c.bf16 0.0, %v51
  %54 = vst [vmem:[%s52] sm:$0xf] %v53
  %s55 = scalar_lea.vmem %s0, 264
  %v56 = vld [vmem:[%s55] sm:$0xff]
  %s57 = scalar_lea.vmem %s1, 388
  %v58 = vpack.c.bf16 0.0, %v56
  %59 = vst [vmem:[%s57] sm:$0xf] %v58
  %s60 = scalar_lea.vmem %s0, 904
  %v61 = vld [vmem:[%s60] sm:$0xff]
  %s62 = scalar_lea.vmem %s1, 68
  %v63 = vpack.c.bf16 0.0, %v61
  %64 = vst [vmem:[%s62] sm:$0xf] %v63
  %s65 = scalar_lea.vmem %s0, 520
  %v66 = vld [vmem:[%s65] sm:$0xff]
  %s67 = scalar_lea.vmem %s1, 260
  %v68 = vpack.c.bf16 0.0, %v66
  %69 = vst [vmem:[%s67] sm:$0xf] %v68
  %s70 = scalar_lea.vmem %s0, 136
  %v71 = vld [vmem:[%s70] sm:$0xff]
  %s72 = scalar_lea.vmem %s1, 452
  %v73 = vpack.c.bf16 0.0, %v71
  %74 = vst [vmem:[%s72] sm:$0xf] %v73
  %s75 = scalar_lea.vmem %s0, 776
  %v76 = vld [vmem:[%s75] sm:$0xff]
  %s77 = scalar_lea.vmem %s1, 132
  %v78 = vpack.c.bf16 0.0, %v76
  %79 = vst [vmem:[%s77] sm:$0xf] %v78
  %s80 = scalar_lea.vmem %s0, 392
  %v81 = vld [vmem:[%s80] sm:$0xff]
  %s82 = scalar_lea.vmem %s1, 324
  %v83 = vpack.c.bf16 0.0, %v81
  %84 = vst [vmem:[%s82] sm:$0xf] %v83
  %s85 = scalar_lea.vmem %s0, 8
  %v86 = vld [vmem:[%s85] sm:$0xff]
  %s87 = scalar_lea.vmem %s1, 516
  %v88 = vpack.c.bf16 0.0, %v86
  %89 = vst [vmem:[%s87] sm:$0xf] %v88
  %s90 = scalar_lea.vmem %s0, 1040
  %v91 = vld [vmem:[%s90] sm:$0xff]
  %s92 = scalar_lea.vmem %s1, 8
  %v93 = vpack.c.bf16 0.0, %v91
  %94 = vst [vmem:[%s92] sm:$0xf] %v93
  %s95 = scalar_lea.vmem %s0, 656
  %v96 = vld [vmem:[%s95] sm:$0xff]
  %s97 = scalar_lea.vmem %s1, 200
  %v98 = vpack.c.bf16 0.0, %v96
  %99 = vst [vmem:[%s97] sm:$0xf] %v98
  %s100 = scalar_lea.vmem %s0, 272
  %v101 = vld [vmem:[%s100] sm:$0xff]
  %s102 = scalar_lea.vmem %s1, 392
  %v103 = vpack.c.bf16 0.0, %v101
  %104 = vst [vmem:[%s102] sm:$0xf] %v103
  %s105 = scalar_lea.vmem %s0, 912
  %v106 = vld [vmem:[%s105] sm:$0xff]
  %s107 = scalar_lea.vmem %s1, 72
  %v108 = vpack.c.bf16 0.0, %v106
  %109 = vst [vmem:[%s107] sm:$0xf] %v108
  %s110 = scalar_lea.vmem %s0, 528
  %v111 = vld [vmem:[%s110] sm:$0xff]
  %s112 = scalar_lea.vmem %s1, 264
  %v113 = vpack.c.bf16 0.0, %v111
  %114 = vst [vmem:[%s112] sm:$0xf] %v113
  %s115 = scalar_lea.vmem %s0, 144
  %v116 = vld [vmem:[%s115] sm:$0xff]
  %s117 = scalar_lea.vmem %s1, 456
  %v118 = vpack.c.bf16 0.0, %v116
  %119 = vst [vmem:[%s117] sm:$0xf] %v118
  %s120 = scalar_lea.vmem %s0, 784
  %v121 = vld [vmem:[%s120] sm:$0xff]
  %s122 = scalar_lea.vmem %s1, 136
  %v123 = vpack.c.bf16 0.0, %v121
  %124 = vst [vmem:[%s122] sm:$0xf] %v123
  %s125 = scalar_lea.vmem %s0, 400
  %v126 = vld [vmem:[%s125] sm:$0xff]
  %s127 = scalar_lea.vmem %s1, 328
  %v128 = vpack.c.bf16 0.0, %v126
  %129 = vst [vmem:[%s127] sm:$0xf] %v128
  %s130 = scalar_lea.vmem %s0, 16
  %v131 = vld [vmem:[%s130] sm:$0xff]
  %s132 = scalar_lea.vmem %s1, 520
  %v133 = vpack.c.bf16 0.0, %v131
  %134 = vst [vmem:[%s132] sm:$0xf] %v133
  %s135 = scalar_lea.vmem %s0, 1048
  %v136 = vld [vmem:[%s135] sm:$0xff]
  %s137 = scalar_lea.vmem %s1, 12
  %v138 = vpack.c.bf16 0.0, %v136
  %139 = vst [vmem:[%s137] sm:$0xf] %v138
  %s140 = scalar_lea.vmem %s0, 664
  %v141 = vld [vmem:[%s140] sm:$0xff]
  %s142 = scalar_lea.vmem %s1, 204
  %v143 = vpack.c.bf16 0.0, %v141
  %144 = vst [vmem:[%s142] sm:$0xf] %v143
  %s145 = scalar_lea.vmem %s0, 280
  %v146 = vld [vmem:[%s145] sm:$0xff]
  %s147 = scalar_lea.vmem %s1, 396
  %v148 = vpack.c.bf16 0.0, %v146
  %149 = vst [vmem:[%s147] sm:$0xf] %v148
  %s150 = scalar_lea.vmem %s0, 920
  %v151 = vld [vmem:[%s150] sm:$0xff]
  %s152 = scalar_lea.vmem %s1, 76
  %v153 = vpack.c.bf16 0.0, %v151
  %154 = vst [vmem:[%s152] sm:$0xf] %v153
  %s155 = scalar_lea.vmem %s0, 536
  %v156 = vld [vmem:[%s155] sm:$0xff]
  %s157 = scalar_lea.vmem %s1, 268
  %v158 = vpack.c.bf16 0.0, %v156
  %159 = vst [vmem:[%s157] sm:$0xf] %v158
  %s160 = scalar_lea.vmem %s0, 152
  %v161 = vld [vmem:[%s160] sm:$0xff]
  %s162 = scalar_lea.vmem %s1, 460
  %v163 = vpack.c.bf16 0.0, %v161
  %164 = vst [vmem:[%s162] sm:$0xf] %v163
  %s165 = scalar_lea.vmem %s0, 792
  %v166 = vld [vmem:[%s165] sm:$0xff]
  %s167 = scalar_lea.vmem %s1, 140
  %v168 = vpack.c.bf16 0.0, %v166
  %169 = vst [vmem:[%s167] sm:$0xf] %v168
  %s170 = scalar_lea.vmem %s0, 408
  %v171 = vld [vmem:[%s170] sm:$0xff]
  %s172 = scalar_lea.vmem %s1, 332
  %v173 = vpack.c.bf16 0.0, %v171
  %174 = vst [vmem:[%s172] sm:$0xf] %v173
  %s175 = scalar_lea.vmem %s0, 24
  %v176 = vld [vmem:[%s175] sm:$0xff]
  %s177 = scalar_lea.vmem %s1, 524
  %v178 = vpack.c.bf16 0.0, %v176
  %179 = vst [vmem:[%s177] sm:$0xf] %v178
  %s180 = scalar_lea.vmem %s0, 1056
  %v181 = vld [vmem:[%s180] sm:$0xff]
  %s182 = scalar_lea.vmem %s1, 16
  %v183 = vpack.c.bf16 0.0, %v181
  %184 = vst [vmem:[%s182] sm:$0xf] %v183
  %s185 = scalar_lea.vmem %s0, 672
  %v186 = vld [vmem:[%s185] sm:$0xff]
  %s187 = scalar_lea.vmem %s1, 208
  %v188 = vpack.c.bf16 0.0, %v186
  %189 = vst [vmem:[%s187] sm:$0xf] %v188
  %s190 = scalar_lea.vmem %s0, 288
  %v191 = vld [vmem:[%s190] sm:$0xff]
  %s192 = scalar_lea.vmem %s1, 400
  %v193 = vpack.c.bf16 0.0, %v191
  %194 = vst [vmem:[%s192] sm:$0xf] %v193
  %s195 = scalar_lea.vmem %s0, 928
  %v196 = vld [vmem:[%s195] sm:$0xff]
  %s197 = scalar_lea.vmem %s1, 80
  %v198 = vpack.c.bf16 0.0, %v196
  %199 = vst [vmem:[%s197] sm:$0xf] %v198
  %s200 = scalar_lea.vmem %s0, 544
  %v201 = vld [vmem:[%s200] sm:$0xff]
  %s202 = scalar_lea.vmem %s1, 272
  %v203 = vpack.c.bf16 0.0, %v201
  %204 = vst [vmem:[%s202] sm:$0xf] %v203
  %s205 = scalar_lea.vmem %s0, 160
  %v206 = vld [vmem:[%s205] sm:$0xff]
  %s207 = scalar_lea.vmem %s1, 464
  %v208 = vpack.c.bf16 0.0, %v206
  %209 = vst [vmem:[%s207] sm:$0xf] %v208
  %s210 = scalar_lea.vmem %s0, 800
  %v211 = vld [vmem:[%s210] sm:$0xff]
  %s212 = scalar_lea.vmem %s1, 144
  %v213 = vpack.c.bf16 0.0, %v211
  %214 = vst [vmem:[%s212] sm:$0xf] %v213
  %s215 = scalar_lea.vmem %s0, 416
  %v216 = vld [vmem:[%s215] sm:$0xff]
  %s217 = scalar_lea.vmem %s1, 336
  %v218 = vpack.c.bf16 0.0, %v216
  %219 = vst [vmem:[%s217] sm:$0xf] %v218
  %s220 = scalar_lea.vmem %s0, 32
  %v221 = vld [vmem:[%s220] sm:$0xff]
  %s222 = scalar_lea.vmem %s1, 528
  %v223 = vpack.c.bf16 0.0, %v221
  %224 = vst [vmem:[%s222] sm:$0xf] %v223
  %s225 = scalar_lea.vmem %s0, 1064
  %v226 = vld [vmem:[%s225] sm:$0xff]
  %s227 = scalar_lea.vmem %s1, 20
  %v228 = vpack.c.bf16 0.0, %v226
  %229 = vst [vmem:[%s227] sm:$0xf] %v228
  %s230 = scalar_lea.vmem %s0, 680
  %v231 = vld [vmem:[%s230] sm:$0xff]
  %s232 = scalar_lea.vmem %s1, 212
  %v233 = vpack.c.bf16 0.0, %v231
  %234 = vst [vmem:[%s232] sm:$0xf] %v233
  %s235 = scalar_lea.vmem %s0, 296
  %v236 = vld [vmem:[%s235] sm:$0xff]
  %s237 = scalar_lea.vmem %s1, 404
  %v238 = vpack.c.bf16 0.0, %v236
  %239 = vst [vmem:[%s237] sm:$0xf] %v238
  %s240 = scalar_lea.vmem %s0, 936
  %v241 = vld [vmem:[%s240] sm:$0xff]
  %s242 = scalar_lea.vmem %s1, 84
  %v243 = vpack.c.bf16 0.0, %v241
  %244 = vst [vmem:[%s242] sm:$0xf] %v243
  %s245 = scalar_lea.vmem %s0, 552
  %v246 = vld [vmem:[%s245] sm:$0xff]
  %s247 = scalar_lea.vmem %s1, 276
  %v248 = vpack.c.bf16 0.0, %v246
  %249 = vst [vmem:[%s247] sm:$0xf] %v248
  %s250 = scalar_lea.vmem %s0, 168
  %v251 = vld [vmem:[%s250] sm:$0xff]
  %s252 = scalar_lea.vmem %s1, 468
  %v253 = vpack.c.bf16 0.0, %v251
  %254 = vst [vmem:[%s252] sm:$0xf] %v253
  %s255 = scalar_lea.vmem %s0, 808
  %v256 = vld [vmem:[%s255] sm:$0xff]
  %s257 = scalar_lea.vmem %s1, 148
  %v258 = vpack.c.bf16 0.0, %v256
  %259 = vst [vmem:[%s257] sm:$0xf] %v258
  %s260 = scalar_lea.vmem %s0, 424
  %v261 = vld [vmem:[%s260] sm:$0xff]
  %s262 = scalar_lea.vmem %s1, 340
  %v263 = vpack.c.bf16 0.0, %v261
  %264 = vst [vmem:[%s262] sm:$0xf] %v263
  %s265 = scalar_lea.vmem %s0, 40
  %v266 = vld [vmem:[%s265] sm:$0xff]
  %s267 = scalar_lea.vmem %s1, 532
  %v268 = vpack.c.bf16 0.0, %v266
  %269 = vst [vmem:[%s267] sm:$0xf] %v268
  %s270 = scalar_lea.vmem %s0, 1072
  %v271 = vld [vmem:[%s270] sm:$0xff]
  %s272 = scalar_lea.vmem %s1, 24
  %v273 = vpack.c.bf16 0.0, %v271
  %274 = vst [vmem:[%s272] sm:$0xf] %v273
  %s275 = scalar_lea.vmem %s0, 688
  %v276 = vld [vmem:[%s275] sm:$0xff]
  %s277 = scalar_lea.vmem %s1, 216
  %v278 = vpack.c.bf16 0.0, %v276
  %279 = vst [vmem:[%s277] sm:$0xf] %v278
  %s280 = scalar_lea.vmem %s0, 304
  %v281 = vld [vmem:[%s280] sm:$0xff]
  %s282 = scalar_lea.vmem %s1, 408
  %v283 = vpack.c.bf16 0.0, %v281
  %284 = vst [vmem:[%s282] sm:$0xf] %v283
  %s285 = scalar_lea.vmem %s0, 944
  %v286 = vld [vmem:[%s285] sm:$0xff]
  %s287 = scalar_lea.vmem %s1, 88
  %v288 = vpack.c.bf16 0.0, %v286
  %289 = vst [vmem:[%s287] sm:$0xf] %v288
  %s290 = scalar_lea.vmem %s0, 560
  %v291 = vld [vmem:[%s290] sm:$0xff]
  %s292 = scalar_lea.vmem %s1, 280
  %v293 = vpack.c.bf16 0.0, %v291
  %294 = vst [vmem:[%s292] sm:$0xf] %v293
  %s295 = scalar_lea.vmem %s0, 176
  %v296 = vld [vmem:[%s295] sm:$0xff]
  %s297 = scalar_lea.vmem %s1, 472
  %v298 = vpack.c.bf16 0.0, %v296
  %299 = vst [vmem:[%s297] sm:$0xf] %v298
  %s300 = scalar_lea.vmem %s0, 816
  %v301 = vld [vmem:[%s300] sm:$0xff]
  %s302 = scalar_lea.vmem %s1, 152
  %v303 = vpack.c.bf16 0.0, %v301
  %304 = vst [vmem:[%s302] sm:$0xf] %v303
  %s305 = scalar_lea.vmem %s0, 432
  %v306 = vld [vmem:[%s305] sm:$0xff]
  %s307 = scalar_lea.vmem %s1, 344
  %v308 = vpack.c.bf16 0.0, %v306
  %309 = vst [vmem:[%s307] sm:$0xf] %v308
  %s310 = scalar_lea.vmem %s0, 48
  %v311 = vld [vmem:[%s310] sm:$0xff]
  %s312 = scalar_lea.vmem %s1, 536
  %v313 = vpack.c.bf16 0.0, %v311
  %314 = vst [vmem:[%s312] sm:$0xf] %v313
  %s315 = scalar_lea.vmem %s0, 1080
  %v316 = vld [vmem:[%s315] sm:$0xff]
  %s317 = scalar_lea.vmem %s1, 28
  %v318 = vpack.c.bf16 0.0, %v316
  %319 = vst [vmem:[%s317] sm:$0xf] %v318
  %s320 = scalar_lea.vmem %s0, 696
  %v321 = vld [vmem:[%s320] sm:$0xff]
  %s322 = scalar_lea.vmem %s1, 220
  %v323 = vpack.c.bf16 0.0, %v321
  %324 = vst [vmem:[%s322] sm:$0xf] %v323
  %s325 = scalar_lea.vmem %s0, 312
  %v326 = vld [vmem:[%s325] sm:$0xff]
  %s327 = scalar_lea.vmem %s1, 412
  %v328 = vpack.c.bf16 0.0, %v326
  %329 = vst [vmem:[%s327] sm:$0xf] %v328
  %s330 = scalar_lea.vmem %s0, 952
  %v331 = vld [vmem:[%s330] sm:$0xff]
  %s332 = scalar_lea.vmem %s1, 92
  %v333 = vpack.c.bf16 0.0, %v331
  %334 = vst [vmem:[%s332] sm:$0xf] %v333
  %s335 = scalar_lea.vmem %s0, 568
  %v336 = vld [vmem:[%s335] sm:$0xff]
  %s337 = scalar_lea.vmem %s1, 284
  %v338 = vpack.c.bf16 0.0, %v336
  %339 = vst [vmem:[%s337] sm:$0xf] %v338
  %s340 = scalar_lea.vmem %s0, 184
  %v341 = vld [vmem:[%s340] sm:$0xff]
  %s342 = scalar_lea.vmem %s1, 476
  %v343 = vpack.c.bf16 0.0, %v341
  %344 = vst [vmem:[%s342] sm:$0xf] %v343
  %s345 = scalar_lea.vmem %s0, 824
  %v346 = vld [vmem:[%s345] sm:$0xff]
  %s347 = scalar_lea.vmem %s1, 156
  %v348 = vpack.c.bf16 0.0, %v346
  %349 = vst [vmem:[%s347] sm:$0xf] %v348
  %s350 = scalar_lea.vmem %s0, 440
  %v351 = vld [vmem:[%s350] sm:$0xff]
  %s352 = scalar_lea.vmem %s1, 348
  %v353 = vpack.c.bf16 0.0, %v351
  %354 = vst [vmem:[%s352] sm:$0xf] %v353
  %s355 = scalar_lea.vmem %s0, 56
  %v356 = vld [vmem:[%s355] sm:$0xff]
  %s357 = scalar_lea.vmem %s1, 540
  %v358 = vpack.c.bf16 0.0, %v356
  %359 = vst [vmem:[%s357] sm:$0xf] %v358
  %s360 = scalar_lea.vmem %s0, 1088
  %v361 = vld [vmem:[%s360] sm:$0xff]
  %s362 = scalar_lea.vmem %s1, 32
  %v363 = vpack.c.bf16 0.0, %v361
  %364 = vst [vmem:[%s362] sm:$0xf] %v363
  %s365 = scalar_lea.vmem %s0, 704
  %v366 = vld [vmem:[%s365] sm:$0xff]
  %s367 = scalar_lea.vmem %s1, 224
  %v368 = vpack.c.bf16 0.0, %v366
  %369 = vst [vmem:[%s367] sm:$0xf] %v368
  %s370 = scalar_lea.vmem %s0, 320
  %v371 = vld [vmem:[%s370] sm:$0xff]
  %s372 = scalar_lea.vmem %s1, 416
  %v373 = vpack.c.bf16 0.0, %v371
  %374 = vst [vmem:[%s372] sm:$0xf] %v373
  %s375 = scalar_lea.vmem %s0, 960
  %v376 = vld [vmem:[%s375] sm:$0xff]
  %s377 = scalar_lea.vmem %s1, 96
  %v378 = vpack.c.bf16 0.0, %v376
  %379 = vst [vmem:[%s377] sm:$0xf] %v378
  %s380 = scalar_lea.vmem %s0, 576
  %v381 = vld [vmem:[%s380] sm:$0xff]
  %s382 = scalar_lea.vmem %s1, 288
  %v383 = vpack.c.bf16 0.0, %v381
  %384 = vst [vmem:[%s382] sm:$0xf] %v383
  %s385 = scalar_lea.vmem %s0, 192
  %v386 = vld [vmem:[%s385] sm:$0xff]
  %s387 = scalar_lea.vmem %s1, 480
  %v388 = vpack.c.bf16 0.0, %v386
  %389 = vst [vmem:[%s387] sm:$0xf] %v388
  %s390 = scalar_lea.vmem %s0, 832
  %v391 = vld [vmem:[%s390] sm:$0xff]
  %s392 = scalar_lea.vmem %s1, 160
  %v393 = vpack.c.bf16 0.0, %v391
  %394 = vst [vmem:[%s392] sm:$0xf] %v393
  %s395 = scalar_lea.vmem %s0, 448
  %v396 = vld [vmem:[%s395] sm:$0xff]
  %s397 = scalar_lea.vmem %s1, 352
  %v398 = vpack.c.bf16 0.0, %v396
  %399 = vst [vmem:[%s397] sm:$0xf] %v398
  %s400 = scalar_lea.vmem %s0, 64
  %v401 = vld [vmem:[%s400] sm:$0xff]
  %s402 = scalar_lea.vmem %s1, 544
  %v403 = vpack.c.bf16 0.0, %v401
  %404 = vst [vmem:[%s402] sm:$0xf] %v403
  %s405 = scalar_lea.vmem %s0, 1096
  %v406 = vld [vmem:[%s405] sm:$0xff]
  %s407 = scalar_lea.vmem %s1, 36
  %v408 = vpack.c.bf16 0.0, %v406
  %409 = vst [vmem:[%s407] sm:$0xf] %v408
  %s410 = scalar_lea.vmem %s0, 712
  %v411 = vld [vmem:[%s410] sm:$0xff]
  %s412 = scalar_lea.vmem %s1, 228
  %v413 = vpack.c.bf16 0.0, %v411
  %414 = vst [vmem:[%s412] sm:$0xf] %v413
  %s415 = scalar_lea.vmem %s0, 328
  %v416 = vld [vmem:[%s415] sm:$0xff]
  %s417 = scalar_lea.vmem %s1, 420
  %v418 = vpack.c.bf16 0.0, %v416
  %419 = vst [vmem:[%s417] sm:$0xf] %v418
  %s420 = scalar_lea.vmem %s0, 968
  %v421 = vld [vmem:[%s420] sm:$0xff]
  %s422 = scalar_lea.vmem %s1, 100
  %v423 = vpack.c.bf16 0.0, %v421
  %424 = vst [vmem:[%s422] sm:$0xf] %v423
  %s425 = scalar_lea.vmem %s0, 584
  %v426 = vld [vmem:[%s425] sm:$0xff]
  %s427 = scalar_lea.vmem %s1, 292
  %v428 = vpack.c.bf16 0.0, %v426
  %429 = vst [vmem:[%s427] sm:$0xf] %v428
  %s430 = scalar_lea.vmem %s0, 200
  %v431 = vld [vmem:[%s430] sm:$0xff]
  %s432 = scalar_lea.vmem %s1, 484
  %v433 = vpack.c.bf16 0.0, %v431
  %434 = vst [vmem:[%s432] sm:$0xf] %v433
  %s435 = scalar_lea.vmem %s0, 840
  %v436 = vld [vmem:[%s435] sm:$0xff]
  %s437 = scalar_lea.vmem %s1, 164
  %v438 = vpack.c.bf16 0.0, %v436
  %439 = vst [vmem:[%s437] sm:$0xf] %v438
  %s440 = scalar_lea.vmem %s0, 456
  %v441 = vld [vmem:[%s440] sm:$0xff]
  %s442 = scalar_lea.vmem %s1, 356
  %v443 = vpack.c.bf16 0.0, %v441
  %444 = vst [vmem:[%s442] sm:$0xf] %v443
  %s445 = scalar_lea.vmem %s0, 72
  %v446 = vld [vmem:[%s445] sm:$0xff]
  %s447 = scalar_lea.vmem %s1, 548
  %v448 = vpack.c.bf16 0.0, %v446
  %449 = vst [vmem:[%s447] sm:$0xf] %v448
  %s450 = scalar_lea.vmem %s0, 1104
  %v451 = vld [vmem:[%s450] sm:$0xff]
  %s452 = scalar_lea.vmem %s1, 40
  %v453 = vpack.c.bf16 0.0, %v451
  %454 = vst [vmem:[%s452] sm:$0xf] %v453
  %s455 = scalar_lea.vmem %s0, 720
  %v456 = vld [vmem:[%s455] sm:$0xff]
  %s457 = scalar_lea.vmem %s1, 232
  %v458 = vpack.c.bf16 0.0, %v456
  %459 = vst [vmem:[%s457] sm:$0xf] %v458
  %s460 = scalar_lea.vmem %s0, 336
  %v461 = vld [vmem:[%s460] sm:$0xff]
  %s462 = scalar_lea.vmem %s1, 424
  %v463 = vpack.c.bf16 0.0, %v461
  %464 = vst [vmem:[%s462] sm:$0xf] %v463
  %s465 = scalar_lea.vmem %s0, 976
  %v466 = vld [vmem:[%s465] sm:$0xff]
  %s467 = scalar_lea.vmem %s1, 104
  %v468 = vpack.c.bf16 0.0, %v466
  %469 = vst [vmem:[%s467] sm:$0xf] %v468
  %s470 = scalar_lea.vmem %s0, 592
  %v471 = vld [vmem:[%s470] sm:$0xff]
  %s472 = scalar_lea.vmem %s1, 296
  %v473 = vpack.c.bf16 0.0, %v471
  %474 = vst [vmem:[%s472] sm:$0xf] %v473
  %s475 = scalar_lea.vmem %s0, 208
  %v476 = vld [vmem:[%s475] sm:$0xff]
  %s477 = scalar_lea.vmem %s1, 488
  %v478 = vpack.c.bf16 0.0, %v476
  %479 = vst [vmem:[%s477] sm:$0xf] %v478
  %s480 = scalar_lea.vmem %s0, 848
  %v481 = vld [vmem:[%s480] sm:$0xff]
  %s482 = scalar_lea.vmem %s1, 168
  %v483 = vpack.c.bf16 0.0, %v481
  %484 = vst [vmem:[%s482] sm:$0xf] %v483
  %s485 = scalar_lea.vmem %s0, 464
  %v486 = vld [vmem:[%s485] sm:$0xff]
  %s487 = scalar_lea.vmem %s1, 360
  %v488 = vpack.c.bf16 0.0, %v486
  %489 = vst [vmem:[%s487] sm:$0xf] %v488
  %s490 = scalar_lea.vmem %s0, 80
  %v491 = vld [vmem:[%s490] sm:$0xff]
  %s492 = scalar_lea.vmem %s1, 552
  %v493 = vpack.c.bf16 0.0, %v491
  %494 = vst [vmem:[%s492] sm:$0xf] %v493
  %s495 = scalar_lea.vmem %s0, 1112
  %v496 = vld [vmem:[%s495] sm:$0xff]
  %s497 = scalar_lea.vmem %s1, 44
  %v498 = vpack.c.bf16 0.0, %v496
  %499 = vst [vmem:[%s497] sm:$0xf] %v498
  %s500 = scalar_lea.vmem %s0, 728
  %v501 = vld [vmem:[%s500] sm:$0xff]
  %s502 = scalar_lea.vmem %s1, 236
  %v503 = vpack.c.bf16 0.0, %v501
  %504 = vst [vmem:[%s502] sm:$0xf] %v503
  %s505 = scalar_lea.vmem %s0, 344
  %v506 = vld [vmem:[%s505] sm:$0xff]
  %s507 = scalar_lea.vmem %s1, 428
  %v508 = vpack.c.bf16 0.0, %v506
  %509 = vst [vmem:[%s507] sm:$0xf] %v508
  %s510 = scalar_lea.vmem %s0, 984
  %v511 = vld [vmem:[%s510] sm:$0xff]
  %s512 = scalar_lea.vmem %s1, 108
  %v513 = vpack.c.bf16 0.0, %v511
  %514 = vst [vmem:[%s512] sm:$0xf] %v513
  %s515 = scalar_lea.vmem %s0, 600
  %v516 = vld [vmem:[%s515] sm:$0xff]
  %s517 = scalar_lea.vmem %s1, 300
  %v518 = vpack.c.bf16 0.0, %v516
  %519 = vst [vmem:[%s517] sm:$0xf] %v518
  %s520 = scalar_lea.vmem %s0, 216
  %v521 = vld [vmem:[%s520] sm:$0xff]
  %s522 = scalar_lea.vmem %s1, 492
  %v523 = vpack.c.bf16 0.0, %v521
  %524 = vst [vmem:[%s522] sm:$0xf] %v523
  %s525 = scalar_lea.vmem %s0, 856
  %v526 = vld [vmem:[%s525] sm:$0xff]
  %s527 = scalar_lea.vmem %s1, 172
  %v528 = vpack.c.bf16 0.0, %v526
  %529 = vst [vmem:[%s527] sm:$0xf] %v528
  %s530 = scalar_lea.vmem %s0, 472
  %v531 = vld [vmem:[%s530] sm:$0xff]
  %s532 = scalar_lea.vmem %s1, 364
  %v533 = vpack.c.bf16 0.0, %v531
  %534 = vst [vmem:[%s532] sm:$0xf] %v533
  %s535 = scalar_lea.vmem %s0, 88
  %v536 = vld [vmem:[%s535] sm:$0xff]
  %s537 = scalar_lea.vmem %s1, 556
  %v538 = vpack.c.bf16 0.0, %v536
  %539 = vst [vmem:[%s537] sm:$0xf] %v538
  %s540 = scalar_lea.vmem %s0, 1120
  %v541 = vld [vmem:[%s540] sm:$0xff]
  %s542 = scalar_lea.vmem %s1, 48
  %v543 = vpack.c.bf16 0.0, %v541
  %544 = vst [vmem:[%s542] sm:$0xf] %v543
  %s545 = scalar_lea.vmem %s0, 736
  %v546 = vld [vmem:[%s545] sm:$0xff]
  %s547 = scalar_lea.vmem %s1, 240
  %v548 = vpack.c.bf16 0.0, %v546
  %549 = vst [vmem:[%s547] sm:$0xf] %v548
  %s550 = scalar_lea.vmem %s0, 352
  %v551 = vld [vmem:[%s550] sm:$0xff]
  %s552 = scalar_lea.vmem %s1, 432
  %v553 = vpack.c.bf16 0.0, %v551
  %554 = vst [vmem:[%s552] sm:$0xf] %v553
  %s555 = scalar_lea.vmem %s0, 992
  %v556 = vld [vmem:[%s555] sm:$0xff]
  %s557 = scalar_lea.vmem %s1, 112
  %v558 = vpack.c.bf16 0.0, %v556
  %559 = vst [vmem:[%s557] sm:$0xf] %v558
  %s560 = scalar_lea.vmem %s0, 608
  %v561 = vld [vmem:[%s560] sm:$0xff]
  %s562 = scalar_lea.vmem %s1, 304
  %v563 = vpack.c.bf16 0.0, %v561
  %564 = vst [vmem:[%s562] sm:$0xf] %v563
  %s565 = scalar_lea.vmem %s0, 224
  %v566 = vld [vmem:[%s565] sm:$0xff]
  %s567 = scalar_lea.vmem %s1, 496
  %v568 = vpack.c.bf16 0.0, %v566
  %569 = vst [vmem:[%s567] sm:$0xf] %v568
  %s570 = scalar_lea.vmem %s0, 864
  %v571 = vld [vmem:[%s570] sm:$0xff]
  %s572 = scalar_lea.vmem %s1, 176
  %v573 = vpack.c.bf16 0.0, %v571
  %574 = vst [vmem:[%s572] sm:$0xf] %v573
  %s575 = scalar_lea.vmem %s0, 480
  %v576 = vld [vmem:[%s575] sm:$0xff]
  %s577 = scalar_lea.vmem %s1, 368
  %v578 = vpack.c.bf16 0.0, %v576
  %579 = vst [vmem:[%s577] sm:$0xf] %v578
  %s580 = scalar_lea.vmem %s0, 96
  %v581 = vld [vmem:[%s580] sm:$0xff]
  %s582 = scalar_lea.vmem %s1, 560
  %v583 = vpack.c.bf16 0.0, %v581
  %584 = vst [vmem:[%s582] sm:$0xf] %v583
  %s585 = scalar_lea.vmem %s0, 1128
  %v586 = vld [vmem:[%s585] sm:$0xff]
  %s587 = scalar_lea.vmem %s1, 52
  %v588 = vpack.c.bf16 0.0, %v586
  %589 = vst [vmem:[%s587] sm:$0xf] %v588
  %s590 = scalar_lea.vmem %s0, 744
  %v591 = vld [vmem:[%s590] sm:$0xff]
  %s592 = scalar_lea.vmem %s1, 244
  %v593 = vpack.c.bf16 0.0, %v591
  %594 = vst [vmem:[%s592] sm:$0xf] %v593
  %s595 = scalar_lea.vmem %s0, 360
  %v596 = vld [vmem:[%s595] sm:$0xff]
  %s597 = scalar_lea.vmem %s1, 436
  %v598 = vpack.c.bf16 0.0, %v596
  %599 = vst [vmem:[%s597] sm:$0xf] %v598
  %s600 = scalar_lea.vmem %s0, 1000
  %v601 = vld [vmem:[%s600] sm:$0xff]
  %s602 = scalar_lea.vmem %s1, 116
  %v603 = vpack.c.bf16 0.0, %v601
  %604 = vst [vmem:[%s602] sm:$0xf] %v603
  %s605 = scalar_lea.vmem %s0, 616
  %v606 = vld [vmem:[%s605] sm:$0xff]
  %s607 = scalar_lea.vmem %s1, 308
  %v608 = vpack.c.bf16 0.0, %v606
  %609 = vst [vmem:[%s607] sm:$0xf] %v608
  %s610 = scalar_lea.vmem %s0, 232
  %v611 = vld [vmem:[%s610] sm:$0xff]
  %s612 = scalar_lea.vmem %s1, 500
  %v613 = vpack.c.bf16 0.0, %v611
  %614 = vst [vmem:[%s612] sm:$0xf] %v613
  %s615 = scalar_lea.vmem %s0, 872
  %v616 = vld [vmem:[%s615] sm:$0xff]
  %s617 = scalar_lea.vmem %s1, 180
  %v618 = vpack.c.bf16 0.0, %v616
  %619 = vst [vmem:[%s617] sm:$0xf] %v618
  %s620 = scalar_lea.vmem %s0, 488
  %v621 = vld [vmem:[%s620] sm:$0xff]
  %s622 = scalar_lea.vmem %s1, 372
  %v623 = vpack.c.bf16 0.0, %v621
  %624 = vst [vmem:[%s622] sm:$0xf] %v623
  %s625 = scalar_lea.vmem %s0, 104
  %v626 = vld [vmem:[%s625] sm:$0xff]
  %s627 = scalar_lea.vmem %s1, 564
  %v628 = vpack.c.bf16 0.0, %v626
  %629 = vst [vmem:[%s627] sm:$0xf] %v628
  %s630 = scalar_lea.vmem %s0, 1136
  %v631 = vld [vmem:[%s630] sm:$0xff]
  %s632 = scalar_lea.vmem %s1, 56
  %v633 = vpack.c.bf16 0.0, %v631
  %634 = vst [vmem:[%s632] sm:$0xf] %v633
  %s635 = scalar_lea.vmem %s0, 752
  %v636 = vld [vmem:[%s635] sm:$0xff]
  %s637 = scalar_lea.vmem %s1, 248
  %v638 = vpack.c.bf16 0.0, %v636
  %639 = vst [vmem:[%s637] sm:$0xf] %v638
  %s640 = scalar_lea.vmem %s0, 368
  %v641 = vld [vmem:[%s640] sm:$0xff]
  %s642 = scalar_lea.vmem %s1, 440
  %v643 = vpack.c.bf16 0.0, %v641
  %644 = vst [vmem:[%s642] sm:$0xf] %v643
  %s645 = scalar_lea.vmem %s0, 1008
  %v646 = vld [vmem:[%s645] sm:$0xff]
  %s647 = scalar_lea.vmem %s1, 120
  %v648 = vpack.c.bf16 0.0, %v646
  %649 = vst [vmem:[%s647] sm:$0xf] %v648
  %s650 = scalar_lea.vmem %s0, 624
  %v651 = vld [vmem:[%s650] sm:$0xff]
  %s652 = scalar_lea.vmem %s1, 312
  %v653 = vpack.c.bf16 0.0, %v651
  %654 = vst [vmem:[%s652] sm:$0xf] %v653
  %s655 = scalar_lea.vmem %s0, 240
  %v656 = vld [vmem:[%s655] sm:$0xff]
  %s657 = scalar_lea.vmem %s1, 504
  %v658 = vpack.c.bf16 0.0, %v656
  %659 = vst [vmem:[%s657] sm:$0xf] %v658
  %s660 = scalar_lea.vmem %s0, 880
  %v661 = vld [vmem:[%s660] sm:$0xff]
  %s662 = scalar_lea.vmem %s1, 184
  %v663 = vpack.c.bf16 0.0, %v661
  %664 = vst [vmem:[%s662] sm:$0xf] %v663
  %s665 = scalar_lea.vmem %s0, 496
  %v666 = vld [vmem:[%s665] sm:$0xff]
  %s667 = scalar_lea.vmem %s1, 376
  %v668 = vpack.c.bf16 0.0, %v666
  %669 = vst [vmem:[%s667] sm:$0xf] %v668
  %s670 = scalar_lea.vmem %s0, 112
  %v671 = vld [vmem:[%s670] sm:$0xff]
  %s672 = scalar_lea.vmem %s1, 568
  %v673 = vpack.c.bf16 0.0, %v671
  %674 = vst [vmem:[%s672] sm:$0xf] %v673
  %s675 = scalar_lea.vmem %s0, 1144
  %v676 = vld [vmem:[%s675] sm:$0xff]
  %s677 = scalar_lea.vmem %s1, 60
  %v678 = vpack.c.bf16 0.0, %v676
  %679 = vst [vmem:[%s677] sm:$0xf] %v678
  %s680 = scalar_lea.vmem %s0, 760
  %v681 = vld [vmem:[%s680] sm:$0xff]
  %s682 = scalar_lea.vmem %s1, 252
  %v683 = vpack.c.bf16 0.0, %v681
  %684 = vst [vmem:[%s682] sm:$0xf] %v683
  %s685 = scalar_lea.vmem %s0, 376
  %v686 = vld [vmem:[%s685] sm:$0xff]
  %s687 = scalar_lea.vmem %s1, 444
  %v688 = vpack.c.bf16 0.0, %v686
  %689 = vst [vmem:[%s687] sm:$0xf] %v688
  %s690 = scalar_lea.vmem %s0, 1016
  %v691 = vld [vmem:[%s690] sm:$0xff]
  %s692 = scalar_lea.vmem %s1, 124
  %v693 = vpack.c.bf16 0.0, %v691
  %694 = vst [vmem:[%s692] sm:$0xf] %v693
  %s695 = scalar_lea.vmem %s0, 632
  %v696 = vld [vmem:[%s695] sm:$0xff]
  %s697 = scalar_lea.vmem %s1, 316
  %v698 = vpack.c.bf16 0.0, %v696
  %699 = vst [vmem:[%s697] sm:$0xf] %v698
  %s700 = scalar_lea.vmem %s0, 248
  %v701 = vld [vmem:[%s700] sm:$0xff]
  %s702 = scalar_lea.vmem %s1, 508
  %v703 = vpack.c.bf16 0.0, %v701
  %704 = vst [vmem:[%s702] sm:$0xf] %v703
  %s705 = scalar_lea.vmem %s0, 888
  %v706 = vld [vmem:[%s705] sm:$0xff]
  %s707 = scalar_lea.vmem %s1, 188
  %v708 = vpack.c.bf16 0.0, %v706
  %709 = vst [vmem:[%s707] sm:$0xf] %v708
  %s710 = scalar_lea.vmem %s0, 504
  %v711 = vld [vmem:[%s710] sm:$0xff]
  %s712 = scalar_lea.vmem %s1, 380
  %v713 = vpack.c.bf16 0.0, %v711
  %714 = vst [vmem:[%s712] sm:$0xf] %v713
  %s715 = scalar_lea.vmem %s0, 120
  %v716 = vld [vmem:[%s715] sm:$0xff]
  %s717 = scalar_lea.vmem %s1, 572
  %v718 = vpack.c.bf16 0.0, %v716
  %719 = vst [vmem:[%s717] sm:$0xf] %v718

// kernel: reverse.18
$region0: #{reverse.18}
  #allocation0 [shape = 's32[1]{0}', space=sflag, size = 0x4, scoped, tag = 'scoped memory for reverse.18']
  %s0 = inlined_call_operand.vmem [shape: f32[256,128,3,3], index: 0, kind: input, shape index: {}]
  %s1 = inlined_call_operand.vmem [shape: bf16[256,128,3,3], index: 1, kind: output, shape index: {}]
  %s2 = scalar_lea.vmem %s0, 2048
  %v3 = vld [vmem:[%s2] sm:$0xff]
  %v4 = vpack.c.bf16 0.0, %v3
  %5 = vst [vmem:[%s1] sm:$0xf] %v4
  %s6 = scalar_lea.vmem %s0, 1280
  %v7 = vld [vmem:[%s6] sm:$0xff]
  %s8 = scalar_lea.vmem %s1, 384
  %v9 = vpack.c.bf16 0.0, %v7
  %10 = vst [vmem:[%s8] sm:$0xf] %v9
  %s11 = scalar_lea.vmem %s0, 512
  %v12 = vld [vmem:[%s11] sm:$0xff]
  %s13 = scalar_lea.vmem %s1, 768
  %v14 = vpack.c.bf16 0.0, %v12
  %15 = vst [vmem:[%s13] sm:$0xf] %v14
  %s16 = scalar_lea.vmem %s0, 1792
  %v17 = vld [vmem:[%s16] sm:$0xff]
  %s18 = scalar_lea.vmem %s1, 128
  %v19 = vpack.c.bf16 0.0, %v17
  %20 = vst [vmem:[%s18] sm:$0xf] %v19
  %s21 = scalar_lea.vmem %s0, 1024
  %v22 = vld [vmem:[%s21] sm:$0xff]
  %s23 = scalar_lea.vmem %s1, 512
  %v24 = vpack.c.bf16 0.0, %v22
  %25 = vst [vmem:[%s23] sm:$0xf] %v24
  %s26 = scalar_lea.vmem %s0, 256
  %v27 = vld [vmem:[%s26] sm:$0xff]
  %s28 = scalar_lea.vmem %s1, 896
  %v29 = vpack.c.bf16 0.0, %v27
  %30 = vst [vmem:[%s28] sm:$0xf] %v29
  %s31 = scalar_lea.vmem %s0, 1536
  %v32 = vld [vmem:[%s31] sm:$0xff]
  %s33 = scalar_lea.vmem %s1, 256
  %v34 = vpack.c.bf16 0.0, %v32
  %35 = vst [vmem:[%s33] sm:$0xf] %v34
  %s36 = scalar_lea.vmem %s0, 768
  %v37 = vld [vmem:[%s36] sm:$0xff]
  %s38 = scalar_lea.vmem %s1, 640
  %v39 = vpack.c.bf16 0.0, %v37
  %40 = vst [vmem:[%s38] sm:$0xf] %v39
  %v41 = vld [vmem:[%s0] sm:$0xff]
  %s42 = scalar_lea.vmem %s1, 1024
  %v43 = vpack.c.bf16 0.0, %v41
  %44 = vst [vmem:[%s42] sm:$0xf] %v43
  %s45 = scalar_lea.vmem %s0, 2056
  %v46 = vld [vmem:[%s45] sm:$0xff]
  %s47 = scalar_lea.vmem %s1, 4
  %v48 = vpack.c.bf16 0.0, %v46
  %49 = vst [vmem:[%s47] sm:$0xf] %v48
  %s50 = scalar_lea.vmem %s0, 1288
  %v51 = vld [vmem:[%s50] sm:$0xff]
  %s52 = scalar_lea.vmem %s1, 388
  %v53 = vpack.c.bf16 0.0, %v51
  %54 = vst [vmem:[%s52] sm:$0xf] %v53
  %s55 = scalar_lea.vmem %s0, 520
  %v56 = vld [vmem:[%s55] sm:$0xff]
  %s57 = scalar_lea.vmem %s1, 772
  %v58 = vpack.c.bf16 0.0, %v56
  %59 = vst [vmem:[%s57] sm:$0xf] %v58
  %s60 = scalar_lea.vmem %s0, 1800
  %v61 = vld [vmem:[%s60] sm:$0xff]
  %s62 = scalar_lea.vmem %s1, 132
  %v63 = vpack.c.bf16 0.0, %v61
  %64 = vst [vmem:[%s62] sm:$0xf] %v63
  %s65 = scalar_lea.vmem %s0, 1032
  %v66 = vld [vmem:[%s65] sm:$0xff]
  %s67 = scalar_lea.vmem %s1, 516
  %v68 = vpack.c.bf16 0.0, %v66
  %69 = vst [vmem:[%s67] sm:$0xf] %v68
  %s70 = scalar_lea.vmem %s0, 264
  %v71 = vld [vmem:[%s70] sm:$0xff]
  %s72 = scalar_lea.vmem %s1, 900
  %v73 = vpack.c.bf16 0.0, %v71
  %74 = vst [vmem:[%s72] sm:$0xf] %v73
  %s75 = scalar_lea.vmem %s0, 1544
  %v76 = vld [vmem:[%s75] sm:$0xff]
  %s77 = scalar_lea.vmem %s1, 260
  %v78 = vpack.c.bf16 0.0, %v76
  %79 = vst [vmem:[%s77] sm:$0xf] %v78
  %s80 = scalar_lea.vmem %s0, 776
  %v81 = vld [vmem:[%s80] sm:$0xff]
  %s82 = scalar_lea.vmem %s1, 644
  %v83 = vpack.c.bf16 0.0, %v81
  %84 = vst [vmem:[%s82] sm:$0xf] %v83
  %s85 = scalar_lea.vmem %s0, 8
  %v86 = vld [vmem:[%s85] sm:$0xff]
  %s87 = scalar_lea.vmem %s1, 1028
  %v88 = vpack.c.bf16 0.0, %v86
  %89 = vst [vmem:[%s87] sm:$0xf] %v88
  %s90 = scalar_lea.vmem %s0, 2064
  %v91 = vld [vmem:[%s90] sm:$0xff]
  %s92 = scalar_lea.vmem %s1, 8
  %v93 = vpack.c.bf16 0.0, %v91
  %94 = vst [vmem:[%s92] sm:$0xf] %v93
  %s95 = scalar_lea.vmem %s0, 1296
  %v96 = vld [vmem:[%s95] sm:$0xff]
  %s97 = scalar_lea.vmem %s1, 392
  %v98 = vpack.c.bf16 0.0, %v96
  %99 = vst [vmem:[%s97] sm:$0xf] %v98
  %s100 = scalar_lea.vmem %s0, 528
  %v101 = vld [vmem:[%s100] sm:$0xff]
  %s102 = scalar_lea.vmem %s1, 776
  %v103 = vpack.c.bf16 0.0, %v101
  %104 = vst [vmem:[%s102] sm:$0xf] %v103
  %s105 = scalar_lea.vmem %s0, 1808
  %v106 = vld [vmem:[%s105] sm:$0xff]
  %s107 = scalar_lea.vmem %s1, 136
  %v108 = vpack.c.bf16 0.0, %v106
  %109 = vst [vmem:[%s107] sm:$0xf] %v108
  %s110 = scalar_lea.vmem %s0, 1040
  %v111 = vld [vmem:[%s110] sm:$0xff]
  %s112 = scalar_lea.vmem %s1, 520
  %v113 = vpack.c.bf16 0.0, %v111
  %114 = vst [vmem:[%s112] sm:$0xf] %v113
  %s115 = scalar_lea.vmem %s0, 272
  %v116 = vld [vmem:[%s115] sm:$0xff]
  %s117 = scalar_lea.vmem %s1, 904
  %v118 = vpack.c.bf16 0.0, %v116
  %119 = vst [vmem:[%s117] sm:$0xf] %v118
  %s120 = scalar_lea.vmem %s0, 1552
  %v121 = vld [vmem:[%s120] sm:$0xff]
  %s122 = scalar_lea.vmem %s1, 264
  %v123 = vpack.c.bf16 0.0, %v121
  %124 = vst [vmem:[%s122] sm:$0xf] %v123
  %s125 = scalar_lea.vmem %s0, 784
  %v126 = vld [vmem:[%s125] sm:$0xff]
  %s127 = scalar_lea.vmem %s1, 648
  %v128 = vpack.c.bf16 0.0, %v126
  %129 = vst [vmem:[%s127] sm:$0xf] %v128
  %s130 = scalar_lea.vmem %s0, 16
  %v131 = vld [vmem:[%s130] sm:$0xff]
  %s132 = scalar_lea.vmem %s1, 1032
  %v133 = vpack.c.bf16 0.0, %v131
  %134 = vst [vmem:[%s132] sm:$0xf] %v133
  %s135 = scalar_lea.vmem %s0, 2072
  %v136 = vld [vmem:[%s135] sm:$0xff]
  %s137 = scalar_lea.vmem %s1, 12
  %v138 = vpack.c.bf16 0.0, %v136
  %139 = vst [vmem:[%s137] sm:$0xf] %v138
  %s140 = scalar_lea.vmem %s0, 1304
  %v141 = vld [vmem:[%s140] sm:$0xff]
  %s142 = scalar_lea.vmem %s1, 396
  %v143 = vpack.c.bf16 0.0, %v141
  %144 = vst [vmem:[%s142] sm:$0xf] %v143
  %s145 = scalar_lea.vmem %s0, 536
  %v146 = vld [vmem:[%s145] sm:$0xff]
  %s147 = scalar_lea.vmem %s1, 780
  %v148 = vpack.c.bf16 0.0, %v146
  %149 = vst [vmem:[%s147] sm:$0xf] %v148
  %s150 = scalar_lea.vmem %s0, 1816
  %v151 = vld [vmem:[%s150] sm:$0xff]
  %s152 = scalar_lea.vmem %s1, 140
  %v153 = vpack.c.bf16 0.0, %v151
  %154 = vst [vmem:[%s152] sm:$0xf] %v153
  %s155 = scalar_lea.vmem %s0, 1048
  %v156 = vld [vmem:[%s155] sm:$0xff]
  %s157 = scalar_lea.vmem %s1, 524
  %v158 = vpack.c.bf16 0.0, %v156
  %159 = vst [vmem:[%s157] sm:$0xf] %v158
  %s160 = scalar_lea.vmem %s0, 280
  %v161 = vld [vmem:[%s160] sm:$0xff]
  %s162 = scalar_lea.vmem %s1, 908
  %v163 = vpack.c.bf16 0.0, %v161
  %164 = vst [vmem:[%s162] sm:$0xf] %v163
  %s165 = scalar_lea.vmem %s0, 1560
  %v166 = vld [vmem:[%s165] sm:$0xff]
  %s167 = scalar_lea.vmem %s1, 268
  %v168 = vpack.c.bf16 0.0, %v166
  %169 = vst [vmem:[%s167] sm:$0xf] %v168
  %s170 = scalar_lea.vmem %s0, 792
  %v171 = vld [vmem:[%s170] sm:$0xff]
  %s172 = scalar_lea.vmem %s1, 652
  %v173 = vpack.c.bf16 0.0, %v171
  %174 = vst [vmem:[%s172] sm:$0xf] %v173
  %s175 = scalar_lea.vmem %s0, 24
  %v176 = vld [vmem:[%s175] sm:$0xff]
  %s177 = scalar_lea.vmem %s1, 1036
  %v178 = vpack.c.bf16 0.0, %v176
  %179 = vst [vmem:[%s177] sm:$0xf] %v178
  %s180 = scalar_lea.vmem %s0, 2080
  %v181 = vld [vmem:[%s180] sm:$0xff]
  %s182 = scalar_lea.vmem %s1, 16
  %v183 = vpack.c.bf16 0.0, %v181
  %184 = vst [vmem:[%s182] sm:$0xf] %v183
  %s185 = scalar_lea.vmem %s0, 1312
  %v186 = vld [vmem:[%s185] sm:$0xff]
  %s187 = scalar_lea.vmem %s1, 400
  %v188 = vpack.c.bf16 0.0, %v186
  %189 = vst [vmem:[%s187] sm:$0xf] %v188
  %s190 = scalar_lea.vmem %s0, 544
  %v191 = vld [vmem:[%s190] sm:$0xff]
  %s192 = scalar_lea.vmem %s1, 784
  %v193 = vpack.c.bf16 0.0, %v191
  %194 = vst [vmem:[%s192] sm:$0xf] %v193
  %s195 = scalar_lea.vmem %s0, 1824
  %v196 = vld [vmem:[%s195] sm:$0xff]
  %s197 = scalar_lea.vmem %s1, 144
  %v198 = vpack.c.bf16 0.0, %v196
  %199 = vst [vmem:[%s197] sm:$0xf] %v198
  %s200 = scalar_lea.vmem %s0, 1056
  %v201 = vld [vmem:[%s200] sm:$0xff]
  %s202 = scalar_lea.vmem %s1, 528
  %v203 = vpack.c.bf16 0.0, %v201
  %204 = vst [vmem:[%s202] sm:$0xf] %v203
  %s205 = scalar_lea.vmem %s0, 288
  %v206 = vld [vmem:[%s205] sm:$0xff]
  %s207 = scalar_lea.vmem %s1, 912
  %v208 = vpack.c.bf16 0.0, %v206
  %209 = vst [vmem:[%s207] sm:$0xf] %v208
  %s210 = scalar_lea.vmem %s0, 1568
  %v211 = vld [vmem:[%s210] sm:$0xff]
  %s212 = scalar_lea.vmem %s1, 272
  %v213 = vpack.c.bf16 0.0, %v211
  %214 = vst [vmem:[%s212] sm:$0xf] %v213
  %s215 = scalar_lea.vmem %s0, 800
  %v216 = vld [vmem:[%s215] sm:$0xff]
  %s217 = scalar_lea.vmem %s1, 656
  %v218 = vpack.c.bf16 0.0, %v216
  %219 = vst [vmem:[%s217] sm:$0xf] %v218
  %s220 = scalar_lea.vmem %s0, 32
  %v221 = vld [vmem:[%s220] sm:$0xff]
  %s222 = scalar_lea.vmem %s1, 1040
  %v223 = vpack.c.bf16 0.0, %v221
  %224 = vst [vmem:[%s222] sm:$0xf] %v223
  %s225 = scalar_lea.vmem %s0, 2088
  %v226 = vld [vmem:[%s225] sm:$0xff]
  %s227 = scalar_lea.vmem %s1, 20
  %v228 = vpack.c.bf16 0.0, %v226
  %229 = vst [vmem:[%s227] sm:$0xf] %v228
  %s230 = scalar_lea.vmem %s0, 1320
  %v231 = vld [vmem:[%s230] sm:$0xff]
  %s232 = scalar_lea.vmem %s1, 404
  %v233 = vpack.c.bf16 0.0, %v231
  %234 = vst [vmem:[%s232] sm:$0xf] %v233
  %s235 = scalar_lea.vmem %s0, 552
  %v236 = vld [vmem:[%s235] sm:$0xff]
  %s237 = scalar_lea.vmem %s1, 788
  %v238 = vpack.c.bf16 0.0, %v236
  %239 = vst [vmem:[%s237] sm:$0xf] %v238
  %s240 = scalar_lea.vmem %s0, 1832
  %v241 = vld [vmem:[%s240] sm:$0xff]
  %s242 = scalar_lea.vmem %s1, 148
  %v243 = vpack.c.bf16 0.0, %v241
  %244 = vst [vmem:[%s242] sm:$0xf] %v243
  %s245 = scalar_lea.vmem %s0, 1064
  %v246 = vld [vmem:[%s245] sm:$0xff]
  %s247 = scalar_lea.vmem %s1, 532
  %v248 = vpack.c.bf16 0.0, %v246
  %249 = vst [vmem:[%s247] sm:$0xf] %v248
  %s250 = scalar_lea.vmem %s0, 296
  %v251 = vld [vmem:[%s250] sm:$0xff]
  %s252 = scalar_lea.vmem %s1, 916
  %v253 = vpack.c.bf16 0.0, %v251
  %254 = vst [vmem:[%s252] sm:$0xf] %v253
  %s255 = scalar_lea.vmem %s0, 1576
  %v256 = vld [vmem:[%s255] sm:$0xff]
  %s257 = scalar_lea.vmem %s1, 276
  %v258 = vpack.c.bf16 0.0, %v256
  %259 = vst [vmem:[%s257] sm:$0xf] %v258
  %s260 = scalar_lea.vmem %s0, 808
  %v261 = vld [vmem:[%s260] sm:$0xff]
  %s262 = scalar_lea.vmem %s1, 660
  %v263 = vpack.c.bf16 0.0, %v261
  %264 = vst [vmem:[%s262] sm:$0xf] %v263
  %s265 = scalar_lea.vmem %s0, 40
  %v266 = vld [vmem:[%s265] sm:$0xff]
  %s267 = scalar_lea.vmem %s1, 1044
  %v268 = vpack.c.bf16 0.0, %v266
  %269 = vst [vmem:[%s267] sm:$0xf] %v268
  %s270 = scalar_lea.vmem %s0, 2096
  %v271 = vld [vmem:[%s270] sm:$0xff]
  %s272 = scalar_lea.vmem %s1, 24
  %v273 = vpack.c.bf16 0.0, %v271
  %274 = vst [vmem:[%s272] sm:$0xf] %v273
  %s275 = scalar_lea.vmem %s0, 1328
  %v276 = vld [vmem:[%s275] sm:$0xff]
  %s277 = scalar_lea.vmem %s1, 408
  %v278 = vpack.c.bf16 0.0, %v276
  %279 = vst [vmem:[%s277] sm:$0xf] %v278
  %s280 = scalar_lea.vmem %s0, 560
  %v281 = vld [vmem:[%s280] sm:$0xff]
  %s282 = scalar_lea.vmem %s1, 792
  %v283 = vpack.c.bf16 0.0, %v281
  %284 = vst [vmem:[%s282] sm:$0xf] %v283
  %s285 = scalar_lea.vmem %s0, 1840
  %v286 = vld [vmem:[%s285] sm:$0xff]
  %s287 = scalar_lea.vmem %s1, 152
  %v288 = vpack.c.bf16 0.0, %v286
  %289 = vst [vmem:[%s287] sm:$0xf] %v288
  %s290 = scalar_lea.vmem %s0, 1072
  %v291 = vld [vmem:[%s290] sm:$0xff]
  %s292 = scalar_lea.vmem %s1, 536
  %v293 = vpack.c.bf16 0.0, %v291
  %294 = vst [vmem:[%s292] sm:$0xf] %v293
  %s295 = scalar_lea.vmem %s0, 304
  %v296 = vld [vmem:[%s295] sm:$0xff]
  %s297 = scalar_lea.vmem %s1, 920
  %v298 = vpack.c.bf16 0.0, %v296
  %299 = vst [vmem:[%s297] sm:$0xf] %v298
  %s300 = scalar_lea.vmem %s0, 1584
  %v301 = vld [vmem:[%s300] sm:$0xff]
  %s302 = scalar_lea.vmem %s1, 280
  %v303 = vpack.c.bf16 0.0, %v301
  %304 = vst [vmem:[%s302] sm:$0xf] %v303
  %s305 = scalar_lea.vmem %s0, 816
  %v306 = vld [vmem:[%s305] sm:$0xff]
  %s307 = scalar_lea.vmem %s1, 664
  %v308 = vpack.c.bf16 0.0, %v306
  %309 = vst [vmem:[%s307] sm:$0xf] %v308
  %s310 = scalar_lea.vmem %s0, 48
  %v311 = vld [vmem:[%s310] sm:$0xff]
  %s312 = scalar_lea.vmem %s1, 1048
  %v313 = vpack.c.bf16 0.0, %v311
  %314 = vst [vmem:[%s312] sm:$0xf] %v313
  %s315 = scalar_lea.vmem %s0, 2104
  %v316 = vld [vmem:[%s315] sm:$0xff]
  %s317 = scalar_lea.vmem %s1, 28
  %v318 = vpack.c.bf16 0.0, %v316
  %319 = vst [vmem:[%s317] sm:$0xf] %v318
  %s320 = scalar_lea.vmem %s0, 1336
  %v321 = vld [vmem:[%s320] sm:$0xff]
  %s322 = scalar_lea.vmem %s1, 412
  %v323 = vpack.c.bf16 0.0, %v321
  %324 = vst [vmem:[%s322] sm:$0xf] %v323
  %s325 = scalar_lea.vmem %s0, 568
  %v326 = vld [vmem:[%s325] sm:$0xff]
  %s327 = scalar_lea.vmem %s1, 796
  %v328 = vpack.c.bf16 0.0, %v326
  %329 = vst [vmem:[%s327] sm:$0xf] %v328
  %s330 = scalar_lea.vmem %s0, 1848
  %v331 = vld [vmem:[%s330] sm:$0xff]
  %s332 = scalar_lea.vmem %s1, 156
  %v333 = vpack.c.bf16 0.0, %v331
  %334 = vst [vmem:[%s332] sm:$0xf] %v333
  %s335 = scalar_lea.vmem %s0, 1080
  %v336 = vld [vmem:[%s335] sm:$0xff]
  %s337 = scalar_lea.vmem %s1, 540
  %v338 = vpack.c.bf16 0.0, %v336
  %339 = vst [vmem:[%s337] sm:$0xf] %v338
  %s340 = scalar_lea.vmem %s0, 312
  %v341 = vld [vmem:[%s340] sm:$0xff]
  %s342 = scalar_lea.vmem %s1, 924
  %v343 = vpack.c.bf16 0.0, %v341
  %344 = vst [vmem:[%s342] sm:$0xf] %v343
  %s345 = scalar_lea.vmem %s0, 1592
  %v346 = vld [vmem:[%s345] sm:$0xff]
  %s347 = scalar_lea.vmem %s1, 284
  %v348 = vpack.c.bf16 0.0, %v346
  %349 = vst [vmem:[%s347] sm:$0xf] %v348
  %s350 = scalar_lea.vmem %s0, 824
  %v351 = vld [vmem:[%s350] sm:$0xff]
  %s352 = scalar_lea.vmem %s1, 668
  %v353 = vpack.c.bf16 0.0, %v351
  %354 = vst [vmem:[%s352] sm:$0xf] %v353
  %s355 = scalar_lea.vmem %s0, 56
  %v356 = vld [vmem:[%s355] sm:$0xff]
  %s357 = scalar_lea.vmem %s1, 1052
  %v358 = vpack.c.bf16 0.0, %v356
  %359 = vst [vmem:[%s357] sm:$0xf] %v358
  %s360 = scalar_lea.vmem %s0, 2112
  %v361 = vld [vmem:[%s360] sm:$0xff]
  %s362 = scalar_lea.vmem %s1, 32
  %v363 = vpack.c.bf16 0.0, %v361
  %364 = vst [vmem:[%s362] sm:$0xf] %v363
  %s365 = scalar_lea.vmem %s0, 1344
  %v366 = vld [vmem:[%s365] sm:$0xff]
  %s367 = scalar_lea.vmem %s1, 416
  %v368 = vpack.c.bf16 0.0, %v366
  %369 = vst [vmem:[%s367] sm:$0xf] %v368
  %s370 = scalar_lea.vmem %s0, 576
  %v371 = vld [vmem:[%s370] sm:$0xff]
  %s372 = scalar_lea.vmem %s1, 800
  %v373 = vpack.c.bf16 0.0, %v371
  %374 = vst [vmem:[%s372] sm:$0xf] %v373
  %s375 = scalar_lea.vmem %s0, 1856
  %v376 = vld [vmem:[%s375] sm:$0xff]
  %s377 = scalar_lea.vmem %s1, 160
  %v378 = vpack.c.bf16 0.0, %v376
  %379 = vst [vmem:[%s377] sm:$0xf] %v378
  %s380 = scalar_lea.vmem %s0, 1088
  %v381 = vld [vmem:[%s380] sm:$0xff]
  %s382 = scalar_lea.vmem %s1, 544
  %v383 = vpack.c.bf16 0.0, %v381
  %384 = vst [vmem:[%s382] sm:$0xf] %v383
  %s385 = scalar_lea.vmem %s0, 320
  %v386 = vld [vmem:[%s385] sm:$0xff]
  %s387 = scalar_lea.vmem %s1, 928
  %v388 = vpack.c.bf16 0.0, %v386
  %389 = vst [vmem:[%s387] sm:$0xf] %v388
  %s390 = scalar_lea.vmem %s0, 1600
  %v391 = vld [vmem:[%s390] sm:$0xff]
  %s392 = scalar_lea.vmem %s1, 288
  %v393 = vpack.c.bf16 0.0, %v391
  %394 = vst [vmem:[%s392] sm:$0xf] %v393
  %s395 = scalar_lea.vmem %s0, 832
  %v396 = vld [vmem:[%s395] sm:$0xff]
  %s397 = scalar_lea.vmem %s1, 672
  %v398 = vpack.c.bf16 0.0, %v396
  %399 = vst [vmem:[%s397] sm:$0xf] %v398
  %s400 = scalar_lea.vmem %s0, 64
  %v401 = vld [vmem:[%s400] sm:$0xff]
  %s402 = scalar_lea.vmem %s1, 1056
  %v403 = vpack.c.bf16 0.0, %v401
  %404 = vst [vmem:[%s402] sm:$0xf] %v403
  %s405 = scalar_lea.vmem %s0, 2120
  %v406 = vld [vmem:[%s405] sm:$0xff]
  %s407 = scalar_lea.vmem %s1, 36
  %v408 = vpack.c.bf16 0.0, %v406
  %409 = vst [vmem:[%s407] sm:$0xf] %v408
  %s410 = scalar_lea.vmem %s0, 1352
  %v411 = vld [vmem:[%s410] sm:$0xff]
  %s412 = scalar_lea.vmem %s1, 420
  %v413 = vpack.c.bf16 0.0, %v411
  %414 = vst [vmem:[%s412] sm:$0xf] %v413
  %s415 = scalar_lea.vmem %s0, 584
  %v416 = vld [vmem:[%s415] sm:$0xff]
  %s417 = scalar_lea.vmem %s1, 804
  %v418 = vpack.c.bf16 0.0, %v416
  %419 = vst [vmem:[%s417] sm:$0xf] %v418
  %s420 = scalar_lea.vmem %s0, 1864
  %v421 = vld [vmem:[%s420] sm:$0xff]
  %s422 = scalar_lea.vmem %s1, 164
  %v423 = vpack.c.bf16 0.0, %v421
  %424 = vst [vmem:[%s422] sm:$0xf] %v423
  %s425 = scalar_lea.vmem %s0, 1096
  %v426 = vld [vmem:[%s425] sm:$0xff]
  %s427 = scalar_lea.vmem %s1, 548
  %v428 = vpack.c.bf16 0.0, %v426
  %429 = vst [vmem:[%s427] sm:$0xf] %v428
  %s430 = scalar_lea.vmem %s0, 328
  %v431 = vld [vmem:[%s430] sm:$0xff]
  %s432 = scalar_lea.vmem %s1, 932
  %v433 = vpack.c.bf16 0.0, %v431
  %434 = vst [vmem:[%s432] sm:$0xf] %v433
  %s435 = scalar_lea.vmem %s0, 1608
  %v436 = vld [vmem:[%s435] sm:$0xff]
  %s437 = scalar_lea.vmem %s1, 292
  %v438 = vpack.c.bf16 0.0, %v436
  %439 = vst [vmem:[%s437] sm:$0xf] %v438
  %s440 = scalar_lea.vmem %s0, 840
  %v441 = vld [vmem:[%s440] sm:$0xff]
  %s442 = scalar_lea.vmem %s1, 676
  %v443 = vpack.c.bf16 0.0, %v441
  %444 = vst [vmem:[%s442] sm:$0xf] %v443
  %s445 = scalar_lea.vmem %s0, 72
  %v446 = vld [vmem:[%s445] sm:$0xff]
  %s447 = scalar_lea.vmem %s1, 1060
  %v448 = vpack.c.bf16 0.0, %v446
  %449 = vst [vmem:[%s447] sm:$0xf] %v448
  %s450 = scalar_lea.vmem %s0, 2128
  %v451 = vld [vmem:[%s450] sm:$0xff]
  %s452 = scalar_lea.vmem %s1, 40
  %v453 = vpack.c.bf16 0.0, %v451
  %454 = vst [vmem:[%s452] sm:$0xf] %v453
  %s455 = scalar_lea.vmem %s0, 1360
  %v456 = vld [vmem:[%s455] sm:$0xff]
  %s457 = scalar_lea.vmem %s1, 424
  %v458 = vpack.c.bf16 0.0, %v456
  %459 = vst [vmem:[%s457] sm:$0xf] %v458
  %s460 = scalar_lea.vmem %s0, 592
  %v461 = vld [vmem:[%s460] sm:$0xff]
  %s462 = scalar_lea.vmem %s1, 808
  %v463 = vpack.c.bf16 0.0, %v461
  %464 = vst [vmem:[%s462] sm:$0xf] %v463
  %s465 = scalar_lea.vmem %s0, 1872
  %v466 = vld [vmem:[%s465] sm:$0xff]
  %s467 = scalar_lea.vmem %s1, 168
  %v468 = vpack.c.bf16 0.0, %v466
  %469 = vst [vmem:[%s467] sm:$0xf] %v468
  %s470 = scalar_lea.vmem %s0, 1104
  %v471 = vld [vmem:[%s470] sm:$0xff]
  %s472 = scalar_lea.vmem %s1, 552
  %v473 = vpack.c.bf16 0.0, %v471
  %474 = vst [vmem:[%s472] sm:$0xf] %v473
  %s475 = scalar_lea.vmem %s0, 336
  %v476 = vld [vmem:[%s475] sm:$0xff]
  %s477 = scalar_lea.vmem %s1, 936
  %v478 = vpack.c.bf16 0.0, %v476
  %479 = vst [vmem:[%s477] sm:$0xf] %v478
  %s480 = scalar_lea.vmem %s0, 1616
  %v481 = vld [vmem:[%s480] sm:$0xff]
  %s482 = scalar_lea.vmem %s1, 296
  %v483 = vpack.c.bf16 0.0, %v481
  %484 = vst [vmem:[%s482] sm:$0xf] %v483
  %s485 = scalar_lea.vmem %s0, 848
  %v486 = vld [vmem:[%s485] sm:$0xff]
  %s487 = scalar_lea.vmem %s1, 680
  %v488 = vpack.c.bf16 0.0, %v486
  %489 = vst [vmem:[%s487] sm:$0xf] %v488
  %s490 = scalar_lea.vmem %s0, 80
  %v491 = vld [vmem:[%s490] sm:$0xff]
  %s492 = scalar_lea.vmem %s1, 1064
  %v493 = vpack.c.bf16 0.0, %v491
  %494 = vst [vmem:[%s492] sm:$0xf] %v493
  %s495 = scalar_lea.vmem %s0, 2136
  %v496 = vld [vmem:[%s495] sm:$0xff]
  %s497 = scalar_lea.vmem %s1, 44
  %v498 = vpack.c.bf16 0.0, %v496
  %499 = vst [vmem:[%s497] sm:$0xf] %v498
  %s500 = scalar_lea.vmem %s0, 1368
  %v501 = vld [vmem:[%s500] sm:$0xff]
  %s502 = scalar_lea.vmem %s1, 428
  %v503 = vpack.c.bf16 0.0, %v501
  %504 = vst [vmem:[%s502] sm:$0xf] %v503
  %s505 = scalar_lea.vmem %s0, 600
  %v506 = vld [vmem:[%s505] sm:$0xff]
  %s507 = scalar_lea.vmem %s1, 812
  %v508 = vpack.c.bf16 0.0, %v506
  %509 = vst [vmem:[%s507] sm:$0xf] %v508
  %s510 = scalar_lea.vmem %s0, 1880
  %v511 = vld [vmem:[%s510] sm:$0xff]
  %s512 = scalar_lea.vmem %s1, 172
  %v513 = vpack.c.bf16 0.0, %v511
  %514 = vst [vmem:[%s512] sm:$0xf] %v513
  %s515 = scalar_lea.vmem %s0, 1112
  %v516 = vld [vmem:[%s515] sm:$0xff]
  %s517 = scalar_lea.vmem %s1, 556
  %v518 = vpack.c.bf16 0.0, %v516
  %519 = vst [vmem:[%s517] sm:$0xf] %v518
  %s520 = scalar_lea.vmem %s0, 344
  %v521 = vld [vmem:[%s520] sm:$0xff]
  %s522 = scalar_lea.vmem %s1, 940
  %v523 = vpack.c.bf16 0.0, %v521
  %524 = vst [vmem:[%s522] sm:$0xf] %v523
  %s525 = scalar_lea.vmem %s0, 1624
  %v526 = vld [vmem:[%s525] sm:$0xff]
  %s527 = scalar_lea.vmem %s1, 300
  %v528 = vpack.c.bf16 0.0, %v526
  %529 = vst [vmem:[%s527] sm:$0xf] %v528
  %s530 = scalar_lea.vmem %s0, 856
  %v531 = vld [vmem:[%s530] sm:$0xff]
  %s532 = scalar_lea.vmem %s1, 684
  %v533 = vpack.c.bf16 0.0, %v531
  %534 = vst [vmem:[%s532] sm:$0xf] %v533
  %s535 = scalar_lea.vmem %s0, 88
  %v536 = vld [vmem:[%s535] sm:$0xff]
  %s537 = scalar_lea.vmem %s1, 1068
  %v538 = vpack.c.bf16 0.0, %v536
  %539 = vst [vmem:[%s537] sm:$0xf] %v538
  %s540 = scalar_lea.vmem %s0, 2144
  %v541 = vld [vmem:[%s540] sm:$0xff]
  %s542 = scalar_lea.vmem %s1, 48
  %v543 = vpack.c.bf16 0.0, %v541
  %544 = vst [vmem:[%s542] sm:$0xf] %v543
  %s545 = scalar_lea.vmem %s0, 1376
  %v546 = vld [vmem:[%s545] sm:$0xff]
  %s547 = scalar_lea.vmem %s1, 432
  %v548 = vpack.c.bf16 0.0, %v546
  %549 = vst [vmem:[%s547] sm:$0xf] %v548
  %s550 = scalar_lea.vmem %s0, 608
  %v551 = vld [vmem:[%s550] sm:$0xff]
  %s552 = scalar_lea.vmem %s1, 816
  %v553 = vpack.c.bf16 0.0, %v551
  %554 = vst [vmem:[%s552] sm:$0xf] %v553
  %s555 = scalar_lea.vmem %s0, 1888
  %v556 = vld [vmem:[%s555] sm:$0xff]
  %s557 = scalar_lea.vmem %s1, 176
  %v558 = vpack.c.bf16 0.0, %v556
  %559 = vst [vmem:[%s557] sm:$0xf] %v558
  %s560 = scalar_lea.vmem %s0, 1120
  %v561 = vld [vmem:[%s560] sm:$0xff]
  %s562 = scalar_lea.vmem %s1, 560
  %v563 = vpack.c.bf16 0.0, %v561
  %564 = vst [vmem:[%s562] sm:$0xf] %v563
  %s565 = scalar_lea.vmem %s0, 352
  %v566 = vld [vmem:[%s565] sm:$0xff]
  %s567 = scalar_lea.vmem %s1, 944
  %v568 = vpack.c.bf16 0.0, %v566
  %569 = vst [vmem:[%s567] sm:$0xf] %v568
  %s570 = scalar_lea.vmem %s0, 1632
  %v571 = vld [vmem:[%s570] sm:$0xff]
  %s572 = scalar_lea.vmem %s1, 304
  %v573 = vpack.c.bf16 0.0, %v571
  %574 = vst [vmem:[%s572] sm:$0xf] %v573
  %s575 = scalar_lea.vmem %s0, 864
  %v576 = vld [vmem:[%s575] sm:$0xff]
  %s577 = scalar_lea.vmem %s1, 688
  %v578 = vpack.c.bf16 0.0, %v576
  %579 = vst [vmem:[%s577] sm:$0xf] %v578
  %s580 = scalar_lea.vmem %s0, 96
  %v581 = vld [vmem:[%s580] sm:$0xff]
  %s582 = scalar_lea.vmem %s1, 1072
  %v583 = vpack.c.bf16 0.0, %v581
  %584 = vst [vmem:[%s582] sm:$0xf] %v583
  %s585 = scalar_lea.vmem %s0, 2152
  %v586 = vld [vmem:[%s585] sm:$0xff]
  %s587 = scalar_lea.vmem %s1, 52
  %v588 = vpack.c.bf16 0.0, %v586
  %589 = vst [vmem:[%s587] sm:$0xf] %v588
  %s590 = scalar_lea.vmem %s0, 1384
  %v591 = vld [vmem:[%s590] sm:$0xff]
  %s592 = scalar_lea.vmem %s1, 436
  %v593 = vpack.c.bf16 0.0, %v591
  %594 = vst [vmem:[%s592] sm:$0xf] %v593
  %s595 = scalar_lea.vmem %s0, 616
  %v596 = vld [vmem:[%s595] sm:$0xff]
  %s597 = scalar_lea.vmem %s1, 820
  %v598 = vpack.c.bf16 0.0, %v596
  %599 = vst [vmem:[%s597] sm:$0xf] %v598
  %s600 = scalar_lea.vmem %s0, 1896
  %v601 = vld [vmem:[%s600] sm:$0xff]
  %s602 = scalar_lea.vmem %s1, 180
  %v603 = vpack.c.bf16 0.0, %v601
  %604 = vst [vmem:[%s602] sm:$0xf] %v603
  %s605 = scalar_lea.vmem %s0, 1128
  %v606 = vld [vmem:[%s605] sm:$0xff]
  %s607 = scalar_lea.vmem %s1, 564
  %v608 = vpack.c.bf16 0.0, %v606
  %609 = vst [vmem:[%s607] sm:$0xf] %v608
  %s610 = scalar_lea.vmem %s0, 360
  %v611 = vld [vmem:[%s610] sm:$0xff]
  %s612 = scalar_lea.vmem %s1, 948
  %v613 = vpack.c.bf16 0.0, %v611
  %614 = vst [vmem:[%s612] sm:$0xf] %v613
  %s615 = scalar_lea.vmem %s0, 1640
  %v616 = vld [vmem:[%s615] sm:$0xff]
  %s617 = scalar_lea.vmem %s1, 308
  %v618 = vpack.c.bf16 0.0, %v616
  %619 = vst [vmem:[%s617] sm:$0xf] %v618
  %s620 = scalar_lea.vmem %s0, 872
  %v621 = vld [vmem:[%s620] sm:$0xff]
  %s622 = scalar_lea.vmem %s1, 692
  %v623 = vpack.c.bf16 0.0, %v621
  %624 = vst [vmem:[%s622] sm:$0xf] %v623
  %s625 = scalar_lea.vmem %s0, 104
  %v626 = vld [vmem:[%s625] sm:$0xff]
  %s627 = scalar_lea.vmem %s1, 1076
  %v628 = vpack.c.bf16 0.0, %v626
  %629 = vst [vmem:[%s627] sm:$0xf] %v628
  %s630 = scalar_lea.vmem %s0, 2160
  %v631 = vld [vmem:[%s630] sm:$0xff]
  %s632 = scalar_lea.vmem %s1, 56
  %v633 = vpack.c.bf16 0.0, %v631
  %634 = vst [vmem:[%s632] sm:$0xf] %v633
  %s635 = scalar_lea.vmem %s0, 1392
  %v636 = vld [vmem:[%s635] sm:$0xff]
  %s637 = scalar_lea.vmem %s1, 440
  %v638 = vpack.c.bf16 0.0, %v636
  %639 = vst [vmem:[%s637] sm:$0xf] %v638
  %s640 = scalar_lea.vmem %s0, 624
  %v641 = vld [vmem:[%s640] sm:$0xff]
  %s642 = scalar_lea.vmem %s1, 824
  %v643 = vpack.c.bf16 0.0, %v641
  %644 = vst [vmem:[%s642] sm:$0xf] %v643
  %s645 = scalar_lea.vmem %s0, 1904
  %v646 = vld [vmem:[%s645] sm:$0xff]
  %s647 = scalar_lea.vmem %s1, 184
  %v648 = vpack.c.bf16 0.0, %v646
  %649 = vst [vmem:[%s647] sm:$0xf] %v648
  %s650 = scalar_lea.vmem %s0, 1136
  %v651 = vld [vmem:[%s650] sm:$0xff]
  %s652 = scalar_lea.vmem %s1, 568
  %v653 = vpack.c.bf16 0.0, %v651
  %654 = vst [vmem:[%s652] sm:$0xf] %v653
  %s655 = scalar_lea.vmem %s0, 368
  %v656 = vld [vmem:[%s655] sm:$0xff]
  %s657 = scalar_lea.vmem %s1, 952
  %v658 = vpack.c.bf16 0.0, %v656
  %659 = vst [vmem:[%s657] sm:$0xf] %v658
  %s660 = scalar_lea.vmem %s0, 1648
  %v661 = vld [vmem:[%s660] sm:$0xff]
  %s662 = scalar_lea.vmem %s1, 312
  %v663 = vpack.c.bf16 0.0, %v661
  %664 = vst [vmem:[%s662] sm:$0xf] %v663
  %s665 = scalar_lea.vmem %s0, 880
  %v666 = vld [vmem:[%s665] sm:$0xff]
  %s667 = scalar_lea.vmem %s1, 696
  %v668 = vpack.c.bf16 0.0, %v666
  %669 = vst [vmem:[%s667] sm:$0xf] %v668
  %s670 = scalar_lea.vmem %s0, 112
  %v671 = vld [vmem:[%s670] sm:$0xff]
  %s672 = scalar_lea.vmem %s1, 1080
  %v673 = vpack.c.bf16 0.0, %v671
  %674 = vst [vmem:[%s672] sm:$0xf] %v673
  %s675 = scalar_lea.vmem %s0, 2168
  %v676 = vld [vmem:[%s675] sm:$0xff]
  %s677 = scalar_lea.vmem %s1, 60
  %v678 = vpack.c.bf16 0.0, %v676
  %679 = vst [vmem:[%s677] sm:$0xf] %v678
  %s680 = scalar_lea.vmem %s0, 1400
  %v681 = vld [vmem:[%s680] sm:$0xff]
  %s682 = scalar_lea.vmem %s1, 444
  %v683 = vpack.c.bf16 0.0, %v681
  %684 = vst [vmem:[%s682] sm:$0xf] %v683
  %s685 = scalar_lea.vmem %s0, 632
  %v686 = vld [vmem:[%s685] sm:$0xff]
  %s687 = scalar_lea.vmem %s1, 828
  %v688 = vpack.c.bf16 0.0, %v686
  %689 = vst [vmem:[%s687] sm:$0xf] %v688
  %s690 = scalar_lea.vmem %s0, 1912
  %v691 = vld [vmem:[%s690] sm:$0xff]
  %s692 = scalar_lea.vmem %s1, 188
  %v693 = vpack.c.bf16 0.0, %v691
  %694 = vst [vmem:[%s692] sm:$0xf] %v693
  %s695 = scalar_lea.vmem %s0, 1144
  %v696 = vld [vmem:[%s695] sm:$0xff]
  %s697 = scalar_lea.vmem %s1, 572
  %v698 = vpack.c.bf16 0.0, %v696
  %699 = vst [vmem:[%s697] sm:$0xf] %v698
  %s700 = scalar_lea.vmem %s0, 376
  %v701 = vld [vmem:[%s700] sm:$0xff]
  %s702 = scalar_lea.vmem %s1, 956
  %v703 = vpack.c.bf16 0.0, %v701
  %704 = vst [vmem:[%s702] sm:$0xf] %v703
  %s705 = scalar_lea.vmem %s0, 1656
  %v706 = vld [vmem:[%s705] sm:$0xff]
  %s707 = scalar_lea.vmem %s1, 316
  %v708 = vpack.c.bf16 0.0, %v706
  %709 = vst [vmem:[%s707] sm:$0xf] %v708
  %s710 = scalar_lea.vmem %s0, 888
  %v711 = vld [vmem:[%s710] sm:$0xff]
  %s712 = scalar_lea.vmem %s1, 700
  %v713 = vpack.c.bf16 0.0, %v711
  %714 = vst [vmem:[%s712] sm:$0xf] %v713
  %s715 = scalar_lea.vmem %s0, 120
  %v716 = vld [vmem:[%s715] sm:$0xff]
  %s717 = scalar_lea.vmem %s1, 1084
  %v718 = vpack.c.bf16 0.0, %v716
  %719 = vst [vmem:[%s717] sm:$0xf] %v718
  %s720 = scalar_lea.vmem %s0, 2176
  %v721 = vld [vmem:[%s720] sm:$0xff]
  %s722 = scalar_lea.vmem %s1, 64
  %v723 = vpack.c.bf16 0.0, %v721
  %724 = vst [vmem:[%s722] sm:$0xf] %v723
  %s725 = scalar_lea.vmem %s0, 1408
  %v726 = vld [vmem:[%s725] sm:$0xff]
  %s727 = scalar_lea.vmem %s1, 448
  %v728 = vpack.c.bf16 0.0, %v726
  %729 = vst [vmem:[%s727] sm:$0xf] %v728
  %s730 = scalar_lea.vmem %s0, 640
  %v731 = vld [vmem:[%s730] sm:$0xff]
  %s732 = scalar_lea.vmem %s1, 832
  %v733 = vpack.c.bf16 0.0, %v731
  %734 = vst [vmem:[%s732] sm:$0xf] %v733
  %s735 = scalar_lea.vmem %s0, 1920
  %v736 = vld [vmem:[%s735] sm:$0xff]
  %s737 = scalar_lea.vmem %s1, 192
  %v738 = vpack.c.bf16 0.0, %v736
  %739 = vst [vmem:[%s737] sm:$0xf] %v738
  %s740 = scalar_lea.vmem %s0, 1152
  %v741 = vld [vmem:[%s740] sm:$0xff]
  %s742 = scalar_lea.vmem %s1, 576
  %v743 = vpack.c.bf16 0.0, %v741
  %744 = vst [vmem:[%s742] sm:$0xf] %v743
  %s745 = scalar_lea.vmem %s0, 384
  %v746 = vld [vmem:[%s745] sm:$0xff]
  %s747 = scalar_lea.vmem %s1, 960
  %v748 = vpack.c.bf16 0.0, %v746
  %749 = vst [vmem:[%s747] sm:$0xf] %v748
  %s750 = scalar_lea.vmem %s0, 1664
  %v751 = vld [vmem:[%s750] sm:$0xff]
  %s752 = scalar_lea.vmem %s1, 320
  %v753 = vpack.c.bf16 0.0, %v751
  %754 = vst [vmem:[%s752] sm:$0xf] %v753
  %s755 = scalar_lea.vmem %s0, 896
  %v756 = vld [vmem:[%s755] sm:$0xff]
  %s757 = scalar_lea.vmem %s1, 704
  %v758 = vpack.c.bf16 0.0, %v756
  %759 = vst [vmem:[%s757] sm:$0xf] %v758
  %s760 = scalar_lea.vmem %s0, 128
  %v761 = vld [vmem:[%s760] sm:$0xff]
  %s762 = scalar_lea.vmem %s1, 1088
  %v763 = vpack.c.bf16 0.0, %v761
  %764 = vst [vmem:[%s762] sm:$0xf] %v763
  %s765 = scalar_lea.vmem %s0, 2184
  %v766 = vld [vmem:[%s765] sm:$0xff]
  %s767 = scalar_lea.vmem %s1, 68
  %v768 = vpack.c.bf16 0.0, %v766
  %769 = vst [vmem:[%s767] sm:$0xf] %v768
  %s770 = scalar_lea.vmem %s0, 1416
  %v771 = vld [vmem:[%s770] sm:$0xff]
  %s772 = scalar_lea.vmem %s1, 452
  %v773 = vpack.c.bf16 0.0, %v771
  %774 = vst [vmem:[%s772] sm:$0xf] %v773
  %s775 = scalar_lea.vmem %s0, 648
  %v776 = vld [vmem:[%s775] sm:$0xff]
  %s777 = scalar_lea.vmem %s1, 836
  %v778 = vpack.c.bf16 0.0, %v776
  %779 = vst [vmem:[%s777] sm:$0xf] %v778
  %s780 = scalar_lea.vmem %s0, 1928
  %v781 = vld [vmem:[%s780] sm:$0xff]
  %s782 = scalar_lea.vmem %s1, 196
  %v783 = vpack.c.bf16 0.0, %v781
  %784 = vst [vmem:[%s782] sm:$0xf] %v783
  %s785 = scalar_lea.vmem %s0, 1160
  %v786 = vld [vmem:[%s785] sm:$0xff]
  %s787 = scalar_lea.vmem %s1, 580
  %v788 = vpack.c.bf16 0.0, %v786
  %789 = vst [vmem:[%s787] sm:$0xf] %v788
  %s790 = scalar_lea.vmem %s0, 392
  %v791 = vld [vmem:[%s790] sm:$0xff]
  %s792 = scalar_lea.vmem %s1, 964
  %v793 = vpack.c.bf16 0.0, %v791
  %794 = vst [vmem:[%s792] sm:$0xf] %v793
  %s795 = scalar_lea.vmem %s0, 1672
  %v796 = vld [vmem:[%s795] sm:$0xff]
  %s797 = scalar_lea.vmem %s1, 324
  %v798 = vpack.c.bf16 0.0, %v796
  %799 = vst [vmem:[%s797] sm:$0xf] %v798
  %s800 = scalar_lea.vmem %s0, 904
  %v801 = vld [vmem:[%s800] sm:$0xff]
  %s802 = scalar_lea.vmem %s1, 708
  %v803 = vpack.c.bf16 0.0, %v801
  %804 = vst [vmem:[%s802] sm:$0xf] %v803
  %s805 = scalar_lea.vmem %s0, 136
  %v806 = vld [vmem:[%s805] sm:$0xff]
  %s807 = scalar_lea.vmem %s1, 1092
  %v808 = vpack.c.bf16 0.0, %v806
  %809 = vst [vmem:[%s807] sm:$0xf] %v808
  %s810 = scalar_lea.vmem %s0, 2192
  %v811 = vld [vmem:[%s810] sm:$0xff]
  %s812 = scalar_lea.vmem %s1, 72
  %v813 = vpack.c.bf16 0.0, %v811
  %814 = vst [vmem:[%s812] sm:$0xf] %v813
  %s815 = scalar_lea.vmem %s0, 1424
  %v816 = vld [vmem:[%s815] sm:$0xff]
  %s817 = scalar_lea.vmem %s1, 456
  %v818 = vpack.c.bf16 0.0, %v816
  %819 = vst [vmem:[%s817] sm:$0xf] %v818
  %s820 = scalar_lea.vmem %s0, 656
  %v821 = vld [vmem:[%s820] sm:$0xff]
  %s822 = scalar_lea.vmem %s1, 840
  %v823 = vpack.c.bf16 0.0, %v821
  %824 = vst [vmem:[%s822] sm:$0xf] %v823
  %s825 = scalar_lea.vmem %s0, 1936
  %v826 = vld [vmem:[%s825] sm:$0xff]
  %s827 = scalar_lea.vmem %s1, 200
  %v828 = vpack.c.bf16 0.0, %v826
  %829 = vst [vmem:[%s827] sm:$0xf] %v828
  %s830 = scalar_lea.vmem %s0, 1168
  %v831 = vld [vmem:[%s830] sm:$0xff]
  %s832 = scalar_lea.vmem %s1, 584
  %v833 = vpack.c.bf16 0.0, %v831
  %834 = vst [vmem:[%s832] sm:$0xf] %v833
  %s835 = scalar_lea.vmem %s0, 400
  %v836 = vld [vmem:[%s835] sm:$0xff]
  %s837 = scalar_lea.vmem %s1, 968
  %v838 = vpack.c.bf16 0.0, %v836
  %839 = vst [vmem:[%s837] sm:$0xf] %v838
  %s840 = scalar_lea.vmem %s0, 1680
  %v841 = vld [vmem:[%s840] sm:$0xff]
  %s842 = scalar_lea.vmem %s1, 328
  %v843 = vpack.c.bf16 0.0, %v841
  %844 = vst [vmem:[%s842] sm:$0xf] %v843
  %s845 = scalar_lea.vmem %s0, 912
  %v846 = vld [vmem:[%s845] sm:$0xff]
  %s847 = scalar_lea.vmem %s1, 712
  %v848 = vpack.c.bf16 0.0, %v846
  %849 = vst [vmem:[%s847] sm:$0xf] %v848
  %s850 = scalar_lea.vmem %s0, 144
  %v851 = vld [vmem:[%s850] sm:$0xff]
  %s852 = scalar_lea.vmem %s1, 1096
  %v853 = vpack.c.bf16 0.0, %v851
  %854 = vst [vmem:[%s852] sm:$0xf] %v853
  %s855 = scalar_lea.vmem %s0, 2200
  %v856 = vld [vmem:[%s855] sm:$0xff]
  %s857 = scalar_lea.vmem %s1, 76
  %v858 = vpack.c.bf16 0.0, %v856
  %859 = vst [vmem:[%s857] sm:$0xf] %v858
  %s860 = scalar_lea.vmem %s0, 1432
  %v861 = vld [vmem:[%s860] sm:$0xff]
  %s862 = scalar_lea.vmem %s1, 460
  %v863 = vpack.c.bf16 0.0, %v861
  %864 = vst [vmem:[%s862] sm:$0xf] %v863
  %s865 = scalar_lea.vmem %s0, 664
  %v866 = vld [vmem:[%s865] sm:$0xff]
  %s867 = scalar_lea.vmem %s1, 844
  %v868 = vpack.c.bf16 0.0, %v866
  %869 = vst [vmem:[%s867] sm:$0xf] %v868
  %s870 = scalar_lea.vmem %s0, 1944
  %v871 = vld [vmem:[%s870] sm:$0xff]
  %s872 = scalar_lea.vmem %s1, 204
  %v873 = vpack.c.bf16 0.0, %v871
  %874 = vst [vmem:[%s872] sm:$0xf] %v873
  %s875 = scalar_lea.vmem %s0, 1176
  %v876 = vld [vmem:[%s875] sm:$0xff]
  %s877 = scalar_lea.vmem %s1, 588
  %v878 = vpack.c.bf16 0.0, %v876
  %879 = vst [vmem:[%s877] sm:$0xf] %v878
  %s880 = scalar_lea.vmem %s0, 408
  %v881 = vld [vmem:[%s880] sm:$0xff]
  %s882 = scalar_lea.vmem %s1, 972
  %v883 = vpack.c.bf16 0.0, %v881
  %884 = vst [vmem:[%s882] sm:$0xf] %v883
  %s885 = scalar_lea.vmem %s0, 1688
  %v886 = vld [vmem:[%s885] sm:$0xff]
  %s887 = scalar_lea.vmem %s1, 332
  %v888 = vpack.c.bf16 0.0, %v886
  %889 = vst [vmem:[%s887] sm:$0xf] %v888
  %s890 = scalar_lea.vmem %s0, 920
  %v891 = vld [vmem:[%s890] sm:$0xff]
  %s892 = scalar_lea.vmem %s1, 716
  %v893 = vpack.c.bf16 0.0, %v891
  %894 = vst [vmem:[%s892] sm:$0xf] %v893
  %s895 = scalar_lea.vmem %s0, 152
  %v896 = vld [vmem:[%s895] sm:$0xff]
  %s897 = scalar_lea.vmem %s1, 1100
  %v898 = vpack.c.bf16 0.0, %v896
  %899 = vst [vmem:[%s897] sm:$0xf] %v898
  %s900 = scalar_lea.vmem %s0, 2208
  %v901 = vld [vmem:[%s900] sm:$0xff]
  %s902 = scalar_lea.vmem %s1, 80
  %v903 = vpack.c.bf16 0.0, %v901
  %904 = vst [vmem:[%s902] sm:$0xf] %v903
  %s905 = scalar_lea.vmem %s0, 1440
  %v906 = vld [vmem:[%s905] sm:$0xff]
  %s907 = scalar_lea.vmem %s1, 464
  %v908 = vpack.c.bf16 0.0, %v906
  %909 = vst [vmem:[%s907] sm:$0xf] %v908
  %s910 = scalar_lea.vmem %s0, 672
  %v911 = vld [vmem:[%s910] sm:$0xff]
  %s912 = scalar_lea.vmem %s1, 848
  %v913 = vpack.c.bf16 0.0, %v911
  %914 = vst [vmem:[%s912] sm:$0xf] %v913
  %s915 = scalar_lea.vmem %s0, 1952
  %v916 = vld [vmem:[%s915] sm:$0xff]
  %s917 = scalar_lea.vmem %s1, 208
  %v918 = vpack.c.bf16 0.0, %v916
  %919 = vst [vmem:[%s917] sm:$0xf] %v918
  %s920 = scalar_lea.vmem %s0, 1184
  %v921 = vld [vmem:[%s920] sm:$0xff]
  %s922 = scalar_lea.vmem %s1, 592
  %v923 = vpack.c.bf16 0.0, %v921
  %924 = vst [vmem:[%s922] sm:$0xf] %v923
  %s925 = scalar_lea.vmem %s0, 416
  %v926 = vld [vmem:[%s925] sm:$0xff]
  %s927 = scalar_lea.vmem %s1, 976
  %v928 = vpack.c.bf16 0.0, %v926
  %929 = vst [vmem:[%s927] sm:$0xf] %v928
  %s930 = scalar_lea.vmem %s0, 1696
  %v931 = vld [vmem:[%s930] sm:$0xff]
  %s932 = scalar_lea.vmem %s1, 336
  %v933 = vpack.c.bf16 0.0, %v931
  %934 = vst [vmem:[%s932] sm:$0xf] %v933
  %s935 = scalar_lea.vmem %s0, 928
  %v936 = vld [vmem:[%s935] sm:$0xff]
  %s937 = scalar_lea.vmem %s1, 720
  %v938 = vpack.c.bf16 0.0, %v936
  %939 = vst [vmem:[%s937] sm:$0xf] %v938
  %s940 = scalar_lea.vmem %s0, 160
  %v941 = vld [vmem:[%s940] sm:$0xff]
  %s942 = scalar_lea.vmem %s1, 1104
  %v943 = vpack.c.bf16 0.0, %v941
  %944 = vst [vmem:[%s942] sm:$0xf] %v943
  %s945 = scalar_lea.vmem %s0, 2216
  %v946 = vld [vmem:[%s945] sm:$0xff]
  %s947 = scalar_lea.vmem %s1, 84
  %v948 = vpack.c.bf16 0.0, %v946
  %949 = vst [vmem:[%s947] sm:$0xf] %v948
  %s950 = scalar_lea.vmem %s0, 1448
  %v951 = vld [vmem:[%s950] sm:$0xff]
  %s952 = scalar_lea.vmem %s1, 468
  %v953 = vpack.c.bf16 0.0, %v951
  %954 = vst [vmem:[%s952] sm:$0xf] %v953
  %s955 = scalar_lea.vmem %s0, 680
  %v956 = vld [vmem:[%s955] sm:$0xff]
  %s957 = scalar_lea.vmem %s1, 852
  %v958 = vpack.c.bf16 0.0, %v956
  %959 = vst [vmem:[%s957] sm:$0xf] %v958
  %s960 = scalar_lea.vmem %s0, 1960
  %v961 = vld [vmem:[%s960] sm:$0xff]
  %s962 = scalar_lea.vmem %s1, 212
  %v963 = vpack.c.bf16 0.0, %v961
  %964 = vst [vmem:[%s962] sm:$0xf] %v963
  %s965 = scalar_lea.vmem %s0, 1192
  %v966 = vld [vmem:[%s965] sm:$0xff]
  %s967 = scalar_lea.vmem %s1, 596
  %v968 = vpack.c.bf16 0.0, %v966
  %969 = vst [vmem:[%s967] sm:$0xf] %v968
  %s970 = scalar_lea.vmem %s0, 424
  %v971 = vld [vmem:[%s970] sm:$0xff]
  %s972 = scalar_lea.vmem %s1, 980
  %v973 = vpack.c.bf16 0.0, %v971
  %974 = vst [vmem:[%s972] sm:$0xf] %v973
  %s975 = scalar_lea.vmem %s0, 1704
  %v976 = vld [vmem:[%s975] sm:$0xff]
  %s977 = scalar_lea.vmem %s1, 340
  %v978 = vpack.c.bf16 0.0, %v976
  %979 = vst [vmem:[%s977] sm:$0xf] %v978
  %s980 = scalar_lea.vmem %s0, 936
  %v981 = vld [vmem:[%s980] sm:$0xff]
  %s982 = scalar_lea.vmem %s1, 724
  %v983 = vpack.c.bf16 0.0, %v981
  %984 = vst [vmem:[%s982] sm:$0xf] %v983
  %s985 = scalar_lea.vmem %s0, 168
  %v986 = vld [vmem:[%s985] sm:$0xff]
  %s987 = scalar_lea.vmem %s1, 1108
  %v988 = vpack.c.bf16 0.0, %v986
  %989 = vst [vmem:[%s987] sm:$0xf] %v988
  %s990 = scalar_lea.vmem %s0, 2224
  %v991 = vld [vmem:[%s990] sm:$0xff]
  %s992 = scalar_lea.vmem %s1, 88
  %v993 = vpack.c.bf16 0.0, %v991
  %994 = vst [vmem:[%s992] sm:$0xf] %v993
  %s995 = scalar_lea.vmem %s0, 1456
  %v996 = vld [vmem:[%s995] sm:$0xff]
  %s997 = scalar_lea.vmem %s1, 472
  %v998 = vpack.c.bf16 0.0, %v996
  %999 = vst [vmem:[%s997] sm:$0xf] %v998
  %s1000 = scalar_lea.vmem %s0, 688
  %v1001 = vld [vmem:[%s1000] sm:$0xff]
  %s1002 = scalar_lea.vmem %s1, 856
  %v1003 = vpack.c.bf16 0.0, %v1001
  %1004 = vst [vmem:[%s1002] sm:$0xf] %v1003
  %s1005 = scalar_lea.vmem %s0, 1968
  %v1006 = vld [vmem:[%s1005] sm:$0xff]
  %s1007 = scalar_lea.vmem %s1, 216
  %v1008 = vpack.c.bf16 0.0, %v1006
  %1009 = vst [vmem:[%s1007] sm:$0xf] %v1008
  %s1010 = scalar_lea.vmem %s0, 1200
  %v1011 = vld [vmem:[%s1010] sm:$0xff]
  %s1012 = scalar_lea.vmem %s1, 600
  %v1013 = vpack.c.bf16 0.0, %v1011
  %1014 = vst [vmem:[%s1012] sm:$0xf] %v1013
  %s1015 = scalar_lea.vmem %s0, 432
  %v1016 = vld [vmem:[%s1015] sm:$0xff]
  %s1017 = scalar_lea.vmem %s1, 984
  %v1018 = vpack.c.bf16 0.0, %v1016
  %1019 = vst [vmem:[%s1017] sm:$0xf] %v1018
  %s1020 = scalar_lea.vmem %s0, 1712
  %v1021 = vld [vmem:[%s1020] sm:$0xff]
  %s1022 = scalar_lea.vmem %s1, 344
  %v1023 = vpack.c.bf16 0.0, %v1021
  %1024 = vst [vmem:[%s1022] sm:$0xf] %v1023
  %s1025 = scalar_lea.vmem %s0, 944
  %v1026 = vld [vmem:[%s1025] sm:$0xff]
  %s1027 = scalar_lea.vmem %s1, 728
  %v1028 = vpack.c.bf16 0.0, %v1026
  %1029 = vst [vmem:[%s1027] sm:$0xf] %v1028
  %s1030 = scalar_lea.vmem %s0, 176
  %v1031 = vld [vmem:[%s1030] sm:$0xff]
  %s1032 = scalar_lea.vmem %s1, 1112
  %v1033 = vpack.c.bf16 0.0, %v1031
  %1034 = vst [vmem:[%s1032] sm:$0xf] %v1033
  %s1035 = scalar_lea.vmem %s0, 2232
  %v1036 = vld [vmem:[%s1035] sm:$0xff]
  %s1037 = scalar_lea.vmem %s1, 92
  %v1038 = vpack.c.bf16 0.0, %v1036
  %1039 = vst [vmem:[%s1037] sm:$0xf] %v1038
  %s1040 = scalar_lea.vmem %s0, 1464
  %v1041 = vld [vmem:[%s1040] sm:$0xff]
  %s1042 = scalar_lea.vmem %s1, 476
  %v1043 = vpack.c.bf16 0.0, %v1041
  %1044 = vst [vmem:[%s1042] sm:$0xf] %v1043
  %s1045 = scalar_lea.vmem %s0, 696
  %v1046 = vld [vmem:[%s1045] sm:$0xff]
  %s1047 = scalar_lea.vmem %s1, 860
  %v1048 = vpack.c.bf16 0.0, %v1046
  %1049 = vst [vmem:[%s1047] sm:$0xf] %v1048
  %s1050 = scalar_lea.vmem %s0, 1976
  %v1051 = vld [vmem:[%s1050] sm:$0xff]
  %s1052 = scalar_lea.vmem %s1, 220
  %v1053 = vpack.c.bf16 0.0, %v1051
  %1054 = vst [vmem:[%s1052] sm:$0xf] %v1053
  %s1055 = scalar_lea.vmem %s0, 1208
  %v1056 = vld [vmem:[%s1055] sm:$0xff]
  %s1057 = scalar_lea.vmem %s1, 604
  %v1058 = vpack.c.bf16 0.0, %v1056
  %1059 = vst [vmem:[%s1057] sm:$0xf] %v1058
  %s1060 = scalar_lea.vmem %s0, 440
  %v1061 = vld [vmem:[%s1060] sm:$0xff]
  %s1062 = scalar_lea.vmem %s1, 988
  %v1063 = vpack.c.bf16 0.0, %v1061
  %1064 = vst [vmem:[%s1062] sm:$0xf] %v1063
  %s1065 = scalar_lea.vmem %s0, 1720
  %v1066 = vld [vmem:[%s1065] sm:$0xff]
  %s1067 = scalar_lea.vmem %s1, 348
  %v1068 = vpack.c.bf16 0.0, %v1066
  %1069 = vst [vmem:[%s1067] sm:$0xf] %v1068
  %s1070 = scalar_lea.vmem %s0, 952
  %v1071 = vld [vmem:[%s1070] sm:$0xff]
  %s1072 = scalar_lea.vmem %s1, 732
  %v1073 = vpack.c.bf16 0.0, %v1071
  %1074 = vst [vmem:[%s1072] sm:$0xf] %v1073
  %s1075 = scalar_lea.vmem %s0, 184
  %v1076 = vld [vmem:[%s1075] sm:$0xff]
  %s1077 = scalar_lea.vmem %s1, 1116
  %v1078 = vpack.c.bf16 0.0, %v1076
  %1079 = vst [vmem:[%s1077] sm:$0xf] %v1078
  %s1080 = scalar_lea.vmem %s0, 2240
  %v1081 = vld [vmem:[%s1080] sm:$0xff]
  %s1082 = scalar_lea.vmem %s1, 96
  %v1083 = vpack.c.bf16 0.0, %v1081
  %1084 = vst [vmem:[%s1082] sm:$0xf] %v1083
  %s1085 = scalar_lea.vmem %s0, 1472
  %v1086 = vld [vmem:[%s1085] sm:$0xff]
  %s1087 = scalar_lea.vmem %s1, 480
  %v1088 = vpack.c.bf16 0.0, %v1086
  %1089 = vst [vmem:[%s1087] sm:$0xf] %v1088
  %s1090 = scalar_lea.vmem %s0, 704
  %v1091 = vld [vmem:[%s1090] sm:$0xff]
  %s1092 = scalar_lea.vmem %s1, 864
  %v1093 = vpack.c.bf16 0.0, %v1091
  %1094 = vst [vmem:[%s1092] sm:$0xf] %v1093
  %s1095 = scalar_lea.vmem %s0, 1984
  %v1096 = vld [vmem:[%s1095] sm:$0xff]
  %s1097 = scalar_lea.vmem %s1, 224
  %v1098 = vpack.c.bf16 0.0, %v1096
  %1099 = vst [vmem:[%s1097] sm:$0xf] %v1098
  %s1100 = scalar_lea.vmem %s0, 1216
  %v1101 = vld [vmem:[%s1100] sm:$0xff]
  %s1102 = scalar_lea.vmem %s1, 608
  %v1103 = vpack.c.bf16 0.0, %v1101
  %1104 = vst [vmem:[%s1102] sm:$0xf] %v1103
  %s1105 = scalar_lea.vmem %s0, 448
  %v1106 = vld [vmem:[%s1105] sm:$0xff]
  %s1107 = scalar_lea.vmem %s1, 992
  %v1108 = vpack.c.bf16 0.0, %v1106
  %1109 = vst [vmem:[%s1107] sm:$0xf] %v1108
  %s1110 = scalar_lea.vmem %s0, 1728
  %v1111 = vld [vmem:[%s1110] sm:$0xff]
  %s1112 = scalar_lea.vmem %s1, 352
  %v1113 = vpack.c.bf16 0.0, %v1111
  %1114 = vst [vmem:[%s1112] sm:$0xf] %v1113
  %s1115 = scalar_lea.vmem %s0, 960
  %v1116 = vld [vmem:[%s1115] sm:$0xff]
  %s1117 = scalar_lea.vmem %s1, 736
  %v1118 = vpack.c.bf16 0.0, %v1116
  %1119 = vst [vmem:[%s1117] sm:$0xf] %v1118
  %s1120 = scalar_lea.vmem %s0, 192
  %v1121 = vld [vmem:[%s1120] sm:$0xff]
  %s1122 = scalar_lea.vmem %s1, 1120
  %v1123 = vpack.c.bf16 0.0, %v1121
  %1124 = vst [vmem:[%s1122] sm:$0xf] %v1123
  %s1125 = scalar_lea.vmem %s0, 2248
  %v1126 = vld [vmem:[%s1125] sm:$0xff]
  %s1127 = scalar_lea.vmem %s1, 100
  %v1128 = vpack.c.bf16 0.0, %v1126
  %1129 = vst [vmem:[%s1127] sm:$0xf] %v1128
  %s1130 = scalar_lea.vmem %s0, 1480
  %v1131 = vld [vmem:[%s1130] sm:$0xff]
  %s1132 = scalar_lea.vmem %s1, 484
  %v1133 = vpack.c.bf16 0.0, %v1131
  %1134 = vst [vmem:[%s1132] sm:$0xf] %v1133
  %s1135 = scalar_lea.vmem %s0, 712
  %v1136 = vld [vmem:[%s1135] sm:$0xff]
  %s1137 = scalar_lea.vmem %s1, 868
  %v1138 = vpack.c.bf16 0.0, %v1136
  %1139 = vst [vmem:[%s1137] sm:$0xf] %v1138
  %s1140 = scalar_lea.vmem %s0, 1992
  %v1141 = vld [vmem:[%s1140] sm:$0xff]
  %s1142 = scalar_lea.vmem %s1, 228
  %v1143 = vpack.c.bf16 0.0, %v1141
  %1144 = vst [vmem:[%s1142] sm:$0xf] %v1143
  %s1145 = scalar_lea.vmem %s0, 1224
  %v1146 = vld [vmem:[%s1145] sm:$0xff]
  %s1147 = scalar_lea.vmem %s1, 612
  %v1148 = vpack.c.bf16 0.0, %v1146
  %1149 = vst [vmem:[%s1147] sm:$0xf] %v1148
  %s1150 = scalar_lea.vmem %s0, 456
  %v1151 = vld [vmem:[%s1150] sm:$0xff]
  %s1152 = scalar_lea.vmem %s1, 996
  %v1153 = vpack.c.bf16 0.0, %v1151
  %1154 = vst [vmem:[%s1152] sm:$0xf] %v1153
  %s1155 = scalar_lea.vmem %s0, 1736
  %v1156 = vld [vmem:[%s1155] sm:$0xff]
  %s1157 = scalar_lea.vmem %s1, 356
  %v1158 = vpack.c.bf16 0.0, %v1156
  %1159 = vst [vmem:[%s1157] sm:$0xf] %v1158
  %s1160 = scalar_lea.vmem %s0, 968
  %v1161 = vld [vmem:[%s1160] sm:$0xff]
  %s1162 = scalar_lea.vmem %s1, 740
  %v1163 = vpack.c.bf16 0.0, %v1161
  %1164 = vst [vmem:[%s1162] sm:$0xf] %v1163
  %s1165 = scalar_lea.vmem %s0, 200
  %v1166 = vld [vmem:[%s1165] sm:$0xff]
  %s1167 = scalar_lea.vmem %s1, 1124
  %v1168 = vpack.c.bf16 0.0, %v1166
  %1169 = vst [vmem:[%s1167] sm:$0xf] %v1168
  %s1170 = scalar_lea.vmem %s0, 2256
  %v1171 = vld [vmem:[%s1170] sm:$0xff]
  %s1172 = scalar_lea.vmem %s1, 104
  %v1173 = vpack.c.bf16 0.0, %v1171
  %1174 = vst [vmem:[%s1172] sm:$0xf] %v1173
  %s1175 = scalar_lea.vmem %s0, 1488
  %v1176 = vld [vmem:[%s1175] sm:$0xff]
  %s1177 = scalar_lea.vmem %s1, 488
  %v1178 = vpack.c.bf16 0.0, %v1176
  %1179 = vst [vmem:[%s1177] sm:$0xf] %v1178
  %s1180 = scalar_lea.vmem %s0, 720
  %v1181 = vld [vmem:[%s1180] sm:$0xff]
  %s1182 = scalar_lea.vmem %s1, 872
  %v1183 = vpack.c.bf16 0.0, %v1181
  %1184 = vst [vmem:[%s1182] sm:$0xf] %v1183
  %s1185 = scalar_lea.vmem %s0, 2000
  %v1186 = vld [vmem:[%s1185] sm:$0xff]
  %s1187 = scalar_lea.vmem %s1, 232
  %v1188 = vpack.c.bf16 0.0, %v1186
  %1189 = vst [vmem:[%s1187] sm:$0xf] %v1188
  %s1190 = scalar_lea.vmem %s0, 1232
  %v1191 = vld [vmem:[%s1190] sm:$0xff]
  %s1192 = scalar_lea.vmem %s1, 616
  %v1193 = vpack.c.bf16 0.0, %v1191
  %1194 = vst [vmem:[%s1192] sm:$0xf] %v1193
  %s1195 = scalar_lea.vmem %s0, 464
  %v1196 = vld [vmem:[%s1195] sm:$0xff]
  %s1197 = scalar_lea.vmem %s1, 1000
  %v1198 = vpack.c.bf16 0.0, %v1196
  %1199 = vst [vmem:[%s1197] sm:$0xf] %v1198
  %s1200 = scalar_lea.vmem %s0, 1744
  %v1201 = vld [vmem:[%s1200] sm:$0xff]
  %s1202 = scalar_lea.vmem %s1, 360
  %v1203 = vpack.c.bf16 0.0, %v1201
  %1204 = vst [vmem:[%s1202] sm:$0xf] %v1203
  %s1205 = scalar_lea.vmem %s0, 976
  %v1206 = vld [vmem:[%s1205] sm:$0xff]
  %s1207 = scalar_lea.vmem %s1, 744
  %v1208 = vpack.c.bf16 0.0, %v1206
  %1209 = vst [vmem:[%s1207] sm:$0xf] %v1208
  %s1210 = scalar_lea.vmem %s0, 208
  %v1211 = vld [vmem:[%s1210] sm:$0xff]
  %s1212 = scalar_lea.vmem %s1, 1128
  %v1213 = vpack.c.bf16 0.0, %v1211
  %1214 = vst [vmem:[%s1212] sm:$0xf] %v1213
  %s1215 = scalar_lea.vmem %s0, 2264
  %v1216 = vld [vmem:[%s1215] sm:$0xff]
  %s1217 = scalar_lea.vmem %s1, 108
  %v1218 = vpack.c.bf16 0.0, %v1216
  %1219 = vst [vmem:[%s1217] sm:$0xf] %v1218
  %s1220 = scalar_lea.vmem %s0, 1496
  %v1221 = vld [vmem:[%s1220] sm:$0xff]
  %s1222 = scalar_lea.vmem %s1, 492
  %v1223 = vpack.c.bf16 0.0, %v1221
  %1224 = vst [vmem:[%s1222] sm:$0xf] %v1223
  %s1225 = scalar_lea.vmem %s0, 728
  %v1226 = vld [vmem:[%s1225] sm:$0xff]
  %s1227 = scalar_lea.vmem %s1, 876
  %v1228 = vpack.c.bf16 0.0, %v1226
  %1229 = vst [vmem:[%s1227] sm:$0xf] %v1228
  %s1230 = scalar_lea.vmem %s0, 2008
  %v1231 = vld [vmem:[%s1230] sm:$0xff]
  %s1232 = scalar_lea.vmem %s1, 236
  %v1233 = vpack.c.bf16 0.0, %v1231
  %1234 = vst [vmem:[%s1232] sm:$0xf] %v1233
  %s1235 = scalar_lea.vmem %s0, 1240
  %v1236 = vld [vmem:[%s1235] sm:$0xff]
  %s1237 = scalar_lea.vmem %s1, 620
  %v1238 = vpack.c.bf16 0.0, %v1236
  %1239 = vst [vmem:[%s1237] sm:$0xf] %v1238
  %s1240 = scalar_lea.vmem %s0, 472
  %v1241 = vld [vmem:[%s1240] sm:$0xff]
  %s1242 = scalar_lea.vmem %s1, 1004
  %v1243 = vpack.c.bf16 0.0, %v1241
  %1244 = vst [vmem:[%s1242] sm:$0xf] %v1243
  %s1245 = scalar_lea.vmem %s0, 1752
  %v1246 = vld [vmem:[%s1245] sm:$0xff]
  %s1247 = scalar_lea.vmem %s1, 364
  %v1248 = vpack.c.bf16 0.0, %v1246
  %1249 = vst [vmem:[%s1247] sm:$0xf] %v1248
  %s1250 = scalar_lea.vmem %s0, 984
  %v1251 = vld [vmem:[%s1250] sm:$0xff]
  %s1252 = scalar_lea.vmem %s1, 748
  %v1253 = vpack.c.bf16 0.0, %v1251
  %1254 = vst [vmem:[%s1252] sm:$0xf] %v1253
  %s1255 = scalar_lea.vmem %s0, 216
  %v1256 = vld [vmem:[%s1255] sm:$0xff]
  %s1257 = scalar_lea.vmem %s1, 1132
  %v1258 = vpack.c.bf16 0.0, %v1256
  %1259 = vst [vmem:[%s1257] sm:$0xf] %v1258
  %s1260 = scalar_lea.vmem %s0, 2272
  %v1261 = vld [vmem:[%s1260] sm:$0xff]
  %s1262 = scalar_lea.vmem %s1, 112
  %v1263 = vpack.c.bf16 0.0, %v1261
  %1264 = vst [vmem:[%s1262] sm:$0xf] %v1263
  %s1265 = scalar_lea.vmem %s0, 1504
  %v1266 = vld [vmem:[%s1265] sm:$0xff]
  %s1267 = scalar_lea.vmem %s1, 496
  %v1268 = vpack.c.bf16 0.0, %v1266
  %1269 = vst [vmem:[%s1267] sm:$0xf] %v1268
  %s1270 = scalar_lea.vmem %s0, 736
  %v1271 = vld [vmem:[%s1270] sm:$0xff]
  %s1272 = scalar_lea.vmem %s1, 880
  %v1273 = vpack.c.bf16 0.0, %v1271
  %1274 = vst [vmem:[%s1272] sm:$0xf] %v1273
  %s1275 = scalar_lea.vmem %s0, 2016
  %v1276 = vld [vmem:[%s1275] sm:$0xff]
  %s1277 = scalar_lea.vmem %s1, 240
  %v1278 = vpack.c.bf16 0.0, %v1276
  %1279 = vst [vmem:[%s1277] sm:$0xf] %v1278
  %s1280 = scalar_lea.vmem %s0, 1248
  %v1281 = vld [vmem:[%s1280] sm:$0xff]
  %s1282 = scalar_lea.vmem %s1, 624
  %v1283 = vpack.c.bf16 0.0, %v1281
  %1284 = vst [vmem:[%s1282] sm:$0xf] %v1283
  %s1285 = scalar_lea.vmem %s0, 480
  %v1286 = vld [vmem:[%s1285] sm:$0xff]
  %s1287 = scalar_lea.vmem %s1, 1008
  %v1288 = vpack.c.bf16 0.0, %v1286
  %1289 = vst [vmem:[%s1287] sm:$0xf] %v1288
  %s1290 = scalar_lea.vmem %s0, 1760
  %v1291 = vld [vmem:[%s1290] sm:$0xff]
  %s1292 = scalar_lea.vmem %s1, 368
  %v1293 = vpack.c.bf16 0.0, %v1291
  %1294 = vst [vmem:[%s1292] sm:$0xf] %v1293
  %s1295 = scalar_lea.vmem %s0, 992
  %v1296 = vld [vmem:[%s1295] sm:$0xff]
  %s1297 = scalar_lea.vmem %s1, 752
  %v1298 = vpack.c.bf16 0.0, %v1296
  %1299 = vst [vmem:[%s1297] sm:$0xf] %v1298
  %s1300 = scalar_lea.vmem %s0, 224
  %v1301 = vld [vmem:[%s1300] sm:$0xff]
  %s1302 = scalar_lea.vmem %s1, 1136
  %v1303 = vpack.c.bf16 0.0, %v1301
  %1304 = vst [vmem:[%s1302] sm:$0xf] %v1303
  %s1305 = scalar_lea.vmem %s0, 2280
  %v1306 = vld [vmem:[%s1305] sm:$0xff]
  %s1307 = scalar_lea.vmem %s1, 116
  %v1308 = vpack.c.bf16 0.0, %v1306
  %1309 = vst [vmem:[%s1307] sm:$0xf] %v1308
  %s1310 = scalar_lea.vmem %s0, 1512
  %v1311 = vld [vmem:[%s1310] sm:$0xff]
  %s1312 = scalar_lea.vmem %s1, 500
  %v1313 = vpack.c.bf16 0.0, %v1311
  %1314 = vst [vmem:[%s1312] sm:$0xf] %v1313
  %s1315 = scalar_lea.vmem %s0, 744
  %v1316 = vld [vmem:[%s1315] sm:$0xff]
  %s1317 = scalar_lea.vmem %s1, 884
  %v1318 = vpack.c.bf16 0.0, %v1316
  %1319 = vst [vmem:[%s1317] sm:$0xf] %v1318
  %s1320 = scalar_lea.vmem %s0, 2024
  %v1321 = vld [vmem:[%s1320] sm:$0xff]
  %s1322 = scalar_lea.vmem %s1, 244
  %v1323 = vpack.c.bf16 0.0, %v1321
  %1324 = vst [vmem:[%s1322] sm:$0xf] %v1323
  %s1325 = scalar_lea.vmem %s0, 1256
  %v1326 = vld [vmem:[%s1325] sm:$0xff]
  %s1327 = scalar_lea.vmem %s1, 628
  %v1328 = vpack.c.bf16 0.0, %v1326
  %1329 = vst [vmem:[%s1327] sm:$0xf] %v1328
  %s1330 = scalar_lea.vmem %s0, 488
  %v1331 = vld [vmem:[%s1330] sm:$0xff]
  %s1332 = scalar_lea.vmem %s1, 1012
  %v1333 = vpack.c.bf16 0.0, %v1331
  %1334 = vst [vmem:[%s1332] sm:$0xf] %v1333
  %s1335 = scalar_lea.vmem %s0, 1768
  %v1336 = vld [vmem:[%s1335] sm:$0xff]
  %s1337 = scalar_lea.vmem %s1, 372
  %v1338 = vpack.c.bf16 0.0, %v1336
  %1339 = vst [vmem:[%s1337] sm:$0xf] %v1338
  %s1340 = scalar_lea.vmem %s0, 1000
  %v1341 = vld [vmem:[%s1340] sm:$0xff]
  %s1342 = scalar_lea.vmem %s1, 756
  %v1343 = vpack.c.bf16 0.0, %v1341
  %1344 = vst [vmem:[%s1342] sm:$0xf] %v1343
  %s1345 = scalar_lea.vmem %s0, 232
  %v1346 = vld [vmem:[%s1345] sm:$0xff]
  %s1347 = scalar_lea.vmem %s1, 1140
  %v1348 = vpack.c.bf16 0.0, %v1346
  %1349 = vst [vmem:[%s1347] sm:$0xf] %v1348
  %s1350 = scalar_lea.vmem %s0, 2288
  %v1351 = vld [vmem:[%s1350] sm:$0xff]
  %s1352 = scalar_lea.vmem %s1, 120
  %v1353 = vpack.c.bf16 0.0, %v1351
  %1354 = vst [vmem:[%s1352] sm:$0xf] %v1353
  %s1355 = scalar_lea.vmem %s0, 1520
  %v1356 = vld [vmem:[%s1355] sm:$0xff]
  %s1357 = scalar_lea.vmem %s1, 504
  %v1358 = vpack.c.bf16 0.0, %v1356
  %1359 = vst [vmem:[%s1357] sm:$0xf] %v1358
  %s1360 = scalar_lea.vmem %s0, 752
  %v1361 = vld [vmem:[%s1360] sm:$0xff]
  %s1362 = scalar_lea.vmem %s1, 888
  %v1363 = vpack.c.bf16 0.0, %v1361
  %1364 = vst [vmem:[%s1362] sm:$0xf] %v1363
  %s1365 = scalar_lea.vmem %s0, 2032
  %v1366 = vld [vmem:[%s1365] sm:$0xff]
  %s1367 = scalar_lea.vmem %s1, 248
  %v1368 = vpack.c.bf16 0.0, %v1366
  %1369 = vst [vmem:[%s1367] sm:$0xf] %v1368
  %s1370 = scalar_lea.vmem %s0, 1264
  %v1371 = vld [vmem:[%s1370] sm:$0xff]
  %s1372 = scalar_lea.vmem %s1, 632
  %v1373 = vpack.c.bf16 0.0, %v1371
  %1374 = vst [vmem:[%s1372] sm:$0xf] %v1373
  %s1375 = scalar_lea.vmem %s0, 496
  %v1376 = vld [vmem:[%s1375] sm:$0xff]
  %s1377 = scalar_lea.vmem %s1, 1016
  %v1378 = vpack.c.bf16 0.0, %v1376
  %1379 = vst [vmem:[%s1377] sm:$0xf] %v1378
  %s1380 = scalar_lea.vmem %s0, 1776
  %v1381 = vld [vmem:[%s1380] sm:$0xff]
  %s1382 = scalar_lea.vmem %s1, 376
  %v1383 = vpack.c.bf16 0.0, %v1381
  %1384 = vst [vmem:[%s1382] sm:$0xf] %v1383
  %s1385 = scalar_lea.vmem %s0, 1008
  %v1386 = vld [vmem:[%s1385] sm:$0xff]
  %s1387 = scalar_lea.vmem %s1, 760
  %v1388 = vpack.c.bf16 0.0, %v1386
  %1389 = vst [vmem:[%s1387] sm:$0xf] %v1388
  %s1390 = scalar_lea.vmem %s0, 240
  %v1391 = vld [vmem:[%s1390] sm:$0xff]
  %s1392 = scalar_lea.vmem %s1, 1144
  %v1393 = vpack.c.bf16 0.0, %v1391
  %1394 = vst [vmem:[%s1392] sm:$0xf] %v1393
  %s1395 = scalar_lea.vmem %s0, 2296
  %v1396 = vld [vmem:[%s1395] sm:$0xff]
  %s1397 = scalar_lea.vmem %s1, 124
  %v1398 = vpack.c.bf16 0.0, %v1396
  %1399 = vst [vmem:[%s1397] sm:$0xf] %v1398
  %s1400 = scalar_lea.vmem %s0, 1528
  %v1401 = vld [vmem:[%s1400] sm:$0xff]
  %s1402 = scalar_lea.vmem %s1, 508
  %v1403 = vpack.c.bf16 0.0, %v1401
  %1404 = vst [vmem:[%s1402] sm:$0xf] %v1403
  %s1405 = scalar_lea.vmem %s0, 760
  %v1406 = vld [vmem:[%s1405] sm:$0xff]
  %s1407 = scalar_lea.vmem %s1, 892
  %v1408 = vpack.c.bf16 0.0, %v1406
  %1409 = vst [vmem:[%s1407] sm:$0xf] %v1408
  %s1410 = scalar_lea.vmem %s0, 2040
  %v1411 = vld [vmem:[%s1410] sm:$0xff]
  %s1412 = scalar_lea.vmem %s1, 252
  %v1413 = vpack.c.bf16 0.0, %v1411
  %1414 = vst [vmem:[%s1412] sm:$0xf] %v1413
  %s1415 = scalar_lea.vmem %s0, 1272
  %v1416 = vld [vmem:[%s1415] sm:$0xff]
  %s1417 = scalar_lea.vmem %s1, 636
  %v1418 = vpack.c.bf16 0.0, %v1416
  %1419 = vst [vmem:[%s1417] sm:$0xf] %v1418
  %s1420 = scalar_lea.vmem %s0, 504
  %v1421 = vld [vmem:[%s1420] sm:$0xff]
  %s1422 = scalar_lea.vmem %s1, 1020
  %v1423 = vpack.c.bf16 0.0, %v1421
  %1424 = vst [vmem:[%s1422] sm:$0xf] %v1423
  %s1425 = scalar_lea.vmem %s0, 1784
  %v1426 = vld [vmem:[%s1425] sm:$0xff]
  %s1427 = scalar_lea.vmem %s1, 380
  %v1428 = vpack.c.bf16 0.0, %v1426
  %1429 = vst [vmem:[%s1427] sm:$0xf] %v1428
  %s1430 = scalar_lea.vmem %s0, 1016
  %v1431 = vld [vmem:[%s1430] sm:$0xff]
  %s1432 = scalar_lea.vmem %s1, 764
  %v1433 = vpack.c.bf16 0.0, %v1431
  %1434 = vst [vmem:[%s1432] sm:$0xf] %v1433
  %s1435 = scalar_lea.vmem %s0, 248
  %v1436 = vld [vmem:[%s1435] sm:$0xff]
  %s1437 = scalar_lea.vmem %s1, 1148
  %v1438 = vpack.c.bf16 0.0, %v1436
  %1439 = vst [vmem:[%s1437] sm:$0xf] %v1438

// kernel: fea_layer3_forward.1
$region0: #{fea_layer3_forward.1}
  #allocation0 [shape = 'u32[]', space=smem, size = 0x4, offset = 0x4, fixed_abs, tag = 'smem constant byte address 0x4 - core index']
  #allocation1 [shape = 'u32[72,128]{1,0:T(1,128)}', space=vmem, size = 0x9000, scoped, tag = 'internal scratch']
  %s0 = inlined_call_operand.vmem [shape: f32[1,16], index: 0, kind: input, shape index: {}]
  %s1 = inlined_call_operand.vmem [shape: f32[2,16,1024], index: 1, kind: input, shape index: {}]
  %s2 = inlined_call_operand.vmem [shape: f32[2,16,256], index: 2, kind: input, shape index: {}]
  %s3 = inlined_call_operand.vmem [shape: f32[2,1024], index: 3, kind: output, shape index: {0}]
  %s4 = inlined_call_operand.vmem [shape: f32[2,256], index: 4, kind: output, shape index: {1}]
  %5 = xla_tuple %s3, %s4
  %s6 = sld [smem:[#allocation0]]
  $region30: #{fea_layer3_forward.1} parent=0
    _
  %s8 = ssub.s32 1, %s6
  %s9 = scalar_select 0, %s8, %s6
  // Predicated region
  $region2: #{fea_layer3_forward.1} parent=0 // pred_check
    _
  $region3: #{fea_layer3_forward.1} parent=0 // pred_check_branch
    %11 = sbr.rel (0) target = $region5
  $region4: #{fea_layer3_forward.1} parent=0 // pred_region
    _
  $region5: #{fea_layer3_forward.1} parent=0 // pred_fallthru
    _
  // Predicated region
  $region6: #{fea_layer3_forward.1} parent=0 // pred_check
    _
  $region7: #{fea_layer3_forward.1} parent=0 // pred_check_branch
    %13 = sbr.rel (0) target = $region9
  $region8: #{fea_layer3_forward.1} parent=0 // pred_region
    _
  $region9: #{fea_layer3_forward.1} parent=0 // pred_fallthru
    _
  // Predicated region
  $region10: #{fea_layer3_forward.1} parent=0 // pred_check
    _
  $region11: #{fea_layer3_forward.1} parent=0 // pred_check_branch
    %15 = sbr.rel (0) target = $region13
  $region12: #{fea_layer3_forward.1} parent=0 // pred_region
    _
  $region13: #{fea_layer3_forward.1} parent=0 // pred_fallthru
    _
  %v16 = vld [vmem:[%s0] sm:$0x1]
  %v17 = vperm.slane %v16, 0
  %v18 = vlaneseq
  %v19 = vshrl.u32 %v18, 7
  %21 = vset.pattern.permute.xlu0 %v19
  %22 = vperm.xlu0 %21, %v17
  %v23 = vpop.permute.xlu0 %22
  %v24 = vlaneseq
  %v25 = vshrl.u32 %v24, 7
  %v26 = vadd.s32 %v25, 8
  %27 = vset.pattern.permute.xlu0 %v26
  %28 = vperm.xlu0 %27, %v17
  %v29 = vpop.permute.xlu0 %28
  %v30 = vld [vmem:[%s1] sm:$0xff]
  %v31 = vld [vmem:[%s1 + $0x8] sm:$0xff]
  %v32 = vld [vmem:[%s1 + $0x10] sm:$0xff]
  %v33 = vld [vmem:[%s1 + $0x18] sm:$0xff]
  %v34 = vld [vmem:[%s1 + $0x20] sm:$0xff]
  %v35 = vld [vmem:[%s1 + $0x28] sm:$0xff]
  %v36 = vld [vmem:[%s1 + $0x30] sm:$0xff]
  %v37 = vld [vmem:[%s1 + $0x38] sm:$0xff]
  %v38 = vld [vmem:[%s1 + $0x40] sm:$0xff]
  %v39 = vld [vmem:[%s1 + $0x48] sm:$0xff]
  %v40 = vld [vmem:[%s1 + $0x50] sm:$0xff]
  %v41 = vld [vmem:[%s1 + $0x58] sm:$0xff]
  %v42 = vld [vmem:[%s1 + $0x60] sm:$0xff]
  %v43 = vld [vmem:[%s1 + $0x68] sm:$0xff]
  %v44 = vld [vmem:[%s1 + $0x70] sm:$0xff]
  %v45 = vld [vmem:[%s1 + $0x78] sm:$0xff]
  %v46 = vld [vmem:[%s1 + $0x80] sm:$0xff]
  %v47 = vld [vmem:[%s1 + $0x88] sm:$0xff]
  %v48 = vld [vmem:[%s1 + $0x90] sm:$0xff]
  %v49 = vld [vmem:[%s1 + $0x98] sm:$0xff]
  %v50 = vld [vmem:[%s1 + $0xa0] sm:$0xff]
  %v51 = vld [vmem:[%s1 + $0xa8] sm:$0xff]
  %v52 = vld [vmem:[%s1 + $0xb0] sm:$0xff]
  %v53 = vld [vmem:[%s1 + $0xb8] sm:$0xff]
  %v54 = vld [vmem:[%s1 + $0xc0] sm:$0xff]
  %v55 = vld [vmem:[%s1 + $0xc8] sm:$0xff]
  %v56 = vld [vmem:[%s1 + $0xd0] sm:$0xff]
  %v57 = vld [vmem:[%s1 + $0xd8] sm:$0xff]
  %v58 = vld [vmem:[%s1 + $0xe0] sm:$0xff]
  %v59 = vld [vmem:[%s1 + $0xe8] sm:$0xff]
  %v60 = vld [vmem:[%s1 + $0xf0] sm:$0xff]
  %v61 = vld [vmem:[%s1 + $0xf8] sm:$0xff]
  %v62 = vmul.f32 %v30, %v23
  %v63 = vmul.f32 %v31, %v23
  %v64 = vmul.f32 %v32, %v23
  %v65 = vmul.f32 %v33, %v23
  %v66 = vmul.f32 %v34, %v23
  %v67 = vmul.f32 %v35, %v23
  %v68 = vmul.f32 %v36, %v23
  %v69 = vmul.f32 %v37, %v23
  %v70 = vmul.f32 %v38, %v29
  %v71 = vmul.f32 %v39, %v29
  %v72 = vmul.f32 %v40, %v29
  %v73 = vmul.f32 %v41, %v29
  %v74 = vmul.f32 %v42, %v29
  %v75 = vmul.f32 %v43, %v29
  %v76 = vmul.f32 %v44, %v29
  %v77 = vmul.f32 %v45, %v29
  %v78 = vmul.f32 %v46, %v23
  %v79 = vmul.f32 %v47, %v23
  %v80 = vmul.f32 %v48, %v23
  %v81 = vmul.f32 %v49, %v23
  %v82 = vmul.f32 %v50, %v23
  %v83 = vmul.f32 %v51, %v23
  %v84 = vmul.f32 %v52, %v23
  %v85 = vmul.f32 %v53, %v23
  %v86 = vmul.f32 %v54, %v29
  %v87 = vmul.f32 %v55, %v29
  %v88 = vmul.f32 %v56, %v29
  %v89 = vmul.f32 %v57, %v29
  %v90 = vmul.f32 %v58, %v29
  %v91 = vmul.f32 %v59, %v29
  %v92 = vmul.f32 %v60, %v29
  %v93 = vmul.f32 %v61, %v29
  %v94 = vadd.f32 %v62, %v70
  %v95 = vrot.slane %v94, 4
  %v96 = vadd.f32 %v94, %v95
  %v97 = vrot.slane %v96, 2
  %v98 = vadd.f32 %v96, %v97
  %v99 = vrot.slane %v98, 1
  %v100 = vadd.f32 %v98, %v99
  %v101 = vadd.f32 %v63, %v71
  %v102 = vrot.slane %v101, 4
  %v103 = vadd.f32 %v101, %v102
  %v104 = vrot.slane %v103, 2
  %v105 = vadd.f32 %v103, %v104
  %v106 = vrot.slane %v105, 1
  %v107 = vadd.f32 %v105, %v106
  %v108 = vadd.f32 %v64, %v72
  %v109 = vrot.slane %v108, 4
  %v110 = vadd.f32 %v108, %v109
  %v111 = vrot.slane %v110, 2
  %v112 = vadd.f32 %v110, %v111
  %v113 = vrot.slane %v112, 1
  %v114 = vadd.f32 %v112, %v113
  %v115 = vadd.f32 %v65, %v73
  %v116 = vrot.slane %v115, 4
  %v117 = vadd.f32 %v115, %v116
  %v118 = vrot.slane %v117, 2
  %v119 = vadd.f32 %v117, %v118
  %v120 = vrot.slane %v119, 1
  %v121 = vadd.f32 %v119, %v120
  %v122 = vadd.f32 %v66, %v74
  %v123 = vrot.slane %v122, 4
  %v124 = vadd.f32 %v122, %v123
  %v125 = vrot.slane %v124, 2
  %v126 = vadd.f32 %v124, %v125
  %v127 = vrot.slane %v126, 1
  %v128 = vadd.f32 %v126, %v127
  %v129 = vadd.f32 %v67, %v75
  %v130 = vrot.slane %v129, 4
  %v131 = vadd.f32 %v129, %v130
  %v132 = vrot.slane %v131, 2
  %v133 = vadd.f32 %v131, %v132
  %v134 = vrot.slane %v133, 1
  %v135 = vadd.f32 %v133, %v134
  %v136 = vadd.f32 %v68, %v76
  %v137 = vrot.slane %v136, 4
  %v138 = vadd.f32 %v136, %v137
  %v139 = vrot.slane %v138, 2
  %v140 = vadd.f32 %v138, %v139
  %v141 = vrot.slane %v140, 1
  %v142 = vadd.f32 %v140, %v141
  %v143 = vadd.f32 %v69, %v77
  %v144 = vrot.slane %v143, 4
  %v145 = vadd.f32 %v143, %v144
  %v146 = vrot.slane %v145, 2
  %v147 = vadd.f32 %v145, %v146
  %v148 = vrot.slane %v147, 1
  %v149 = vadd.f32 %v147, %v148
  %v150 = vadd.f32 %v78, %v86
  %v151 = vrot.slane %v150, 4
  %v152 = vadd.f32 %v150, %v151
  %v153 = vrot.slane %v152, 2
  %v154 = vadd.f32 %v152, %v153
  %v155 = vrot.slane %v154, 1
  %v156 = vadd.f32 %v154, %v155
  %v157 = vadd.f32 %v79, %v87
  %v158 = vrot.slane %v157, 4
  %v159 = vadd.f32 %v157, %v158
  %v160 = vrot.slane %v159, 2
  %v161 = vadd.f32 %v159, %v160
  %v162 = vrot.slane %v161, 1
  %v163 = vadd.f32 %v161, %v162
  %v164 = vadd.f32 %v80, %v88
  %v165 = vrot.slane %v164, 4
  %v166 = vadd.f32 %v164, %v165
  %v167 = vrot.slane %v166, 2
  %v168 = vadd.f32 %v166, %v167
  %v169 = vrot.slane %v168, 1
  %v170 = vadd.f32 %v168, %v169
  %v171 = vadd.f32 %v81, %v89
  %v172 = vrot.slane %v171, 4
  %v173 = vadd.f32 %v171, %v172
  %v174 = vrot.slane %v173, 2
  %v175 = vadd.f32 %v173, %v174
  %v176 = vrot.slane %v175, 1
  %v177 = vadd.f32 %v175, %v176
  %v178 = vadd.f32 %v82, %v90
  %v179 = vrot.slane %v178, 4
  %v180 = vadd.f32 %v178, %v179
  %v181 = vrot.slane %v180, 2
  %v182 = vadd.f32 %v180, %v181
  %v183 = vrot.slane %v182, 1
  %v184 = vadd.f32 %v182, %v183
  %v185 = vadd.f32 %v83, %v91
  %v186 = vrot.slane %v185, 4
  %v187 = vadd.f32 %v185, %v186
  %v188 = vrot.slane %v187, 2
  %v189 = vadd.f32 %v187, %v188
  %v190 = vrot.slane %v189, 1
  %v191 = vadd.f32 %v189, %v190
  %v192 = vadd.f32 %v84, %v92
  %v193 = vrot.slane %v192, 4
  %v194 = vadd.f32 %v192, %v193
  %v195 = vrot.slane %v194, 2
  %v196 = vadd.f32 %v194, %v195
  %v197 = vrot.slane %v196, 1
  %v198 = vadd.f32 %v196, %v197
  %v199 = vadd.f32 %v85, %v93
  %v200 = vrot.slane %v199, 4
  %v201 = vadd.f32 %v199, %v200
  %v202 = vrot.slane %v201, 2
  %v203 = vadd.f32 %v201, %v202
  %v204 = vrot.slane %v203, 1
  %v205 = vadd.f32 %v203, %v204
  %v222 = vrot.slane %v107, 6
  %v223 = vrot.slane %v114, 4
  %v224 = vrot.slane %v121, 2
  %v225 = vrot.slane %v135, 6
  %v226 = vrot.slane %v142, 4
  %v227 = vrot.slane %v149, 2
  %v228 = vrot.slane %v163, 6
  %v229 = vrot.slane %v170, 4
  %v230 = vrot.slane %v177, 2
  %v231 = vrot.slane %v191, 6
  %v232 = vrot.slane %v198, 4
  %v233 = vrot.slane %v205, 2
  %vm234 = vcmask 1041408
  %v235 = vsel %vm234, %v100, %v222
  %vm236 = vcmask 1045508
  %v237 = vsel %vm236, %v223, %v224
  %vm238 = vcmask 1043456
  %v239 = vsel %vm238, %v235, %v237
  %v240 = vsel %vm234, %v128, %v225
  %v241 = vsel %vm236, %v226, %v227
  %v242 = vsel %vm238, %v240, %v241
  %v243 = vsel %vm234, %v156, %v228
  %v244 = vsel %vm236, %v229, %v230
  %v245 = vsel %vm238, %v243, %v244
  %v246 = vsel %vm234, %v184, %v231
  %v247 = vsel %vm236, %v232, %v233
  %v248 = vsel %vm238, %v246, %v247
  %vm249 = vcmask 1044484
  %v250 = vsel %vm249, %v239, %v239
  %vm251 = vcmask 1046534
  %v252 = vsel %vm251, %v239, %v250
  %v253 = vrot.slane %v245, 7
  %vm254 = vcmask 1041409
  %v255 = vsel %vm254, %v253, %v252
  %vm256 = vcmask 1043459
  %v257 = vsel %vm256, %v253, %v255
  %vm258 = vcmask 1045509
  %v259 = vsel %vm258, %v253, %v257
  %vm260 = vcmask 1047559
  %v261 = vsel %vm260, %v253, %v259
  %v262 = vsel %vm249, %v242, %v242
  %v263 = vsel %vm251, %v242, %v262
  %v264 = vrot.slane %v248, 7
  %v265 = vsel %vm254, %v264, %v263
  %v266 = vsel %vm256, %v264, %v265
  %v267 = vsel %vm258, %v264, %v266
  %v268 = vsel %vm260, %v264, %v267
  %271 = vst [vmem:[%s3] sm:$0xff] %v261
  %272 = vst [vmem:[%s3 + $0x8] sm:$0xff] %v268
  %v273 = vld [vmem:[%s2] sm:$0xff]
  %v274 = vld [vmem:[%s2 + $0x8] sm:$0xff]
  %v275 = vld [vmem:[%s2 + $0x10] sm:$0xff]
  %v276 = vld [vmem:[%s2 + $0x18] sm:$0xff]
  %v277 = vld [vmem:[%s2 + $0x20] sm:$0xff]
  %v278 = vld [vmem:[%s2 + $0x28] sm:$0xff]
  %v279 = vld [vmem:[%s2 + $0x30] sm:$0xff]
  %v280 = vld [vmem:[%s2 + $0x38] sm:$0xff]
  %v281 = vmul.f32 %v273, %v23
  %v282 = vmul.f32 %v274, %v23
  %v283 = vmul.f32 %v275, %v29
  %v284 = vmul.f32 %v276, %v29
  %v285 = vmul.f32 %v277, %v23
  %v286 = vmul.f32 %v278, %v23
  %v287 = vmul.f32 %v279, %v29
  %v288 = vmul.f32 %v280, %v29
  %v289 = vadd.f32 %v281, %v283
  %v290 = vrot.slane %v289, 4
  %v291 = vadd.f32 %v289, %v290
  %v292 = vrot.slane %v291, 2
  %v293 = vadd.f32 %v291, %v292
  %v294 = vrot.slane %v293, 1
  %v295 = vadd.f32 %v293, %v294
  %v296 = vadd.f32 %v282, %v284
  %v297 = vrot.slane %v296, 4
  %v298 = vadd.f32 %v296, %v297
  %v299 = vrot.slane %v298, 2
  %v300 = vadd.f32 %v298, %v299
  %v301 = vrot.slane %v300, 1
  %v302 = vadd.f32 %v300, %v301
  %v303 = vadd.f32 %v285, %v287
  %v304 = vrot.slane %v303, 4
  %v305 = vadd.f32 %v303, %v304
  %v306 = vrot.slane %v305, 2
  %v307 = vadd.f32 %v305, %v306
  %v308 = vrot.slane %v307, 1
  %v309 = vadd.f32 %v307, %v308
  %v310 = vadd.f32 %v286, %v288
  %v311 = vrot.slane %v310, 4
  %v312 = vadd.f32 %v310, %v311
  %v313 = vrot.slane %v312, 2
  %v314 = vadd.f32 %v312, %v313
  %v315 = vrot.slane %v314, 1
  %v316 = vadd.f32 %v314, %v315
  %v321 = vrot.slane %v302, 6
  %v322 = vrot.slane %v316, 6
  %v323 = vsel %vm234, %v295, %v321
  %v324 = vsel %vm234, %v309, %v322
  %v325 = vsel %vm249, %v323, %v323
  %v326 = vsel %vm251, %v323, %v325
  %v327 = vrot.slane %v324, 7
  %v328 = vsel %vm254, %v327, %v326
  %v329 = vsel %vm256, %v327, %v328
  %v330 = vsel %vm258, %v327, %v329
  %v331 = vsel %vm260, %v327, %v330
  %333 = vst [vmem:[%s4] sm:$0xf] %v331
  // Predicated region
  $region14: #{fea_layer3_forward.1} parent=0 // pred_check
    _
  $region15: #{fea_layer3_forward.1} parent=0 // pred_check_branch
    %335 = sbr.rel (0) target = $region17
  $region16: #{fea_layer3_forward.1} parent=0 // pred_region
    _
  $region17: #{fea_layer3_forward.1} parent=0 // pred_fallthru
    _
  // Predicated region
  $region18: #{fea_layer3_forward.1} parent=0 // pred_check
    _
  $region19: #{fea_layer3_forward.1} parent=0 // pred_check_branch
    %337 = sbr.rel (0) target = $region21
  $region20: #{fea_layer3_forward.1} parent=0 // pred_region
    _
  $region21: #{fea_layer3_forward.1} parent=0 // pred_fallthru
    _
  // Predicated region
  $region22: #{fea_layer3_forward.1} parent=0 // pred_check
    _
  $region23: #{fea_layer3_forward.1} parent=0 // pred_check_branch
    %339 = sbr.rel (0) target = $region25
  $region24: #{fea_layer3_forward.1} parent=0 // pred_region
    _
  $region25: #{fea_layer3_forward.1} parent=0 // pred_fallthru
    _
  // Predicated region
  $region26: #{fea_layer3_forward.1} parent=0 // pred_check
    _
  $region27: #{fea_layer3_forward.1} parent=0 // pred_check_branch
    %341 = sbr.rel (0) target = $region29
  $region28: #{fea_layer3_forward.1} parent=0 // pred_region
    _
  $region29: #{fea_layer3_forward.1} parent=0 // pred_fallthru
    _

</llo_original>
